<compile_context>
chip_gen: v5e
topology: v5e:2x2
jax: 0.10.0
libtpu: 0.0.40
codegen_flags: <defaults>
</compile_context>

<pallas_src>
import functools

import jax
import jax.numpy as jnp
from jax.experimental import pallas as pl
from jax.experimental.pallas import tpu as pltpu

D_IN = 28 * 28        # 784
D_IN_PAD = 896        # 7 * 128, lane-aligned K for layer 1
H1 = 512
H2 = 128
D_OUT = 10
D_OUT_PAD = 128       # lane-dense output / layer-3 N
TB = 128              # batch tile (matches v5e MXU M; safe for VMEM everywhere)


def mlp_kernel(x_ref, w1_ref, b1_ref, w2_ref, b2_ref, w3_ref, b3_ref, o_ref):
    # x: (TB, 896) bf16 ; weights bf16 ; biases f32 ; output (TB, 128) f32
    x = x_ref[...]

    h1 = jnp.dot(x, w1_ref[...], preferred_element_type=jnp.float32)      # (TB, 512) f32
    h1 = jnp.maximum(h1 + b1_ref[...], 0.0)

    h2 = jnp.dot(h1.astype(jnp.bfloat16), w2_ref[...],
                 preferred_element_type=jnp.float32)                       # (TB, 128) f32
    h2 = jnp.maximum(h2 + b2_ref[...], 0.0)

    logits = jnp.dot(h2.astype(jnp.bfloat16), w3_ref[...],
                     preferred_element_type=jnp.float32) + b3_ref[...]     # (TB, 128) f32

    # Mask the padded logit columns (>= 10) so they contribute nothing to softmax.
    col = jax.lax.broadcasted_iota(jnp.int32, logits.shape, 1)
    logits = jnp.where(col < D_OUT, logits, jnp.float32(-1e30))

    # Numerically stable softmax over the lane dimension.
    m = jnp.max(logits, axis=-1, keepdims=True)
    e = jnp.exp(logits - m)                                                # padded cols -> 0
    denom = jnp.sum(e, axis=-1, keepdims=True)
    o_ref[...] = e * pl.reciprocal(denom, approx=True)


def prepare_params(params):
    """Pad / cast torch-style (in,out) f32 params to the kernel's layouts."""
    w1, b1, w2, b2, w3, b3 = params
    w1p = jnp.pad(w1, ((0, D_IN_PAD - D_IN), (0, 0))).astype(jnp.bfloat16)   # (896, 512)
    w2p = w2.astype(jnp.bfloat16)                                            # (512, 128)
    w3p = jnp.pad(w3, ((0, 0), (0, D_OUT_PAD - D_OUT))).astype(jnp.bfloat16) # (128, 128)
    b1p = b1.astype(jnp.float32)                                             # (1, 512)
    b2p = b2.astype(jnp.float32)                                             # (1, 128)
    b3p = jnp.pad(b3, ((0, 0), (0, D_OUT_PAD - D_OUT))).astype(jnp.float32)  # (1, 128)
    return w1p, b1p, w2p, b2p, w3p, b3p


@functools.partial(jax.jit, static_argnames=())
def mlp_forward(a, w1, b1, w2, b2, w3, b3):
    """a: (B, 1, 28, 28) float32 (NCHW). Returns softmax probs (B, 10) float32."""
    B = a.shape[0]
    x = a.reshape(B, D_IN)                      # matches torch .view(-1, 784)

    # Pad batch to a multiple of TB and K to 896, cast to bf16 for the MXU.
    n_blocks = pl.cdiv(B, TB)
    B_pad = n_blocks * TB
    x_p = jnp.pad(x, ((0, B_pad - B), (0, D_IN_PAD - D_IN))).astype(jnp.bfloat16)

    flops = 2 * B_pad * (D_IN_PAD * H1 + H1 * H2 + H2 * D_OUT_PAD)
    bytes_accessed = (
        B_pad * D_IN_PAD * 2                         # x (bf16)
        + (D_IN_PAD * H1 + H1 * H2 + H2 * D_OUT_PAD) * 2   # weights (bf16)
        + (H1 + H2 + D_OUT_PAD) * 4                  # biases (f32)
        + B_pad * D_OUT_PAD * 4                      # output (f32)
    )

    out = pl.pallas_call(
        mlp_kernel,
        out_shape=jax.ShapeDtypeStruct((B_pad, D_OUT_PAD), jnp.float32),
        grid_spec=pl.GridSpec(
            grid=(n_blocks,),
            in_specs=[
                pl.BlockSpec((TB, D_IN_PAD), lambda i: (i, 0)),        # x (tiled over batch)
                pl.BlockSpec((D_IN_PAD, H1), lambda i: (0, 0)),        # w1 (resident)
                pl.BlockSpec((1, H1), lambda i: (0, 0)),               # b1
                pl.BlockSpec((H1, H2), lambda i: (0, 0)),              # w2
                pl.BlockSpec((1, H2), lambda i: (0, 0)),               # b2
                pl.BlockSpec((H2, D_OUT_PAD), lambda i: (0, 0)),       # w3
                pl.BlockSpec((1, D_OUT_PAD), lambda i: (0, 0)),        # b3
            ],
            out_specs=pl.BlockSpec((TB, D_OUT_PAD), lambda i: (i, 0)),  # lane-dense output
        ),
        compiler_params=pltpu.CompilerParams(
            dimension_semantics=("parallel",)),
        cost_estimate=pl.CostEstimate(
            flops=flops,
            transcendentals=B_pad * D_OUT_PAD,
            bytes_accessed=bytes_accessed),
    )(x_p, w1, b1, w2, b2, w3, b3)

    return out[:B, :D_OUT]


def init_params(key):
    """Deterministic init mimicking torch.nn.Linear default (uniform +-1/sqrt(fan_in)).
    Weights stored as (in, out) = transpose of torch's (out, in)."""
    dims = [(D_IN, H1), (H1, H2), (H2, D_OUT)]
    params = []
    keys = jax.random.split(key, 2 * len(dims))
    for idx, (fan_in, fan_out) in enumerate(dims):
        bound = 1.0 / jnp.sqrt(jnp.float32(fan_in))
        w = jax.random.uniform(keys[2 * idx], (fan_in, fan_out),
                               minval=-bound, maxval=bound, dtype=jnp.float32)
        b = jax.random.uniform(keys[2 * idx + 1], (1, fan_out),
                               minval=-bound, maxval=bound, dtype=jnp.float32)
        params += [w, b]
    return tuple(params)


def mlp_reference(a, params):
    """Pure-JAX f32 reference matching the PyTorch module."""
    w1, b1, w2, b2, w3, b3 = params
    x = a.reshape(a.shape[0], D_IN)
    h1 = jnp.maximum(x @ w1 + b1, 0.0)
    h2 = jnp.maximum(h1 @ w2 + b2, 0.0)
    return jax.nn.softmax(h2 @ w3 + b3, axis=1)


if __name__ == "__main__":
    key = jax.random.PRNGKey(0)
    k_param, k_x = jax.random.split(key)
    params = init_params(k_param)
    kernel_params = prepare_params(params)

    B = 8
    a = jax.random.normal(k_x, (B, 1, 28, 28), dtype=jnp.float32)

    probs = mlp_forward(a, *kernel_params)
    jax.block_until_ready(probs)

    assert probs.shape == (B, D_OUT)
    # Rows sum to ~1 (approx reciprocal has ~2^-12 relative error).
    assert jnp.allclose(jnp.sum(probs, axis=1), 1.0, atol=5e-3)
    # Matches the f32 reference up to bf16 matmul precision.
    ref = mlp_reference(a, params)
    assert jnp.allclose(probs, ref, atol=2e-2)
    print("KERNEL_OK")
</pallas_src>

<mosaic_0001>
module attributes {stable_mosaic.version = 11 : i64} {
  func.func @mlp_kernel(%arg0: i32, %arg1: memref<128x896xbf16, #tpu.memory_space<vmem>>, %arg2: memref<896x512xbf16, #tpu.memory_space<vmem>>, %arg3: memref<1x512xf32, #tpu.memory_space<vmem>>, %arg4: memref<512x128xbf16, #tpu.memory_space<vmem>>, %arg5: memref<1x128xf32, #tpu.memory_space<vmem>>, %arg6: memref<128x128xbf16, #tpu.memory_space<vmem>>, %arg7: memref<1x128xf32, #tpu.memory_space<vmem>>, %arg8: memref<128x128xf32, #tpu.memory_space<vmem>>) attributes {dimension_semantics = [#tpu.dimension_semantics<parallel>], iteration_bounds = array<i64: 1>, scalar_prefetch = 0 : i64, scratch_operands = 0 : i64, tpu.core_type = #tpu.core_type<tc>, window_params = [{transform_indices = @transform_0, window_bounds = array<i64: 128, 896>}, {pipeline_mode = #tpu.pipeline_mode<synchronous>, transform_indices = @transform_1, window_bounds = array<i64: 896, 512>}, {pipeline_mode = #tpu.pipeline_mode<synchronous>, transform_indices = @transform_2, window_bounds = array<i64: 1, 512>}, {pipeline_mode = #tpu.pipeline_mode<synchronous>, transform_indices = @transform_3, window_bounds = array<i64: 512, 128>}, {pipeline_mode = #tpu.pipeline_mode<synchronous>, transform_indices = @transform_4, window_bounds = array<i64: 1, 128>}, {pipeline_mode = #tpu.pipeline_mode<synchronous>, transform_indices = @transform_5, window_bounds = array<i64: 128, 128>}, {pipeline_mode = #tpu.pipeline_mode<synchronous>, transform_indices = @transform_6, window_bounds = array<i64: 1, 128>}, {transform_indices = @transform_7, window_bounds = array<i64: 128, 128>}]} {
    %c0 = arith.constant 0 : index
    %c0_0 = arith.constant 0 : index
    %0 = vector.load %arg1[%c0, %c0_0] : memref<128x896xbf16, #tpu.memory_space<vmem>>, vector<128x896xbf16>
    %c0_1 = arith.constant 0 : index
    %c0_2 = arith.constant 0 : index
    %1 = vector.load %arg2[%c0_1, %c0_2] : memref<896x512xbf16, #tpu.memory_space<vmem>>, vector<896x512xbf16>
    %cst = arith.constant dense<0.000000e+00> : vector<128x512xf32>
    %2 = tpu.matmul %0, %1, %cst {dimension_numbers = #tpu.dot_dimension_numbers<[1], [0], [0], [1], [0, 0, 1, 1], [], []>} : vector<128x896xbf16>, vector<896x512xbf16>, vector<128x512xf32> -> vector<128x512xf32>
    %c0_3 = arith.constant 0 : index
    %c0_4 = arith.constant 0 : index
    %3 = vector.load %arg3[%c0_3, %c0_4] : memref<1x512xf32, #tpu.memory_space<vmem>>, vector<1x512xf32>
    %4 = vector.broadcast %3 : vector<1x512xf32> to vector<128x512xf32>
    %5 = arith.addf %2, %4 : vector<128x512xf32>
    %cst_5 = arith.constant 0.000000e+00 : f32
    %6 = vector.broadcast %cst_5 : f32 to vector<128x512xf32>
    %7 = arith.maximumf %5, %6 : vector<128x512xf32>
    %8 = arith.truncf %7 : vector<128x512xf32> to vector<128x512xbf16>
    %c0_6 = arith.constant 0 : index
    %c0_7 = arith.constant 0 : index
    %9 = vector.load %arg4[%c0_6, %c0_7] : memref<512x128xbf16, #tpu.memory_space<vmem>>, vector<512x128xbf16>
    %cst_8 = arith.constant dense<0.000000e+00> : vector<128x128xf32>
    %10 = tpu.matmul %8, %9, %cst_8 {dimension_numbers = #tpu.dot_dimension_numbers<[1], [0], [0], [1], [0, 0, 1, 1], [], []>} : vector<128x512xbf16>, vector<512x128xbf16>, vector<128x128xf32> -> vector<128x128xf32>
    %c0_9 = arith.constant 0 : index
    %c0_10 = arith.constant 0 : index
    %11 = vector.load %arg5[%c0_9, %c0_10] : memref<1x128xf32, #tpu.memory_space<vmem>>, vector<1x128xf32>
    %12 = vector.broadcast %11 : vector<1x128xf32> to vector<128x128xf32>
    %13 = arith.addf %10, %12 : vector<128x128xf32>
    %cst_11 = arith.constant 0.000000e+00 : f32
    %14 = vector.broadcast %cst_11 : f32 to vector<128x128xf32>
    %15 = arith.maximumf %13, %14 : vector<128x128xf32>
    %16 = arith.truncf %15 : vector<128x128xf32> to vector<128x128xbf16>
    %c0_12 = arith.constant 0 : index
    %c0_13 = arith.constant 0 : index
    %17 = vector.load %arg6[%c0_12, %c0_13] : memref<128x128xbf16, #tpu.memory_space<vmem>>, vector<128x128xbf16>
    %cst_14 = arith.constant dense<0.000000e+00> : vector<128x128xf32>
    %18 = tpu.matmul %16, %17, %cst_14 {dimension_numbers = #tpu.dot_dimension_numbers<[1], [0], [0], [1], [0, 0, 1, 1], [], []>} : vector<128x128xbf16>, vector<128x128xbf16>, vector<128x128xf32> -> vector<128x128xf32>
    %c0_15 = arith.constant 0 : index
    %c0_16 = arith.constant 0 : index
    %19 = vector.load %arg7[%c0_15, %c0_16] : memref<1x128xf32, #tpu.memory_space<vmem>>, vector<1x128xf32>
    %20 = vector.broadcast %19 : vector<1x128xf32> to vector<128x128xf32>
    %21 = arith.addf %18, %20 : vector<128x128xf32>
    %22 = tpu.iota {dimensions = array<i32: 1>} : vector<128x128xi32>
    %c10_i32 = arith.constant 10 : i32
    %23 = vector.broadcast %c10_i32 : i32 to vector<128x128xi32>
    %24 = arith.cmpi slt, %22, %23 : vector<128x128xi32>
    %cst_17 = arith.constant -1.000000e+30 : f32
    %25 = vector.broadcast %cst_17 : f32 to vector<128x128xf32>
    %26 = arith.select %24, %21, %25 : vector<128x128xi1>, vector<128x128xf32>
    %cst_18 = arith.constant dense<0xFF800000> : vector<128xf32>
    %27 = vector.multi_reduction <maximumf>, %26, %cst_18 [1] : vector<128x128xf32> to vector<128xf32>
    %28 = vector.shape_cast %27 : vector<128xf32> to vector<128x1xf32>
    %29 = vector.broadcast %28 : vector<128x1xf32> to vector<128x128xf32>
    %30 = arith.subf %26, %29 : vector<128x128xf32>
    %31 = math.exp %30 : vector<128x128xf32>
    %cst_19 = arith.constant dense<0.000000e+00> : vector<128xf32>
    %32 = vector.multi_reduction <add>, %31, %cst_19 [1] : vector<128x128xf32> to vector<128xf32>
    %33 = vector.shape_cast %32 : vector<128xf32> to vector<128x1xf32>
    %34 = tpu.reciprocal %33 {approx = true} : vector<128x1xf32> -> vector<128x1xf32>
    %35 = vector.broadcast %34 : vector<128x1xf32> to vector<128x128xf32>
    %36 = arith.mulf %31, %35 : vector<128x128xf32>
    %c0_20 = arith.constant 0 : index
    %c0_21 = arith.constant 0 : index
    %37 = vector.load %arg8[%c0_20, %c0_21] : memref<128x128xf32, #tpu.memory_space<vmem>>, vector<128x128xf32>
    tpu.vector_store %arg8[%c0_20, %c0_21], %36 {strides = array<i32>} : memref<128x128xf32, #tpu.memory_space<vmem>>, vector<128x128xf32>,
    return
  }
  func.func @transform_0(%arg0: i32) -> (i32, i32) {
    %c0_i32 = arith.constant 0 : i32
    %c0_i32_0 = arith.constant 0 : i32
    return %arg0, %c0_i32 : i32, i32
  }
  func.func @transform_1(%arg0: i32) -> (i32, i32) {
    %c0_i32 = arith.constant 0 : i32
    %c0_i32_0 = arith.constant 0 : i32
    %c0_i32_1 = arith.constant 0 : i32
    return %c0_i32, %c0_i32_0 : i32, i32
  }
  func.func @transform_2(%arg0: i32) -> (i32, i32) {
    %c0_i32 = arith.constant 0 : i32
    %c0_i32_0 = arith.constant 0 : i32
    %c0_i32_1 = arith.constant 0 : i32
    return %c0_i32, %c0_i32_0 : i32, i32
  }
  func.func @transform_3(%arg0: i32) -> (i32, i32) {
    %c0_i32 = arith.constant 0 : i32
    %c0_i32_0 = arith.constant 0 : i32
    %c0_i32_1 = arith.constant 0 : i32
    return %c0_i32, %c0_i32_0 : i32, i32
  }
  func.func @transform_4(%arg0: i32) -> (i32, i32) {
    %c0_i32 = arith.constant 0 : i32
    %c0_i32_0 = arith.constant 0 : i32
    %c0_i32_1 = arith.constant 0 : i32
    return %c0_i32, %c0_i32_0 : i32, i32
  }
  func.func @transform_5(%arg0: i32) -> (i32, i32) {
    %c0_i32 = arith.constant 0 : i32
    %c0_i32_0 = arith.constant 0 : i32
    %c0_i32_1 = arith.constant 0 : i32
    return %c0_i32, %c0_i32_0 : i32, i32
  }
  func.func @transform_6(%arg0: i32) -> (i32, i32) {
    %c0_i32 = arith.constant 0 : i32
    %c0_i32_0 = arith.constant 0 : i32
    %c0_i32_1 = arith.constant 0 : i32
    return %c0_i32, %c0_i32_0 : i32, i32
  }
  func.func @transform_7(%arg0: i32) -> (i32, i32) {
    %c0_i32 = arith.constant 0 : i32
    %c0_i32_0 = arith.constant 0 : i32
    return %arg0, %c0_i32 : i32, i32
  }
}

</mosaic_0001>

<llo_original>
// kernel: mlp_forward.1
$region0: #{mlp_forward.1}
  #allocation0 [shape = 'u32[]', space=smem, size = 0x4, offset = 0x4, fixed_abs, tag = 'smem constant byte address 0x4 - core index']
  #allocation1 [shape = 'u32[72,128]{1,0:T(1,128)}', space=vmem, size = 0x9000, scoped, tag = 'internal scratch']
  %s0 = inlined_call_operand.vmem [shape: bf16[128,896], index: 0, kind: input, shape index: {}]
  %s1 = inlined_call_operand.hbm [shape: bf16[896,512], index: 1, kind: input, shape index: {}]
  %s2 = inlined_call_operand.vmem [shape: f32[1,512], index: 2, kind: input, shape index: {}]
  %s3 = inlined_call_operand.vmem [shape: bf16[512,128], index: 3, kind: input, shape index: {}]
  %s4 = inlined_call_operand.vmem [shape: f32[1,128], index: 4, kind: input, shape index: {}]
  %s5 = inlined_call_operand.vmem [shape: bf16[128,128], index: 5, kind: input, shape index: {}]
  %s6 = inlined_call_operand.vmem [shape: f32[1,128], index: 6, kind: input, shape index: {}]
  %s7 = inlined_call_operand.vmem [shape: f32[128,128], index: 7, kind: output, shape index: {}]
  %s8 = sld [smem:[#allocation0]]
  $region42: #{mlp_forward.1} parent=0
    _
  %s10 = ssub.s32 1, %s8
  %s11 = scalar_select 0, %s10, %s8
  $region1: #{mlp_forward.1} parent=0
    #allocation2 [shape = 'u8[917504]{0}', space=vmem, size = 0xe0000, scoped, tag = 'input window, operand 1, single buffered']
    #allocation3 [shape = 's32[1]{0}', space=sflag, size = 0x4, scoped, tag = 'scoped memory for mlp_forward.1']
    %12 = vsyncpa [#allocation3], 0
    // Predicated region
    $region2: #{mlp_forward.1} parent=1 // pred_check
      _
    $region3: #{mlp_forward.1} parent=1 // pred_check_branch
      %14 = sbr.rel (0) target = $region5
    $region4: #{mlp_forward.1} parent=1 // pred_region
      _
    $region5: #{mlp_forward.1} parent=1 // pred_fallthru
      _
    // Predicated region
    $region6: #{mlp_forward.1} parent=1 // pred_check
      _
    $region7: #{mlp_forward.1} parent=1 // pred_check_branch
      %16 = sbr.rel (0) target = $region9
    $region8: #{mlp_forward.1} parent=1 // pred_region
      %18 = vsyncadd [#allocation3], 0
      %s19 = sshll.u32 %s1, 4
      %s20 = int_to_ptr.hbm [resolvable:$true] %s19
      %s21 = sshll.u32 [#allocation2], 4
      %s22 = int_to_ptr.vmem [resolvable:$true] %s21
      %27 = dma.hbm_to_vmem [thread:$0]  %s20, 28672, %s22, [#allocation3], 256, 256, 16
    $region9: #{mlp_forward.1} parent=1 // pred_fallthru
      _
    // Predicated region
    $region10: #{mlp_forward.1} parent=1 // pred_check
      _
    $region11: #{mlp_forward.1} parent=1 // pred_check_branch
      %29 = sbr.rel (0) target = $region13
    $region12: #{mlp_forward.1} parent=1 // pred_region
      _
    $region13: #{mlp_forward.1} parent=1 // pred_fallthru
      _
    // Predicated region
    $region14: #{mlp_forward.1} parent=1 // pred_check
      _
    $region15: #{mlp_forward.1} parent=1 // pred_check_branch
      %31 = sbr.rel (0) target = $region17
    $region16: #{mlp_forward.1} parent=1 // pred_region
      _
    $region17: #{mlp_forward.1} parent=1 // pred_fallthru
      _
    // Predicated region
    $region18: #{mlp_forward.1} parent=1 // pred_check
      _
    $region19: #{mlp_forward.1} parent=1 // pred_check_branch
      %33 = sbr.rel (0) target = $region21
    $region20: #{mlp_forward.1} parent=1 // pred_region
      _
    $region21: #{mlp_forward.1} parent=1 // pred_fallthru
      _
    // Predicated region
    $region22: #{mlp_forward.1} parent=1 // pred_check
      _
    $region23: #{mlp_forward.1} parent=1 // pred_check_branch
      %35 = sbr.rel (0) target = $region25
    $region24: #{mlp_forward.1} parent=1 // pred_region
      _
    $region25: #{mlp_forward.1} parent=1 // pred_fallthru
      _
    // Predicated region
    $region26: #{mlp_forward.1} parent=1 // pred_check
      _
    $region27: #{mlp_forward.1} parent=1 // pred_check_branch
      %37 = sbr.rel (0) target = $region29
    $region28: #{mlp_forward.1} parent=1 // pred_region
      _
    $region29: #{mlp_forward.1} parent=1 // pred_fallthru
      _
    // Predicated region
    $region30: #{mlp_forward.1} parent=1 // pred_check
      _
    $region31: #{mlp_forward.1} parent=1 // pred_check_branch
      %39 = sbr.rel (0) target = $region33
    $region32: #{mlp_forward.1} parent=1 // pred_region
      %41 = dma.done [#allocation3], 28672
    $region33: #{mlp_forward.1} parent=1 // pred_fallthru
      _
    %v42 = vld [vmem:[%s0] sm:$0xff]
    %v43 = vld [vmem:[%s0 + $0x8] sm:$0xff]
    %v44 = vld [vmem:[%s0 + $0x10] sm:$0xff]
    %v45 = vld [vmem:[%s0 + $0x18] sm:$0xf]
    %v46 = vld [vmem:[%s0 + $0x1c] sm:$0xff]
    %v47 = vld [vmem:[%s0 + $0x24] sm:$0xff]
    %v48 = vld [vmem:[%s0 + $0x2c] sm:$0xff]
    %v49 = vld [vmem:[%s0 + $0x34] sm:$0xf]
    %v50 = vld [vmem:[%s0 + $0x38] sm:$0xff]
    %v51 = vld [vmem:[%s0 + $0x40] sm:$0xff]
    %v52 = vld [vmem:[%s0 + $0x48] sm:$0xff]
    %v53 = vld [vmem:[%s0 + $0x50] sm:$0xf]
    %v54 = vld [vmem:[%s0 + $0x54] sm:$0xff]
    %v55 = vld [vmem:[%s0 + $0x5c] sm:$0xff]
    %v56 = vld [vmem:[%s0 + $0x64] sm:$0xff]
    %v57 = vld [vmem:[%s0 + $0x6c] sm:$0xf]
    %v58 = vld [vmem:[%s0 + $0x70] sm:$0xff]
    %v59 = vld [vmem:[%s0 + $0x78] sm:$0xff]
    %v60 = vld [vmem:[%s0 + $0x80] sm:$0xff]
    %v61 = vld [vmem:[%s0 + $0x88] sm:$0xf]
    %v62 = vld [vmem:[%s0 + $0x8c] sm:$0xff]
    %v63 = vld [vmem:[%s0 + $0x94] sm:$0xff]
    %v64 = vld [vmem:[%s0 + $0x9c] sm:$0xff]
    %v65 = vld [vmem:[%s0 + $0xa4] sm:$0xf]
    %v66 = vld [vmem:[%s0 + $0xa8] sm:$0xff]
    %v67 = vld [vmem:[%s0 + $0xb0] sm:$0xff]
    %v68 = vld [vmem:[%s0 + $0xb8] sm:$0xff]
    %v69 = vld [vmem:[%s0 + $0xc0] sm:$0xf]
    %v70 = vld [vmem:[%s0 + $0xc4] sm:$0xff]
    %v71 = vld [vmem:[%s0 + $0xcc] sm:$0xff]
    %v72 = vld [vmem:[%s0 + $0xd4] sm:$0xff]
    %v73 = vld [vmem:[%s0 + $0xdc] sm:$0xf]
    %v74 = vld [vmem:[%s0 + $0xe0] sm:$0xff]
    %v75 = vld [vmem:[%s0 + $0xe8] sm:$0xff]
    %v76 = vld [vmem:[%s0 + $0xf0] sm:$0xff]
    %v77 = vld [vmem:[%s0 + $0xf8] sm:$0xf]
    %v78 = vld [vmem:[%s0 + $0xfc] sm:$0xff]
    %v79 = vld [vmem:[%s0 + $0x104] sm:$0xff]
    %v80 = vld [vmem:[%s0 + $0x10c] sm:$0xff]
    %v81 = vld [vmem:[%s0 + $0x114] sm:$0xf]
    %v82 = vld [vmem:[%s0 + $0x118] sm:$0xff]
    %v83 = vld [vmem:[%s0 + $0x120] sm:$0xff]
    %v84 = vld [vmem:[%s0 + $0x128] sm:$0xff]
    %v85 = vld [vmem:[%s0 + $0x130] sm:$0xf]
    %v86 = vld [vmem:[%s0 + $0x134] sm:$0xff]
    %v87 = vld [vmem:[%s0 + $0x13c] sm:$0xff]
    %v88 = vld [vmem:[%s0 + $0x144] sm:$0xff]
    %v89 = vld [vmem:[%s0 + $0x14c] sm:$0xf]
    %v90 = vld [vmem:[%s0 + $0x150] sm:$0xff]
    %v91 = vld [vmem:[%s0 + $0x158] sm:$0xff]
    %v92 = vld [vmem:[%s0 + $0x160] sm:$0xff]
    %v93 = vld [vmem:[%s0 + $0x168] sm:$0xf]
    %v94 = vld [vmem:[%s0 + $0x16c] sm:$0xff]
    %v95 = vld [vmem:[%s0 + $0x174] sm:$0xff]
    %v96 = vld [vmem:[%s0 + $0x17c] sm:$0xff]
    %v97 = vld [vmem:[%s0 + $0x184] sm:$0xf]
    %v98 = vld [vmem:[%s0 + $0x188] sm:$0xff]
    %v99 = vld [vmem:[%s0 + $0x190] sm:$0xff]
    %v100 = vld [vmem:[%s0 + $0x198] sm:$0xff]
    %v101 = vld [vmem:[%s0 + $0x1a0] sm:$0xf]
    %v102 = vld [vmem:[%s0 + $0x1a4] sm:$0xff]
    %v103 = vld [vmem:[%s0 + $0x1ac] sm:$0xff]
    %v104 = vld [vmem:[%s0 + $0x1b4] sm:$0xff]
    %v105 = vld [vmem:[%s0 + $0x1bc] sm:$0xf]
    %v106 = vld [vmem:[#allocation2] sm:$0xff]
    %v107 = vld [vmem:[#allocation2 + $0x8] sm:$0xff]
    %v108 = vld [vmem:[#allocation2 + $0x10] sm:$0xff]
    %v109 = vld [vmem:[#allocation2 + $0x18] sm:$0xff]
    %v110 = vld [vmem:[#allocation2 + $0x20] sm:$0xff]
    %v111 = vld [vmem:[#allocation2 + $0x28] sm:$0xff]
    %v112 = vld [vmem:[#allocation2 + $0x30] sm:$0xff]
    %v113 = vld [vmem:[#allocation2 + $0x38] sm:$0xff]
    %v114 = vld [vmem:[#allocation2 + $0x40] sm:$0xff]
    %v115 = vld [vmem:[#allocation2 + $0x48] sm:$0xff]
    %v116 = vld [vmem:[#allocation2 + $0x50] sm:$0xff]
    %v117 = vld [vmem:[#allocation2 + $0x58] sm:$0xff]
    %v118 = vld [vmem:[#allocation2 + $0x60] sm:$0xff]
    %v119 = vld [vmem:[#allocation2 + $0x68] sm:$0xff]
    %v120 = vld [vmem:[#allocation2 + $0x70] sm:$0xff]
    %v121 = vld [vmem:[#allocation2 + $0x78] sm:$0xff]
    %v122 = vld [vmem:[#allocation2 + $0x80] sm:$0xff]
    %v123 = vld [vmem:[#allocation2 + $0x88] sm:$0xff]
    %v124 = vld [vmem:[#allocation2 + $0x90] sm:$0xff]
    %v125 = vld [vmem:[#allocation2 + $0x98] sm:$0xff]
    %v126 = vld [vmem:[#allocation2 + $0xa0] sm:$0xff]
    %v127 = vld [vmem:[#allocation2 + $0xa8] sm:$0xff]
    %v128 = vld [vmem:[#allocation2 + $0xb0] sm:$0xff]
    %v129 = vld [vmem:[#allocation2 + $0xb8] sm:$0xff]
    %v130 = vld [vmem:[#allocation2 + $0xc0] sm:$0xff]
    %v131 = vld [vmem:[#allocation2 + $0xc8] sm:$0xff]
    %v132 = vld [vmem:[#allocation2 + $0xd0] sm:$0xff]
    %v133 = vld [vmem:[#allocation2 + $0xd8] sm:$0xff]
    %v134 = vld [vmem:[#allocation2 + $0xe0] sm:$0xff]
    %v135 = vld [vmem:[#allocation2 + $0xe8] sm:$0xff]
    %v136 = vld [vmem:[#allocation2 + $0xf0] sm:$0xff]
    %v137 = vld [vmem:[#allocation2 + $0xf8] sm:$0xff]
    %v138 = vld [vmem:[#allocation2 + $0x100] sm:$0xff]
    %v139 = vld [vmem:[#allocation2 + $0x108] sm:$0xff]
    %v140 = vld [vmem:[#allocation2 + $0x110] sm:$0xff]
    %v141 = vld [vmem:[#allocation2 + $0x118] sm:$0xff]
    %v142 = vld [vmem:[#allocation2 + $0x120] sm:$0xff]
    %v143 = vld [vmem:[#allocation2 + $0x128] sm:$0xff]
    %v144 = vld [vmem:[#allocation2 + $0x130] sm:$0xff]
    %v145 = vld [vmem:[#allocation2 + $0x138] sm:$0xff]
    %v146 = vld [vmem:[#allocation2 + $0x140] sm:$0xff]
    %v147 = vld [vmem:[#allocation2 + $0x148] sm:$0xff]
    %v148 = vld [vmem:[#allocation2 + $0x150] sm:$0xff]
    %v149 = vld [vmem:[#allocation2 + $0x158] sm:$0xff]
    %v150 = vld [vmem:[#allocation2 + $0x160] sm:$0xff]
    %v151 = vld [vmem:[#allocation2 + $0x168] sm:$0xff]
    %v152 = vld [vmem:[#allocation2 + $0x170] sm:$0xff]
    %v153 = vld [vmem:[#allocation2 + $0x178] sm:$0xff]
    %v154 = vld [vmem:[#allocation2 + $0x180] sm:$0xff]
    %v155 = vld [vmem:[#allocation2 + $0x188] sm:$0xff]
    %v156 = vld [vmem:[#allocation2 + $0x190] sm:$0xff]
    %v157 = vld [vmem:[#allocation2 + $0x198] sm:$0xff]
    %v158 = vld [vmem:[#allocation2 + $0x1a0] sm:$0xff]
    %v159 = vld [vmem:[#allocation2 + $0x1a8] sm:$0xff]
    %v160 = vld [vmem:[#allocation2 + $0x1b0] sm:$0xff]
    %v161 = vld [vmem:[#allocation2 + $0x1b8] sm:$0xff]
    %v162 = vld [vmem:[#allocation2 + $0x1c0] sm:$0xff]
    %v163 = vld [vmem:[#allocation2 + $0x1c8] sm:$0xff]
    %v164 = vld [vmem:[#allocation2 + $0x1d0] sm:$0xff]
    %v165 = vld [vmem:[#allocation2 + $0x1d8] sm:$0xff]
    %v166 = vld [vmem:[#allocation2 + $0x1e0] sm:$0xff]
    %v167 = vld [vmem:[#allocation2 + $0x1e8] sm:$0xff]
    %v168 = vld [vmem:[#allocation2 + $0x1f0] sm:$0xff]
    %v169 = vld [vmem:[#allocation2 + $0x1f8] sm:$0xff]
    %v170 = vld [vmem:[#allocation2 + $0x200] sm:$0xff]
    %v171 = vld [vmem:[#allocation2 + $0x208] sm:$0xff]
    %v172 = vld [vmem:[#allocation2 + $0x210] sm:$0xff]
    %v173 = vld [vmem:[#allocation2 + $0x218] sm:$0xff]
    %v174 = vld [vmem:[#allocation2 + $0x220] sm:$0xff]
    %v175 = vld [vmem:[#allocation2 + $0x228] sm:$0xff]
    %v176 = vld [vmem:[#allocation2 + $0x230] sm:$0xff]
    %v177 = vld [vmem:[#allocation2 + $0x238] sm:$0xff]
    %v178 = vld [vmem:[#allocation2 + $0x240] sm:$0xff]
    %v179 = vld [vmem:[#allocation2 + $0x248] sm:$0xff]
    %v180 = vld [vmem:[#allocation2 + $0x250] sm:$0xff]
    %v181 = vld [vmem:[#allocation2 + $0x258] sm:$0xff]
    %v182 = vld [vmem:[#allocation2 + $0x260] sm:$0xff]
    %v183 = vld [vmem:[#allocation2 + $0x268] sm:$0xff]
    %v184 = vld [vmem:[#allocation2 + $0x270] sm:$0xff]
    %v185 = vld [vmem:[#allocation2 + $0x278] sm:$0xff]
    %v186 = vld [vmem:[#allocation2 + $0x280] sm:$0xff]
    %v187 = vld [vmem:[#allocation2 + $0x288] sm:$0xff]
    %v188 = vld [vmem:[#allocation2 + $0x290] sm:$0xff]
    %v189 = vld [vmem:[#allocation2 + $0x298] sm:$0xff]
    %v190 = vld [vmem:[#allocation2 + $0x2a0] sm:$0xff]
    %v191 = vld [vmem:[#allocation2 + $0x2a8] sm:$0xff]
    %v192 = vld [vmem:[#allocation2 + $0x2b0] sm:$0xff]
    %v193 = vld [vmem:[#allocation2 + $0x2b8] sm:$0xff]
    %v194 = vld [vmem:[#allocation2 + $0x2c0] sm:$0xff]
    %v195 = vld [vmem:[#allocation2 + $0x2c8] sm:$0xff]
    %v196 = vld [vmem:[#allocation2 + $0x2d0] sm:$0xff]
    %v197 = vld [vmem:[#allocation2 + $0x2d8] sm:$0xff]
    %v198 = vld [vmem:[#allocation2 + $0x2e0] sm:$0xff]
    %v199 = vld [vmem:[#allocation2 + $0x2e8] sm:$0xff]
    %v200 = vld [vmem:[#allocation2 + $0x2f0] sm:$0xff]
    %v201 = vld [vmem:[#allocation2 + $0x2f8] sm:$0xff]
    %v202 = vld [vmem:[#allocation2 + $0x300] sm:$0xff]
    %v203 = vld [vmem:[#allocation2 + $0x308] sm:$0xff]
    %v204 = vld [vmem:[#allocation2 + $0x310] sm:$0xff]
    %v205 = vld [vmem:[#allocation2 + $0x318] sm:$0xff]
    %v206 = vld [vmem:[#allocation2 + $0x320] sm:$0xff]
    %v207 = vld [vmem:[#allocation2 + $0x328] sm:$0xff]
    %v208 = vld [vmem:[#allocation2 + $0x330] sm:$0xff]
    %v209 = vld [vmem:[#allocation2 + $0x338] sm:$0xff]
    %v210 = vld [vmem:[#allocation2 + $0x340] sm:$0xff]
    %v211 = vld [vmem:[#allocation2 + $0x348] sm:$0xff]
    %v212 = vld [vmem:[#allocation2 + $0x350] sm:$0xff]
    %v213 = vld [vmem:[#allocation2 + $0x358] sm:$0xff]
    %v214 = vld [vmem:[#allocation2 + $0x360] sm:$0xff]
    %v215 = vld [vmem:[#allocation2 + $0x368] sm:$0xff]
    %v216 = vld [vmem:[#allocation2 + $0x370] sm:$0xff]
    %v217 = vld [vmem:[#allocation2 + $0x378] sm:$0xff]
    %v218 = vld [vmem:[#allocation2 + $0x380] sm:$0xff]
    %v219 = vld [vmem:[#allocation2 + $0x388] sm:$0xff]
    %v220 = vld [vmem:[#allocation2 + $0x390] sm:$0xff]
    %v221 = vld [vmem:[#allocation2 + $0x398] sm:$0xff]
    %v222 = vld [vmem:[#allocation2 + $0x3a0] sm:$0xff]
    %v223 = vld [vmem:[#allocation2 + $0x3a8] sm:$0xff]
    %v224 = vld [vmem:[#allocation2 + $0x3b0] sm:$0xff]
    %v225 = vld [vmem:[#allocation2 + $0x3b8] sm:$0xff]
    %v226 = vld [vmem:[#allocation2 + $0x3c0] sm:$0xff]
    %v227 = vld [vmem:[#allocation2 + $0x3c8] sm:$0xff]
    %v228 = vld [vmem:[#allocation2 + $0x3d0] sm:$0xff]
    %v229 = vld [vmem:[#allocation2 + $0x3d8] sm:$0xff]
    %v230 = vld [vmem:[#allocation2 + $0x3e0] sm:$0xff]
    %v231 = vld [vmem:[#allocation2 + $0x3e8] sm:$0xff]
    %v232 = vld [vmem:[#allocation2 + $0x3f0] sm:$0xff]
    %v233 = vld [vmem:[#allocation2 + $0x3f8] sm:$0xff]
    %v234 = vld [vmem:[#allocation2 + $0x400] sm:$0xff]
    %v235 = vld [vmem:[#allocation2 + $0x408] sm:$0xff]
    %v236 = vld [vmem:[#allocation2 + $0x410] sm:$0xff]
    %v237 = vld [vmem:[#allocation2 + $0x418] sm:$0xff]
    %v238 = vld [vmem:[#allocation2 + $0x420] sm:$0xff]
    %v239 = vld [vmem:[#allocation2 + $0x428] sm:$0xff]
    %v240 = vld [vmem:[#allocation2 + $0x430] sm:$0xff]
    %v241 = vld [vmem:[#allocation2 + $0x438] sm:$0xff]
    %v242 = vld [vmem:[#allocation2 + $0x440] sm:$0xff]
    %v243 = vld [vmem:[#allocation2 + $0x448] sm:$0xff]
    %v244 = vld [vmem:[#allocation2 + $0x450] sm:$0xff]
    %v245 = vld [vmem:[#allocation2 + $0x458] sm:$0xff]
    %v246 = vld [vmem:[#allocation2 + $0x460] sm:$0xff]
    %v247 = vld [vmem:[#allocation2 + $0x468] sm:$0xff]
    %v248 = vld [vmem:[#allocation2 + $0x470] sm:$0xff]
    %v249 = vld [vmem:[#allocation2 + $0x478] sm:$0xff]
    %v250 = vld [vmem:[#allocation2 + $0x480] sm:$0xff]
    %v251 = vld [vmem:[#allocation2 + $0x488] sm:$0xff]
    %v252 = vld [vmem:[#allocation2 + $0x490] sm:$0xff]
    %v253 = vld [vmem:[#allocation2 + $0x498] sm:$0xff]
    %v254 = vld [vmem:[#allocation2 + $0x4a0] sm:$0xff]
    %v255 = vld [vmem:[#allocation2 + $0x4a8] sm:$0xff]
    %v256 = vld [vmem:[#allocation2 + $0x4b0] sm:$0xff]
    %v257 = vld [vmem:[#allocation2 + $0x4b8] sm:$0xff]
    %v258 = vld [vmem:[#allocation2 + $0x4c0] sm:$0xff]
    %v259 = vld [vmem:[#allocation2 + $0x4c8] sm:$0xff]
    %v260 = vld [vmem:[#allocation2 + $0x4d0] sm:$0xff]
    %v261 = vld [vmem:[#allocation2 + $0x4d8] sm:$0xff]
    %v262 = vld [vmem:[#allocation2 + $0x4e0] sm:$0xff]
    %v263 = vld [vmem:[#allocation2 + $0x4e8] sm:$0xff]
    %v264 = vld [vmem:[#allocation2 + $0x4f0] sm:$0xff]
    %v265 = vld [vmem:[#allocation2 + $0x4f8] sm:$0xff]
    %v266 = vld [vmem:[#allocation2 + $0x500] sm:$0xff]
    %v267 = vld [vmem:[#allocation2 + $0x508] sm:$0xff]
    %v268 = vld [vmem:[#allocation2 + $0x510] sm:$0xff]
    %v269 = vld [vmem:[#allocation2 + $0x518] sm:$0xff]
    %v270 = vld [vmem:[#allocation2 + $0x520] sm:$0xff]
    %v271 = vld [vmem:[#allocation2 + $0x528] sm:$0xff]
    %v272 = vld [vmem:[#allocation2 + $0x530] sm:$0xff]
    %v273 = vld [vmem:[#allocation2 + $0x538] sm:$0xff]
    %v274 = vld [vmem:[#allocation2 + $0x540] sm:$0xff]
    %v275 = vld [vmem:[#allocation2 + $0x548] sm:$0xff]
    %v276 = vld [vmem:[#allocation2 + $0x550] sm:$0xff]
    %v277 = vld [vmem:[#allocation2 + $0x558] sm:$0xff]
    %v278 = vld [vmem:[#allocation2 + $0x560] sm:$0xff]
    %v279 = vld [vmem:[#allocation2 + $0x568] sm:$0xff]
    %v280 = vld [vmem:[#allocation2 + $0x570] sm:$0xff]
    %v281 = vld [vmem:[#allocation2 + $0x578] sm:$0xff]
    %v282 = vld [vmem:[#allocation2 + $0x580] sm:$0xff]
    %v283 = vld [vmem:[#allocation2 + $0x588] sm:$0xff]
    %v284 = vld [vmem:[#allocation2 + $0x590] sm:$0xff]
    %v285 = vld [vmem:[#allocation2 + $0x598] sm:$0xff]
    %v286 = vld [vmem:[#allocation2 + $0x5a0] sm:$0xff]
    %v287 = vld [vmem:[#allocation2 + $0x5a8] sm:$0xff]
    %v288 = vld [vmem:[#allocation2 + $0x5b0] sm:$0xff]
    %v289 = vld [vmem:[#allocation2 + $0x5b8] sm:$0xff]
    %v290 = vld [vmem:[#allocation2 + $0x5c0] sm:$0xff]
    %v291 = vld [vmem:[#allocation2 + $0x5c8] sm:$0xff]
    %v292 = vld [vmem:[#allocation2 + $0x5d0] sm:$0xff]
    %v293 = vld [vmem:[#allocation2 + $0x5d8] sm:$0xff]
    %v294 = vld [vmem:[#allocation2 + $0x5e0] sm:$0xff]
    %v295 = vld [vmem:[#allocation2 + $0x5e8] sm:$0xff]
    %v296 = vld [vmem:[#allocation2 + $0x5f0] sm:$0xff]
    %v297 = vld [vmem:[#allocation2 + $0x5f8] sm:$0xff]
    %v298 = vld [vmem:[#allocation2 + $0x600] sm:$0xff]
    %v299 = vld [vmem:[#allocation2 + $0x608] sm:$0xff]
    %v300 = vld [vmem:[#allocation2 + $0x610] sm:$0xff]
    %v301 = vld [vmem:[#allocation2 + $0x618] sm:$0xff]
    %v302 = vld [vmem:[#allocation2 + $0x620] sm:$0xff]
    %v303 = vld [vmem:[#allocation2 + $0x628] sm:$0xff]
    %v304 = vld [vmem:[#allocation2 + $0x630] sm:$0xff]
    %v305 = vld [vmem:[#allocation2 + $0x638] sm:$0xff]
    %v306 = vld [vmem:[#allocation2 + $0x640] sm:$0xff]
    %v307 = vld [vmem:[#allocation2 + $0x648] sm:$0xff]
    %v308 = vld [vmem:[#allocation2 + $0x650] sm:$0xff]
    %v309 = vld [vmem:[#allocation2 + $0x658] sm:$0xff]
    %v310 = vld [vmem:[#allocation2 + $0x660] sm:$0xff]
    %v311 = vld [vmem:[#allocation2 + $0x668] sm:$0xff]
    %v312 = vld [vmem:[#allocation2 + $0x670] sm:$0xff]
    %v313 = vld [vmem:[#allocation2 + $0x678] sm:$0xff]
    %v314 = vld [vmem:[#allocation2 + $0x680] sm:$0xff]
    %v315 = vld [vmem:[#allocation2 + $0x688] sm:$0xff]
    %v316 = vld [vmem:[#allocation2 + $0x690] sm:$0xff]
    %v317 = vld [vmem:[#allocation2 + $0x698] sm:$0xff]
    %v318 = vld [vmem:[#allocation2 + $0x6a0] sm:$0xff]
    %v319 = vld [vmem:[#allocation2 + $0x6a8] sm:$0xff]
    %v320 = vld [vmem:[#allocation2 + $0x6b0] sm:$0xff]
    %v321 = vld [vmem:[#allocation2 + $0x6b8] sm:$0xff]
    %v322 = vld [vmem:[#allocation2 + $0x6c0] sm:$0xff]
    %v323 = vld [vmem:[#allocation2 + $0x6c8] sm:$0xff]
    %v324 = vld [vmem:[#allocation2 + $0x6d0] sm:$0xff]
    %v325 = vld [vmem:[#allocation2 + $0x6d8] sm:$0xff]
    %v326 = vld [vmem:[#allocation2 + $0x6e0] sm:$0xff]
    %v327 = vld [vmem:[#allocation2 + $0x6e8] sm:$0xff]
    %v328 = vld [vmem:[#allocation2 + $0x6f0] sm:$0xff]
    %v329 = vld [vmem:[#allocation2 + $0x6f8] sm:$0xff]
    %v330 = vld [vmem:[%s2] sm:$0xf]
    %v332 = vperm.slane %v330, 0
    %v333 = vperm.slane %v330, 1
    %v334 = vperm.slane %v330, 2
    %v335 = vperm.slane %v330, 3
    %v404 = vunpack.c.l.b16 %v42
    %v405 = vunpack.c.h.b16 %v42
    %v406 = vunpack.c.l.b16 %v43
    %v407 = vunpack.c.h.b16 %v43
    %v408 = vunpack.c.l.b16 %v44
    %v409 = vunpack.c.h.b16 %v44
    %v410 = vunpack.c.l.b16 %v45
    %v411 = vunpack.c.l.b16 %v46
    %v412 = vunpack.c.h.b16 %v46
    %v413 = vunpack.c.l.b16 %v47
    %v414 = vunpack.c.h.b16 %v47
    %v415 = vunpack.c.l.b16 %v48
    %v416 = vunpack.c.h.b16 %v48
    %v417 = vunpack.c.l.b16 %v49
    %v418 = vunpack.c.l.b16 %v50
    %v419 = vunpack.c.h.b16 %v50
    %v420 = vunpack.c.l.b16 %v51
    %v421 = vunpack.c.h.b16 %v51
    %v422 = vunpack.c.l.b16 %v52
    %v423 = vunpack.c.h.b16 %v52
    %v424 = vunpack.c.l.b16 %v53
    %v425 = vunpack.c.l.b16 %v54
    %v426 = vunpack.c.h.b16 %v54
    %v427 = vunpack.c.l.b16 %v55
    %v428 = vunpack.c.h.b16 %v55
    %v429 = vunpack.c.l.b16 %v56
    %v430 = vunpack.c.h.b16 %v56
    %v431 = vunpack.c.l.b16 %v57
    %v432 = vunpack.c.l.b16 %v58
    %v433 = vunpack.c.h.b16 %v58
    %v434 = vunpack.c.l.b16 %v59
    %v435 = vunpack.c.h.b16 %v59
    %v436 = vunpack.c.l.b16 %v60
    %v437 = vunpack.c.h.b16 %v60
    %v438 = vunpack.c.l.b16 %v61
    %v439 = vunpack.c.l.b16 %v62
    %v440 = vunpack.c.h.b16 %v62
    %v441 = vunpack.c.l.b16 %v63
    %v442 = vunpack.c.h.b16 %v63
    %v443 = vunpack.c.l.b16 %v64
    %v444 = vunpack.c.h.b16 %v64
    %v445 = vunpack.c.l.b16 %v65
    %v446 = vunpack.c.l.b16 %v66
    %v447 = vunpack.c.h.b16 %v66
    %v448 = vunpack.c.l.b16 %v67
    %v449 = vunpack.c.h.b16 %v67
    %v450 = vunpack.c.l.b16 %v68
    %v451 = vunpack.c.h.b16 %v68
    %v452 = vunpack.c.l.b16 %v69
    %v453 = vunpack.c.l.b16 %v70
    %v454 = vunpack.c.h.b16 %v70
    %v455 = vunpack.c.l.b16 %v71
    %v456 = vunpack.c.h.b16 %v71
    %v457 = vunpack.c.l.b16 %v72
    %v458 = vunpack.c.h.b16 %v72
    %v459 = vunpack.c.l.b16 %v73
    %v460 = vunpack.c.l.b16 %v74
    %v461 = vunpack.c.h.b16 %v74
    %v462 = vunpack.c.l.b16 %v75
    %v463 = vunpack.c.h.b16 %v75
    %v464 = vunpack.c.l.b16 %v76
    %v465 = vunpack.c.h.b16 %v76
    %v466 = vunpack.c.l.b16 %v77
    %v467 = vunpack.c.l.b16 %v78
    %v468 = vunpack.c.h.b16 %v78
    %v469 = vunpack.c.l.b16 %v79
    %v470 = vunpack.c.h.b16 %v79
    %v471 = vunpack.c.l.b16 %v80
    %v472 = vunpack.c.h.b16 %v80
    %v473 = vunpack.c.l.b16 %v81
    %v474 = vunpack.c.l.b16 %v82
    %v475 = vunpack.c.h.b16 %v82
    %v476 = vunpack.c.l.b16 %v83
    %v477 = vunpack.c.h.b16 %v83
    %v478 = vunpack.c.l.b16 %v84
    %v479 = vunpack.c.h.b16 %v84
    %v480 = vunpack.c.l.b16 %v85
    %v481 = vunpack.c.l.b16 %v86
    %v482 = vunpack.c.h.b16 %v86
    %v483 = vunpack.c.l.b16 %v87
    %v484 = vunpack.c.h.b16 %v87
    %v485 = vunpack.c.l.b16 %v88
    %v486 = vunpack.c.h.b16 %v88
    %v487 = vunpack.c.l.b16 %v89
    %v488 = vunpack.c.l.b16 %v90
    %v489 = vunpack.c.h.b16 %v90
    %v490 = vunpack.c.l.b16 %v91
    %v491 = vunpack.c.h.b16 %v91
    %v492 = vunpack.c.l.b16 %v92
    %v493 = vunpack.c.h.b16 %v92
    %v494 = vunpack.c.l.b16 %v93
    %v495 = vunpack.c.l.b16 %v94
    %v496 = vunpack.c.h.b16 %v94
    %v497 = vunpack.c.l.b16 %v95
    %v498 = vunpack.c.h.b16 %v95
    %v499 = vunpack.c.l.b16 %v96
    %v500 = vunpack.c.h.b16 %v96
    %v501 = vunpack.c.l.b16 %v97
    %v502 = vunpack.c.l.b16 %v98
    %v503 = vunpack.c.h.b16 %v98
    %v504 = vunpack.c.l.b16 %v99
    %v505 = vunpack.c.h.b16 %v99
    %v506 = vunpack.c.l.b16 %v100
    %v507 = vunpack.c.h.b16 %v100
    %v508 = vunpack.c.l.b16 %v101
    %v509 = vunpack.c.l.b16 %v102
    %v510 = vunpack.c.h.b16 %v102
    %v511 = vunpack.c.l.b16 %v103
    %v512 = vunpack.c.h.b16 %v103
    %v513 = vunpack.c.l.b16 %v104
    %v514 = vunpack.c.h.b16 %v104
    %v515 = vunpack.c.l.b16 %v105
    %v516 = vpack.c.b16 %v411, %v404
    %v517 = vpack.c.b16 %v412, %v405
    %v518 = vpack.c.b16 %v413, %v406
    %v519 = vpack.c.b16 %v414, %v407
    %v520 = vpack.c.b16 %v415, %v408
    %v521 = vpack.c.b16 %v416, %v409
    %v522 = vpack.c.b16 %v417, %v410
    %v523 = vpack.c.b16 %v425, %v418
    %v524 = vpack.c.b16 %v426, %v419
    %v525 = vpack.c.b16 %v427, %v420
    %v526 = vpack.c.b16 %v428, %v421
    %v527 = vpack.c.b16 %v429, %v422
    %v528 = vpack.c.b16 %v430, %v423
    %v529 = vpack.c.b16 %v431, %v424
    %v530 = vpack.c.b16 %v439, %v432
    %v531 = vpack.c.b16 %v440, %v433
    %v532 = vpack.c.b16 %v441, %v434
    %v533 = vpack.c.b16 %v442, %v435
    %v534 = vpack.c.b16 %v443, %v436
    %v535 = vpack.c.b16 %v444, %v437
    %v536 = vpack.c.b16 %v445, %v438
    %v537 = vpack.c.b16 %v453, %v446
    %v538 = vpack.c.b16 %v454, %v447
    %v539 = vpack.c.b16 %v455, %v448
    %v540 = vpack.c.b16 %v456, %v449
    %v541 = vpack.c.b16 %v457, %v450
    %v542 = vpack.c.b16 %v458, %v451
    %v543 = vpack.c.b16 %v459, %v452
    %v544 = vpack.c.b16 %v467, %v460
    %v545 = vpack.c.b16 %v468, %v461
    %v546 = vpack.c.b16 %v469, %v462
    %v547 = vpack.c.b16 %v470, %v463
    %v548 = vpack.c.b16 %v471, %v464
    %v549 = vpack.c.b16 %v472, %v465
    %v550 = vpack.c.b16 %v473, %v466
    %v551 = vpack.c.b16 %v481, %v474
    %v552 = vpack.c.b16 %v482, %v475
    %v553 = vpack.c.b16 %v483, %v476
    %v554 = vpack.c.b16 %v484, %v477
    %v555 = vpack.c.b16 %v485, %v478
    %v556 = vpack.c.b16 %v486, %v479
    %v557 = vpack.c.b16 %v487, %v480
    %v558 = vpack.c.b16 %v495, %v488
    %v559 = vpack.c.b16 %v496, %v489
    %v560 = vpack.c.b16 %v497, %v490
    %v561 = vpack.c.b16 %v498, %v491
    %v562 = vpack.c.b16 %v499, %v492
    %v563 = vpack.c.b16 %v500, %v493
    %v564 = vpack.c.b16 %v501, %v494
    %v565 = vpack.c.b16 %v509, %v502
    %v566 = vpack.c.b16 %v510, %v503
    %v567 = vpack.c.b16 %v511, %v504
    %v568 = vpack.c.b16 %v512, %v505
    %v569 = vpack.c.b16 %v513, %v506
    %v570 = vpack.c.b16 %v514, %v507
    %v571 = vpack.c.b16 %v515, %v508
    %v852 = vunpack.c.l.b16 %v106
    %v853 = vunpack.c.h.b16 %v106
    %v854 = vunpack.c.l.b16 %v107
    %v855 = vunpack.c.h.b16 %v107
    %v856 = vunpack.c.l.b16 %v108
    %v857 = vunpack.c.h.b16 %v108
    %v858 = vunpack.c.l.b16 %v109
    %v859 = vunpack.c.h.b16 %v109
    %v860 = vunpack.c.l.b16 %v110
    %v861 = vunpack.c.h.b16 %v110
    %v862 = vunpack.c.l.b16 %v111
    %v863 = vunpack.c.h.b16 %v111
    %v864 = vunpack.c.l.b16 %v112
    %v865 = vunpack.c.h.b16 %v112
    %v866 = vunpack.c.l.b16 %v113
    %v867 = vunpack.c.h.b16 %v113
    %v868 = vunpack.c.l.b16 %v114
    %v869 = vunpack.c.h.b16 %v114
    %v870 = vunpack.c.l.b16 %v115
    %v871 = vunpack.c.h.b16 %v115
    %v872 = vunpack.c.l.b16 %v116
    %v873 = vunpack.c.h.b16 %v116
    %v874 = vunpack.c.l.b16 %v117
    %v875 = vunpack.c.h.b16 %v117
    %v876 = vunpack.c.l.b16 %v118
    %v877 = vunpack.c.h.b16 %v118
    %v878 = vunpack.c.l.b16 %v119
    %v879 = vunpack.c.h.b16 %v119
    %v880 = vunpack.c.l.b16 %v120
    %v881 = vunpack.c.h.b16 %v120
    %v882 = vunpack.c.l.b16 %v121
    %v883 = vunpack.c.h.b16 %v121
    %v884 = vunpack.c.l.b16 %v122
    %v885 = vunpack.c.h.b16 %v122
    %v886 = vunpack.c.l.b16 %v123
    %v887 = vunpack.c.h.b16 %v123
    %v888 = vunpack.c.l.b16 %v124
    %v889 = vunpack.c.h.b16 %v124
    %v890 = vunpack.c.l.b16 %v125
    %v891 = vunpack.c.h.b16 %v125
    %v892 = vunpack.c.l.b16 %v126
    %v893 = vunpack.c.h.b16 %v126
    %v894 = vunpack.c.l.b16 %v127
    %v895 = vunpack.c.h.b16 %v127
    %v896 = vunpack.c.l.b16 %v128
    %v897 = vunpack.c.h.b16 %v128
    %v898 = vunpack.c.l.b16 %v129
    %v899 = vunpack.c.h.b16 %v129
    %v900 = vunpack.c.l.b16 %v130
    %v901 = vunpack.c.h.b16 %v130
    %v902 = vunpack.c.l.b16 %v131
    %v903 = vunpack.c.h.b16 %v131
    %v904 = vunpack.c.l.b16 %v132
    %v905 = vunpack.c.h.b16 %v132
    %v906 = vunpack.c.l.b16 %v133
    %v907 = vunpack.c.h.b16 %v133
    %v908 = vunpack.c.l.b16 %v134
    %v909 = vunpack.c.h.b16 %v134
    %v910 = vunpack.c.l.b16 %v135
    %v911 = vunpack.c.h.b16 %v135
    %v912 = vunpack.c.l.b16 %v136
    %v913 = vunpack.c.h.b16 %v136
    %v914 = vunpack.c.l.b16 %v137
    %v915 = vunpack.c.h.b16 %v137
    %v916 = vunpack.c.l.b16 %v138
    %v917 = vunpack.c.h.b16 %v138
    %v918 = vunpack.c.l.b16 %v139
    %v919 = vunpack.c.h.b16 %v139
    %v920 = vunpack.c.l.b16 %v140
    %v921 = vunpack.c.h.b16 %v140
    %v922 = vunpack.c.l.b16 %v141
    %v923 = vunpack.c.h.b16 %v141
    %v924 = vunpack.c.l.b16 %v142
    %v925 = vunpack.c.h.b16 %v142
    %v926 = vunpack.c.l.b16 %v143
    %v927 = vunpack.c.h.b16 %v143
    %v928 = vunpack.c.l.b16 %v144
    %v929 = vunpack.c.h.b16 %v144
    %v930 = vunpack.c.l.b16 %v145
    %v931 = vunpack.c.h.b16 %v145
    %v932 = vunpack.c.l.b16 %v146
    %v933 = vunpack.c.h.b16 %v146
    %v934 = vunpack.c.l.b16 %v147
    %v935 = vunpack.c.h.b16 %v147
    %v936 = vunpack.c.l.b16 %v148
    %v937 = vunpack.c.h.b16 %v148
    %v938 = vunpack.c.l.b16 %v149
    %v939 = vunpack.c.h.b16 %v149
    %v940 = vunpack.c.l.b16 %v150
    %v941 = vunpack.c.h.b16 %v150
    %v942 = vunpack.c.l.b16 %v151
    %v943 = vunpack.c.h.b16 %v151
    %v944 = vunpack.c.l.b16 %v152
    %v945 = vunpack.c.h.b16 %v152
    %v946 = vunpack.c.l.b16 %v153
    %v947 = vunpack.c.h.b16 %v153
    %v948 = vunpack.c.l.b16 %v154
    %v949 = vunpack.c.h.b16 %v154
    %v950 = vunpack.c.l.b16 %v155
    %v951 = vunpack.c.h.b16 %v155
    %v952 = vunpack.c.l.b16 %v156
    %v953 = vunpack.c.h.b16 %v156
    %v954 = vunpack.c.l.b16 %v157
    %v955 = vunpack.c.h.b16 %v157
    %v956 = vunpack.c.l.b16 %v158
    %v957 = vunpack.c.h.b16 %v158
    %v958 = vunpack.c.l.b16 %v159
    %v959 = vunpack.c.h.b16 %v159
    %v960 = vunpack.c.l.b16 %v160
    %v961 = vunpack.c.h.b16 %v160
    %v962 = vunpack.c.l.b16 %v161
    %v963 = vunpack.c.h.b16 %v161
    %v964 = vunpack.c.l.b16 %v162
    %v965 = vunpack.c.h.b16 %v162
    %v966 = vunpack.c.l.b16 %v163
    %v967 = vunpack.c.h.b16 %v163
    %v968 = vunpack.c.l.b16 %v164
    %v969 = vunpack.c.h.b16 %v164
    %v970 = vunpack.c.l.b16 %v165
    %v971 = vunpack.c.h.b16 %v165
    %v972 = vunpack.c.l.b16 %v166
    %v973 = vunpack.c.h.b16 %v166
    %v974 = vunpack.c.l.b16 %v167
    %v975 = vunpack.c.h.b16 %v167
    %v976 = vunpack.c.l.b16 %v168
    %v977 = vunpack.c.h.b16 %v168
    %v978 = vunpack.c.l.b16 %v169
    %v979 = vunpack.c.h.b16 %v169
    %v980 = vunpack.c.l.b16 %v170
    %v981 = vunpack.c.h.b16 %v170
    %v982 = vunpack.c.l.b16 %v171
    %v983 = vunpack.c.h.b16 %v171
    %v984 = vunpack.c.l.b16 %v172
    %v985 = vunpack.c.h.b16 %v172
    %v986 = vunpack.c.l.b16 %v173
    %v987 = vunpack.c.h.b16 %v173
    %v988 = vunpack.c.l.b16 %v174
    %v989 = vunpack.c.h.b16 %v174
    %v990 = vunpack.c.l.b16 %v175
    %v991 = vunpack.c.h.b16 %v175
    %v992 = vunpack.c.l.b16 %v176
    %v993 = vunpack.c.h.b16 %v176
    %v994 = vunpack.c.l.b16 %v177
    %v995 = vunpack.c.h.b16 %v177
    %v996 = vunpack.c.l.b16 %v178
    %v997 = vunpack.c.h.b16 %v178
    %v998 = vunpack.c.l.b16 %v179
    %v999 = vunpack.c.h.b16 %v179
    %v1000 = vunpack.c.l.b16 %v180
    %v1001 = vunpack.c.h.b16 %v180
    %v1002 = vunpack.c.l.b16 %v181
    %v1003 = vunpack.c.h.b16 %v181
    %v1004 = vunpack.c.l.b16 %v182
    %v1005 = vunpack.c.h.b16 %v182
    %v1006 = vunpack.c.l.b16 %v183
    %v1007 = vunpack.c.h.b16 %v183
    %v1008 = vunpack.c.l.b16 %v184
    %v1009 = vunpack.c.h.b16 %v184
    %v1010 = vunpack.c.l.b16 %v185
    %v1011 = vunpack.c.h.b16 %v185
    %v1012 = vunpack.c.l.b16 %v186
    %v1013 = vunpack.c.h.b16 %v186
    %v1014 = vunpack.c.l.b16 %v187
    %v1015 = vunpack.c.h.b16 %v187
    %v1016 = vunpack.c.l.b16 %v188
    %v1017 = vunpack.c.h.b16 %v188
    %v1018 = vunpack.c.l.b16 %v189
    %v1019 = vunpack.c.h.b16 %v189
    %v1020 = vunpack.c.l.b16 %v190
    %v1021 = vunpack.c.h.b16 %v190
    %v1022 = vunpack.c.l.b16 %v191
    %v1023 = vunpack.c.h.b16 %v191
    %v1024 = vunpack.c.l.b16 %v192
    %v1025 = vunpack.c.h.b16 %v192
    %v1026 = vunpack.c.l.b16 %v193
    %v1027 = vunpack.c.h.b16 %v193
    %v1028 = vunpack.c.l.b16 %v194
    %v1029 = vunpack.c.h.b16 %v194
    %v1030 = vunpack.c.l.b16 %v195
    %v1031 = vunpack.c.h.b16 %v195
    %v1032 = vunpack.c.l.b16 %v196
    %v1033 = vunpack.c.h.b16 %v196
    %v1034 = vunpack.c.l.b16 %v197
    %v1035 = vunpack.c.h.b16 %v197
    %v1036 = vunpack.c.l.b16 %v198
    %v1037 = vunpack.c.h.b16 %v198
    %v1038 = vunpack.c.l.b16 %v199
    %v1039 = vunpack.c.h.b16 %v199
    %v1040 = vunpack.c.l.b16 %v200
    %v1041 = vunpack.c.h.b16 %v200
    %v1042 = vunpack.c.l.b16 %v201
    %v1043 = vunpack.c.h.b16 %v201
    %v1044 = vunpack.c.l.b16 %v202
    %v1045 = vunpack.c.h.b16 %v202
    %v1046 = vunpack.c.l.b16 %v203
    %v1047 = vunpack.c.h.b16 %v203
    %v1048 = vunpack.c.l.b16 %v204
    %v1049 = vunpack.c.h.b16 %v204
    %v1050 = vunpack.c.l.b16 %v205
    %v1051 = vunpack.c.h.b16 %v205
    %v1052 = vunpack.c.l.b16 %v206
    %v1053 = vunpack.c.h.b16 %v206
    %v1054 = vunpack.c.l.b16 %v207
    %v1055 = vunpack.c.h.b16 %v207
    %v1056 = vunpack.c.l.b16 %v208
    %v1057 = vunpack.c.h.b16 %v208
    %v1058 = vunpack.c.l.b16 %v209
    %v1059 = vunpack.c.h.b16 %v209
    %v1060 = vunpack.c.l.b16 %v210
    %v1061 = vunpack.c.h.b16 %v210
    %v1062 = vunpack.c.l.b16 %v211
    %v1063 = vunpack.c.h.b16 %v211
    %v1064 = vunpack.c.l.b16 %v212
    %v1065 = vunpack.c.h.b16 %v212
    %v1066 = vunpack.c.l.b16 %v213
    %v1067 = vunpack.c.h.b16 %v213
    %v1068 = vunpack.c.l.b16 %v214
    %v1069 = vunpack.c.h.b16 %v214
    %v1070 = vunpack.c.l.b16 %v215
    %v1071 = vunpack.c.h.b16 %v215
    %v1072 = vunpack.c.l.b16 %v216
    %v1073 = vunpack.c.h.b16 %v216
    %v1074 = vunpack.c.l.b16 %v217
    %v1075 = vunpack.c.h.b16 %v217
    %v1076 = vunpack.c.l.b16 %v218
    %v1077 = vunpack.c.h.b16 %v218
    %v1078 = vunpack.c.l.b16 %v219
    %v1079 = vunpack.c.h.b16 %v219
    %v1080 = vunpack.c.l.b16 %v220
    %v1081 = vunpack.c.h.b16 %v220
    %v1082 = vunpack.c.l.b16 %v221
    %v1083 = vunpack.c.h.b16 %v221
    %v1084 = vunpack.c.l.b16 %v222
    %v1085 = vunpack.c.h.b16 %v222
    %v1086 = vunpack.c.l.b16 %v223
    %v1087 = vunpack.c.h.b16 %v223
    %v1088 = vunpack.c.l.b16 %v224
    %v1089 = vunpack.c.h.b16 %v224
    %v1090 = vunpack.c.l.b16 %v225
    %v1091 = vunpack.c.h.b16 %v225
    %v1092 = vunpack.c.l.b16 %v226
    %v1093 = vunpack.c.h.b16 %v226
    %v1094 = vunpack.c.l.b16 %v227
    %v1095 = vunpack.c.h.b16 %v227
    %v1096 = vunpack.c.l.b16 %v228
    %v1097 = vunpack.c.h.b16 %v228
    %v1098 = vunpack.c.l.b16 %v229
    %v1099 = vunpack.c.h.b16 %v229
    %v1100 = vunpack.c.l.b16 %v230
    %v1101 = vunpack.c.h.b16 %v230
    %v1102 = vunpack.c.l.b16 %v231
    %v1103 = vunpack.c.h.b16 %v231
    %v1104 = vunpack.c.l.b16 %v232
    %v1105 = vunpack.c.h.b16 %v232
    %v1106 = vunpack.c.l.b16 %v233
    %v1107 = vunpack.c.h.b16 %v233
    %v1108 = vunpack.c.l.b16 %v234
    %v1109 = vunpack.c.h.b16 %v234
    %v1110 = vunpack.c.l.b16 %v235
    %v1111 = vunpack.c.h.b16 %v235
    %v1112 = vunpack.c.l.b16 %v236
    %v1113 = vunpack.c.h.b16 %v236
    %v1114 = vunpack.c.l.b16 %v237
    %v1115 = vunpack.c.h.b16 %v237
    %v1116 = vunpack.c.l.b16 %v238
    %v1117 = vunpack.c.h.b16 %v238
    %v1118 = vunpack.c.l.b16 %v239
    %v1119 = vunpack.c.h.b16 %v239
    %v1120 = vunpack.c.l.b16 %v240
    %v1121 = vunpack.c.h.b16 %v240
    %v1122 = vunpack.c.l.b16 %v241
    %v1123 = vunpack.c.h.b16 %v241
    %v1124 = vunpack.c.l.b16 %v242
    %v1125 = vunpack.c.h.b16 %v242
    %v1126 = vunpack.c.l.b16 %v243
    %v1127 = vunpack.c.h.b16 %v243
    %v1128 = vunpack.c.l.b16 %v244
    %v1129 = vunpack.c.h.b16 %v244
    %v1130 = vunpack.c.l.b16 %v245
    %v1131 = vunpack.c.h.b16 %v245
    %v1132 = vunpack.c.l.b16 %v246
    %v1133 = vunpack.c.h.b16 %v246
    %v1134 = vunpack.c.l.b16 %v247
    %v1135 = vunpack.c.h.b16 %v247
    %v1136 = vunpack.c.l.b16 %v248
    %v1137 = vunpack.c.h.b16 %v248
    %v1138 = vunpack.c.l.b16 %v249
    %v1139 = vunpack.c.h.b16 %v249
    %v1140 = vunpack.c.l.b16 %v250
    %v1141 = vunpack.c.h.b16 %v250
    %v1142 = vunpack.c.l.b16 %v251
    %v1143 = vunpack.c.h.b16 %v251
    %v1144 = vunpack.c.l.b16 %v252
    %v1145 = vunpack.c.h.b16 %v252
    %v1146 = vunpack.c.l.b16 %v253
    %v1147 = vunpack.c.h.b16 %v253
    %v1148 = vunpack.c.l.b16 %v254
    %v1149 = vunpack.c.h.b16 %v254
    %v1150 = vunpack.c.l.b16 %v255
    %v1151 = vunpack.c.h.b16 %v255
    %v1152 = vunpack.c.l.b16 %v256
    %v1153 = vunpack.c.h.b16 %v256
    %v1154 = vunpack.c.l.b16 %v257
    %v1155 = vunpack.c.h.b16 %v257
    %v1156 = vunpack.c.l.b16 %v258
    %v1157 = vunpack.c.h.b16 %v258
    %v1158 = vunpack.c.l.b16 %v259
    %v1159 = vunpack.c.h.b16 %v259
    %v1160 = vunpack.c.l.b16 %v260
    %v1161 = vunpack.c.h.b16 %v260
    %v1162 = vunpack.c.l.b16 %v261
    %v1163 = vunpack.c.h.b16 %v261
    %v1164 = vunpack.c.l.b16 %v262
    %v1165 = vunpack.c.h.b16 %v262
    %v1166 = vunpack.c.l.b16 %v263
    %v1167 = vunpack.c.h.b16 %v263
    %v1168 = vunpack.c.l.b16 %v264
    %v1169 = vunpack.c.h.b16 %v264
    %v1170 = vunpack.c.l.b16 %v265
    %v1171 = vunpack.c.h.b16 %v265
    %v1172 = vunpack.c.l.b16 %v266
    %v1173 = vunpack.c.h.b16 %v266
    %v1174 = vunpack.c.l.b16 %v267
    %v1175 = vunpack.c.h.b16 %v267
    %v1176 = vunpack.c.l.b16 %v268
    %v1177 = vunpack.c.h.b16 %v268
    %v1178 = vunpack.c.l.b16 %v269
    %v1179 = vunpack.c.h.b16 %v269
    %v1180 = vunpack.c.l.b16 %v270
    %v1181 = vunpack.c.h.b16 %v270
    %v1182 = vunpack.c.l.b16 %v271
    %v1183 = vunpack.c.h.b16 %v271
    %v1184 = vunpack.c.l.b16 %v272
    %v1185 = vunpack.c.h.b16 %v272
    %v1186 = vunpack.c.l.b16 %v273
    %v1187 = vunpack.c.h.b16 %v273
    %v1188 = vunpack.c.l.b16 %v274
    %v1189 = vunpack.c.h.b16 %v274
    %v1190 = vunpack.c.l.b16 %v275
    %v1191 = vunpack.c.h.b16 %v275
    %v1192 = vunpack.c.l.b16 %v276
    %v1193 = vunpack.c.h.b16 %v276
    %v1194 = vunpack.c.l.b16 %v277
    %v1195 = vunpack.c.h.b16 %v277
    %v1196 = vunpack.c.l.b16 %v278
    %v1197 = vunpack.c.h.b16 %v278
    %v1198 = vunpack.c.l.b16 %v279
    %v1199 = vunpack.c.h.b16 %v279
    %v1200 = vunpack.c.l.b16 %v280
    %v1201 = vunpack.c.h.b16 %v280
    %v1202 = vunpack.c.l.b16 %v281
    %v1203 = vunpack.c.h.b16 %v281
    %v1204 = vunpack.c.l.b16 %v282
    %v1205 = vunpack.c.h.b16 %v282
    %v1206 = vunpack.c.l.b16 %v283
    %v1207 = vunpack.c.h.b16 %v283
    %v1208 = vunpack.c.l.b16 %v284
    %v1209 = vunpack.c.h.b16 %v284
    %v1210 = vunpack.c.l.b16 %v285
    %v1211 = vunpack.c.h.b16 %v285
    %v1212 = vunpack.c.l.b16 %v286
    %v1213 = vunpack.c.h.b16 %v286
    %v1214 = vunpack.c.l.b16 %v287
    %v1215 = vunpack.c.h.b16 %v287
    %v1216 = vunpack.c.l.b16 %v288
    %v1217 = vunpack.c.h.b16 %v288
    %v1218 = vunpack.c.l.b16 %v289
    %v1219 = vunpack.c.h.b16 %v289
    %v1220 = vunpack.c.l.b16 %v290
    %v1221 = vunpack.c.h.b16 %v290
    %v1222 = vunpack.c.l.b16 %v291
    %v1223 = vunpack.c.h.b16 %v291
    %v1224 = vunpack.c.l.b16 %v292
    %v1225 = vunpack.c.h.b16 %v292
    %v1226 = vunpack.c.l.b16 %v293
    %v1227 = vunpack.c.h.b16 %v293
    %v1228 = vunpack.c.l.b16 %v294
    %v1229 = vunpack.c.h.b16 %v294
    %v1230 = vunpack.c.l.b16 %v295
    %v1231 = vunpack.c.h.b16 %v295
    %v1232 = vunpack.c.l.b16 %v296
    %v1233 = vunpack.c.h.b16 %v296
    %v1234 = vunpack.c.l.b16 %v297
    %v1235 = vunpack.c.h.b16 %v297
    %v1236 = vunpack.c.l.b16 %v298
    %v1237 = vunpack.c.h.b16 %v298
    %v1238 = vunpack.c.l.b16 %v299
    %v1239 = vunpack.c.h.b16 %v299
    %v1240 = vunpack.c.l.b16 %v300
    %v1241 = vunpack.c.h.b16 %v300
    %v1242 = vunpack.c.l.b16 %v301
    %v1243 = vunpack.c.h.b16 %v301
    %v1244 = vunpack.c.l.b16 %v302
    %v1245 = vunpack.c.h.b16 %v302
    %v1246 = vunpack.c.l.b16 %v303
    %v1247 = vunpack.c.h.b16 %v303
    %v1248 = vunpack.c.l.b16 %v304
    %v1249 = vunpack.c.h.b16 %v304
    %v1250 = vunpack.c.l.b16 %v305
    %v1251 = vunpack.c.h.b16 %v305
    %v1252 = vunpack.c.l.b16 %v306
    %v1253 = vunpack.c.h.b16 %v306
    %v1254 = vunpack.c.l.b16 %v307
    %v1255 = vunpack.c.h.b16 %v307
    %v1256 = vunpack.c.l.b16 %v308
    %v1257 = vunpack.c.h.b16 %v308
    %v1258 = vunpack.c.l.b16 %v309
    %v1259 = vunpack.c.h.b16 %v309
    %v1260 = vunpack.c.l.b16 %v310
    %v1261 = vunpack.c.h.b16 %v310
    %v1262 = vunpack.c.l.b16 %v311
    %v1263 = vunpack.c.h.b16 %v311
    %v1264 = vunpack.c.l.b16 %v312
    %v1265 = vunpack.c.h.b16 %v312
    %v1266 = vunpack.c.l.b16 %v313
    %v1267 = vunpack.c.h.b16 %v313
    %v1268 = vunpack.c.l.b16 %v314
    %v1269 = vunpack.c.h.b16 %v314
    %v1270 = vunpack.c.l.b16 %v315
    %v1271 = vunpack.c.h.b16 %v315
    %v1272 = vunpack.c.l.b16 %v316
    %v1273 = vunpack.c.h.b16 %v316
    %v1274 = vunpack.c.l.b16 %v317
    %v1275 = vunpack.c.h.b16 %v317
    %v1276 = vunpack.c.l.b16 %v318
    %v1277 = vunpack.c.h.b16 %v318
    %v1278 = vunpack.c.l.b16 %v319
    %v1279 = vunpack.c.h.b16 %v319
    %v1280 = vunpack.c.l.b16 %v320
    %v1281 = vunpack.c.h.b16 %v320
    %v1282 = vunpack.c.l.b16 %v321
    %v1283 = vunpack.c.h.b16 %v321
    %v1284 = vunpack.c.l.b16 %v322
    %v1285 = vunpack.c.h.b16 %v322
    %v1286 = vunpack.c.l.b16 %v323
    %v1287 = vunpack.c.h.b16 %v323
    %v1288 = vunpack.c.l.b16 %v324
    %v1289 = vunpack.c.h.b16 %v324
    %v1290 = vunpack.c.l.b16 %v325
    %v1291 = vunpack.c.h.b16 %v325
    %v1292 = vunpack.c.l.b16 %v326
    %v1293 = vunpack.c.h.b16 %v326
    %v1294 = vunpack.c.l.b16 %v327
    %v1295 = vunpack.c.h.b16 %v327
    %v1296 = vunpack.c.l.b16 %v328
    %v1297 = vunpack.c.h.b16 %v328
    %v1298 = vunpack.c.l.b16 %v329
    %v1299 = vunpack.c.h.b16 %v329
    %v1300 = vpack.c.b16 %v856, %v852
    %v1301 = vpack.c.b16 %v857, %v853
    %v1302 = vpack.c.b16 %v858, %v854
    %v1303 = vpack.c.b16 %v859, %v855
    %v1304 = vpack.c.b16 %v864, %v860
    %v1305 = vpack.c.b16 %v865, %v861
    %v1306 = vpack.c.b16 %v866, %v862
    %v1307 = vpack.c.b16 %v867, %v863
    %v1308 = vpack.c.b16 %v872, %v868
    %v1309 = vpack.c.b16 %v873, %v869
    %v1310 = vpack.c.b16 %v874, %v870
    %v1311 = vpack.c.b16 %v875, %v871
    %v1312 = vpack.c.b16 %v880, %v876
    %v1313 = vpack.c.b16 %v881, %v877
    %v1314 = vpack.c.b16 %v882, %v878
    %v1315 = vpack.c.b16 %v883, %v879
    %v1316 = vpack.c.b16 %v888, %v884
    %v1317 = vpack.c.b16 %v889, %v885
    %v1318 = vpack.c.b16 %v890, %v886
    %v1319 = vpack.c.b16 %v891, %v887
    %v1320 = vpack.c.b16 %v896, %v892
    %v1321 = vpack.c.b16 %v897, %v893
    %v1322 = vpack.c.b16 %v898, %v894
    %v1323 = vpack.c.b16 %v899, %v895
    %v1324 = vpack.c.b16 %v904, %v900
    %v1325 = vpack.c.b16 %v905, %v901
    %v1326 = vpack.c.b16 %v906, %v902
    %v1327 = vpack.c.b16 %v907, %v903
    %v1328 = vpack.c.b16 %v912, %v908
    %v1329 = vpack.c.b16 %v913, %v909
    %v1330 = vpack.c.b16 %v914, %v910
    %v1331 = vpack.c.b16 %v915, %v911
    %v1332 = vpack.c.b16 %v920, %v916
    %v1333 = vpack.c.b16 %v921, %v917
    %v1334 = vpack.c.b16 %v922, %v918
    %v1335 = vpack.c.b16 %v923, %v919
    %v1336 = vpack.c.b16 %v928, %v924
    %v1337 = vpack.c.b16 %v929, %v925
    %v1338 = vpack.c.b16 %v930, %v926
    %v1339 = vpack.c.b16 %v931, %v927
    %v1340 = vpack.c.b16 %v936, %v932
    %v1341 = vpack.c.b16 %v937, %v933
    %v1342 = vpack.c.b16 %v938, %v934
    %v1343 = vpack.c.b16 %v939, %v935
    %v1344 = vpack.c.b16 %v944, %v940
    %v1345 = vpack.c.b16 %v945, %v941
    %v1346 = vpack.c.b16 %v946, %v942
    %v1347 = vpack.c.b16 %v947, %v943
    %v1348 = vpack.c.b16 %v952, %v948
    %v1349 = vpack.c.b16 %v953, %v949
    %v1350 = vpack.c.b16 %v954, %v950
    %v1351 = vpack.c.b16 %v955, %v951
    %v1352 = vpack.c.b16 %v960, %v956
    %v1353 = vpack.c.b16 %v961, %v957
    %v1354 = vpack.c.b16 %v962, %v958
    %v1355 = vpack.c.b16 %v963, %v959
    %v1356 = vpack.c.b16 %v968, %v964
    %v1357 = vpack.c.b16 %v969, %v965
    %v1358 = vpack.c.b16 %v970, %v966
    %v1359 = vpack.c.b16 %v971, %v967
    %v1360 = vpack.c.b16 %v976, %v972
    %v1361 = vpack.c.b16 %v977, %v973
    %v1362 = vpack.c.b16 %v978, %v974
    %v1363 = vpack.c.b16 %v979, %v975
    %v1364 = vpack.c.b16 %v984, %v980
    %v1365 = vpack.c.b16 %v985, %v981
    %v1366 = vpack.c.b16 %v986, %v982
    %v1367 = vpack.c.b16 %v987, %v983
    %v1368 = vpack.c.b16 %v992, %v988
    %v1369 = vpack.c.b16 %v993, %v989
    %v1370 = vpack.c.b16 %v994, %v990
    %v1371 = vpack.c.b16 %v995, %v991
    %v1372 = vpack.c.b16 %v1000, %v996
    %v1373 = vpack.c.b16 %v1001, %v997
    %v1374 = vpack.c.b16 %v1002, %v998
    %v1375 = vpack.c.b16 %v1003, %v999
    %v1376 = vpack.c.b16 %v1008, %v1004
    %v1377 = vpack.c.b16 %v1009, %v1005
    %v1378 = vpack.c.b16 %v1010, %v1006
    %v1379 = vpack.c.b16 %v1011, %v1007
    %v1380 = vpack.c.b16 %v1016, %v1012
    %v1381 = vpack.c.b16 %v1017, %v1013
    %v1382 = vpack.c.b16 %v1018, %v1014
    %v1383 = vpack.c.b16 %v1019, %v1015
    %v1384 = vpack.c.b16 %v1024, %v1020
    %v1385 = vpack.c.b16 %v1025, %v1021
    %v1386 = vpack.c.b16 %v1026, %v1022
    %v1387 = vpack.c.b16 %v1027, %v1023
    %v1388 = vpack.c.b16 %v1032, %v1028
    %v1389 = vpack.c.b16 %v1033, %v1029
    %v1390 = vpack.c.b16 %v1034, %v1030
    %v1391 = vpack.c.b16 %v1035, %v1031
    %v1392 = vpack.c.b16 %v1040, %v1036
    %v1393 = vpack.c.b16 %v1041, %v1037
    %v1394 = vpack.c.b16 %v1042, %v1038
    %v1395 = vpack.c.b16 %v1043, %v1039
    %v1396 = vpack.c.b16 %v1048, %v1044
    %v1397 = vpack.c.b16 %v1049, %v1045
    %v1398 = vpack.c.b16 %v1050, %v1046
    %v1399 = vpack.c.b16 %v1051, %v1047
    %v1400 = vpack.c.b16 %v1056, %v1052
    %v1401 = vpack.c.b16 %v1057, %v1053
    %v1402 = vpack.c.b16 %v1058, %v1054
    %v1403 = vpack.c.b16 %v1059, %v1055
    %v1404 = vpack.c.b16 %v1064, %v1060
    %v1405 = vpack.c.b16 %v1065, %v1061
    %v1406 = vpack.c.b16 %v1066, %v1062
    %v1407 = vpack.c.b16 %v1067, %v1063
    %v1408 = vpack.c.b16 %v1072, %v1068
    %v1409 = vpack.c.b16 %v1073, %v1069
    %v1410 = vpack.c.b16 %v1074, %v1070
    %v1411 = vpack.c.b16 %v1075, %v1071
    %v1412 = vpack.c.b16 %v1080, %v1076
    %v1413 = vpack.c.b16 %v1081, %v1077
    %v1414 = vpack.c.b16 %v1082, %v1078
    %v1415 = vpack.c.b16 %v1083, %v1079
    %v1416 = vpack.c.b16 %v1088, %v1084
    %v1417 = vpack.c.b16 %v1089, %v1085
    %v1418 = vpack.c.b16 %v1090, %v1086
    %v1419 = vpack.c.b16 %v1091, %v1087
    %v1420 = vpack.c.b16 %v1096, %v1092
    %v1421 = vpack.c.b16 %v1097, %v1093
    %v1422 = vpack.c.b16 %v1098, %v1094
    %v1423 = vpack.c.b16 %v1099, %v1095
    %v1424 = vpack.c.b16 %v1104, %v1100
    %v1425 = vpack.c.b16 %v1105, %v1101
    %v1426 = vpack.c.b16 %v1106, %v1102
    %v1427 = vpack.c.b16 %v1107, %v1103
    %v1428 = vpack.c.b16 %v1112, %v1108
    %v1429 = vpack.c.b16 %v1113, %v1109
    %v1430 = vpack.c.b16 %v1114, %v1110
    %v1431 = vpack.c.b16 %v1115, %v1111
    %v1432 = vpack.c.b16 %v1120, %v1116
    %v1433 = vpack.c.b16 %v1121, %v1117
    %v1434 = vpack.c.b16 %v1122, %v1118
    %v1435 = vpack.c.b16 %v1123, %v1119
    %v1436 = vpack.c.b16 %v1128, %v1124
    %v1437 = vpack.c.b16 %v1129, %v1125
    %v1438 = vpack.c.b16 %v1130, %v1126
    %v1439 = vpack.c.b16 %v1131, %v1127
    %v1440 = vpack.c.b16 %v1136, %v1132
    %v1441 = vpack.c.b16 %v1137, %v1133
    %v1442 = vpack.c.b16 %v1138, %v1134
    %v1443 = vpack.c.b16 %v1139, %v1135
    %v1444 = vpack.c.b16 %v1144, %v1140
    %v1445 = vpack.c.b16 %v1145, %v1141
    %v1446 = vpack.c.b16 %v1146, %v1142
    %v1447 = vpack.c.b16 %v1147, %v1143
    %v1448 = vpack.c.b16 %v1152, %v1148
    %v1449 = vpack.c.b16 %v1153, %v1149
    %v1450 = vpack.c.b16 %v1154, %v1150
    %v1451 = vpack.c.b16 %v1155, %v1151
    %v1452 = vpack.c.b16 %v1160, %v1156
    %v1453 = vpack.c.b16 %v1161, %v1157
    %v1454 = vpack.c.b16 %v1162, %v1158
    %v1455 = vpack.c.b16 %v1163, %v1159
    %v1456 = vpack.c.b16 %v1168, %v1164
    %v1457 = vpack.c.b16 %v1169, %v1165
    %v1458 = vpack.c.b16 %v1170, %v1166
    %v1459 = vpack.c.b16 %v1171, %v1167
    %v1460 = vpack.c.b16 %v1176, %v1172
    %v1461 = vpack.c.b16 %v1177, %v1173
    %v1462 = vpack.c.b16 %v1178, %v1174
    %v1463 = vpack.c.b16 %v1179, %v1175
    %v1464 = vpack.c.b16 %v1184, %v1180
    %v1465 = vpack.c.b16 %v1185, %v1181
    %v1466 = vpack.c.b16 %v1186, %v1182
    %v1467 = vpack.c.b16 %v1187, %v1183
    %v1468 = vpack.c.b16 %v1192, %v1188
    %v1469 = vpack.c.b16 %v1193, %v1189
    %v1470 = vpack.c.b16 %v1194, %v1190
    %v1471 = vpack.c.b16 %v1195, %v1191
    %v1472 = vpack.c.b16 %v1200, %v1196
    %v1473 = vpack.c.b16 %v1201, %v1197
    %v1474 = vpack.c.b16 %v1202, %v1198
    %v1475 = vpack.c.b16 %v1203, %v1199
    %v1476 = vpack.c.b16 %v1208, %v1204
    %v1477 = vpack.c.b16 %v1209, %v1205
    %v1478 = vpack.c.b16 %v1210, %v1206
    %v1479 = vpack.c.b16 %v1211, %v1207
    %v1480 = vpack.c.b16 %v1216, %v1212
    %v1481 = vpack.c.b16 %v1217, %v1213
    %v1482 = vpack.c.b16 %v1218, %v1214
    %v1483 = vpack.c.b16 %v1219, %v1215
    %v1484 = vpack.c.b16 %v1224, %v1220
    %v1485 = vpack.c.b16 %v1225, %v1221
    %v1486 = vpack.c.b16 %v1226, %v1222
    %v1487 = vpack.c.b16 %v1227, %v1223
    %v1488 = vpack.c.b16 %v1232, %v1228
    %v1489 = vpack.c.b16 %v1233, %v1229
    %v1490 = vpack.c.b16 %v1234, %v1230
    %v1491 = vpack.c.b16 %v1235, %v1231
    %v1492 = vpack.c.b16 %v1240, %v1236
    %v1493 = vpack.c.b16 %v1241, %v1237
    %v1494 = vpack.c.b16 %v1242, %v1238
    %v1495 = vpack.c.b16 %v1243, %v1239
    %v1496 = vpack.c.b16 %v1248, %v1244
    %v1497 = vpack.c.b16 %v1249, %v1245
    %v1498 = vpack.c.b16 %v1250, %v1246
    %v1499 = vpack.c.b16 %v1251, %v1247
    %v1500 = vpack.c.b16 %v1256, %v1252
    %v1501 = vpack.c.b16 %v1257, %v1253
    %v1502 = vpack.c.b16 %v1258, %v1254
    %v1503 = vpack.c.b16 %v1259, %v1255
    %v1504 = vpack.c.b16 %v1264, %v1260
    %v1505 = vpack.c.b16 %v1265, %v1261
    %v1506 = vpack.c.b16 %v1266, %v1262
    %v1507 = vpack.c.b16 %v1267, %v1263
    %v1508 = vpack.c.b16 %v1272, %v1268
    %v1509 = vpack.c.b16 %v1273, %v1269
    %v1510 = vpack.c.b16 %v1274, %v1270
    %v1511 = vpack.c.b16 %v1275, %v1271
    %v1512 = vpack.c.b16 %v1280, %v1276
    %v1513 = vpack.c.b16 %v1281, %v1277
    %v1514 = vpack.c.b16 %v1282, %v1278
    %v1515 = vpack.c.b16 %v1283, %v1279
    %v1516 = vpack.c.b16 %v1288, %v1284
    %v1517 = vpack.c.b16 %v1289, %v1285
    %v1518 = vpack.c.b16 %v1290, %v1286
    %v1519 = vpack.c.b16 %v1291, %v1287
    %v1520 = vpack.c.b16 %v1296, %v1292
    %v1521 = vpack.c.b16 %v1297, %v1293
    %v1522 = vpack.c.b16 %v1298, %v1294
    %v1523 = vpack.c.b16 %v1299, %v1295
    %1748 = vmatpush.bf16.msra.mxu0 %v1328
    %1749 = vmatpush.bf16.msra.mxu0 %v1324
    %1750 = vmatpush.bf16.msra.mxu0 %v1320
    %1751 = vmatpush.bf16.msra.mxu0 %v1316
    %1752 = vmatpush.bf16.msra.mxu0 %v1312
    %1753 = vmatpush.bf16.msra.mxu0 %v1308
    %1754 = vmatpush.bf16.msra.mxu0 %v1304
    %1755 = vmatpush.bf16.msra.mxu0 %v1300
    %1756 = vmatmul.bf16.gmra.mxu0 %v516
    %v1757 = vpop.f32.mrf.mxu0
    %v1758 = vadd.f32 %v332, %v1757
    %v1759 = vpop.f32.mrf.mxu0
    %v1760 = vadd.f32 %v332, %v1759
    %1761 = vmatmul.bf16.gmra.mxu0 %v523
    %v1762 = vpop.f32.mrf.mxu0
    %v1763 = vadd.f32 %v332, %v1762
    %v1764 = vpop.f32.mrf.mxu0
    %v1765 = vadd.f32 %v332, %v1764
    %1766 = vmatmul.bf16.gmra.mxu0 %v530
    %v1767 = vpop.f32.mrf.mxu0
    %v1768 = vadd.f32 %v332, %v1767
    %v1769 = vpop.f32.mrf.mxu0
    %v1770 = vadd.f32 %v332, %v1769
    %1771 = vmatmul.bf16.gmra.mxu0 %v537
    %v1772 = vpop.f32.mrf.mxu0
    %v1773 = vadd.f32 %v332, %v1772
    %v1774 = vpop.f32.mrf.mxu0
    %v1775 = vadd.f32 %v332, %v1774
    %1776 = vmatmul.bf16.gmra.mxu0 %v544
    %v1777 = vpop.f32.mrf.mxu0
    %v1778 = vadd.f32 %v332, %v1777
    %v1779 = vpop.f32.mrf.mxu0
    %v1780 = vadd.f32 %v332, %v1779
    %1781 = vmatmul.bf16.gmra.mxu0 %v551
    %v1782 = vpop.f32.mrf.mxu0
    %v1783 = vadd.f32 %v332, %v1782
    %v1784 = vpop.f32.mrf.mxu0
    %v1785 = vadd.f32 %v332, %v1784
    %1786 = vmatmul.bf16.gmra.mxu0 %v558
    %v1787 = vpop.f32.mrf.mxu0
    %v1788 = vadd.f32 %v332, %v1787
    %v1789 = vpop.f32.mrf.mxu0
    %v1790 = vadd.f32 %v332, %v1789
    %1791 = vmatmul.bf16.gmra.mxu0 %v565
    %v1792 = vpop.f32.mrf.mxu0
    %v1793 = vadd.f32 %v332, %v1792
    %v1794 = vpop.f32.mrf.mxu0
    %v1795 = vadd.f32 %v332, %v1794
    %1796 = vdwg.mxu0
    %1797 = vmatpush.bf16.msra.mxu0 %v1360
    %1798 = vmatpush.bf16.msra.mxu0 %v1356
    %1799 = vmatpush.bf16.msra.mxu0 %v1352
    %1800 = vmatpush.bf16.msra.mxu0 %v1348
    %1801 = vmatpush.bf16.msra.mxu0 %v1344
    %1802 = vmatpush.bf16.msra.mxu0 %v1340
    %1803 = vmatpush.bf16.msra.mxu0 %v1336
    %1804 = vmatpush.bf16.msra.mxu0 %v1332
    %1805 = vmatmul.bf16.gmra.mxu0 %v517
    %v1806 = vpop.f32.mrf.mxu0
    %v1807 = vadd.f32 %v1758, %v1806
    %v1808 = vpop.f32.mrf.mxu0
    %v1809 = vadd.f32 %v1760, %v1808
    %1810 = vmatmul.bf16.gmra.mxu0 %v524
    %v1811 = vpop.f32.mrf.mxu0
    %v1812 = vadd.f32 %v1763, %v1811
    %v1813 = vpop.f32.mrf.mxu0
    %v1814 = vadd.f32 %v1765, %v1813
    %1815 = vmatmul.bf16.gmra.mxu0 %v531
    %v1816 = vpop.f32.mrf.mxu0
    %v1817 = vadd.f32 %v1768, %v1816
    %v1818 = vpop.f32.mrf.mxu0
    %v1819 = vadd.f32 %v1770, %v1818
    %1820 = vmatmul.bf16.gmra.mxu0 %v538
    %v1821 = vpop.f32.mrf.mxu0
    %v1822 = vadd.f32 %v1773, %v1821
    %v1823 = vpop.f32.mrf.mxu0
    %v1824 = vadd.f32 %v1775, %v1823
    %1825 = vmatmul.bf16.gmra.mxu0 %v545
    %v1826 = vpop.f32.mrf.mxu0
    %v1827 = vadd.f32 %v1778, %v1826
    %v1828 = vpop.f32.mrf.mxu0
    %v1829 = vadd.f32 %v1780, %v1828
    %1830 = vmatmul.bf16.gmra.mxu0 %v552
    %v1831 = vpop.f32.mrf.mxu0
    %v1832 = vadd.f32 %v1783, %v1831
    %v1833 = vpop.f32.mrf.mxu0
    %v1834 = vadd.f32 %v1785, %v1833
    %1835 = vmatmul.bf16.gmra.mxu0 %v559
    %v1836 = vpop.f32.mrf.mxu0
    %v1837 = vadd.f32 %v1788, %v1836
    %v1838 = vpop.f32.mrf.mxu0
    %v1839 = vadd.f32 %v1790, %v1838
    %1840 = vmatmul.bf16.gmra.mxu0 %v566
    %v1841 = vpop.f32.mrf.mxu0
    %v1842 = vadd.f32 %v1793, %v1841
    %v1843 = vpop.f32.mrf.mxu0
    %v1844 = vadd.f32 %v1795, %v1843
    %1845 = vdwg.mxu0
    %1846 = vmatpush.bf16.msra.mxu0 %v1392
    %1847 = vmatpush.bf16.msra.mxu0 %v1388
    %1848 = vmatpush.bf16.msra.mxu0 %v1384
    %1849 = vmatpush.bf16.msra.mxu0 %v1380
    %1850 = vmatpush.bf16.msra.mxu0 %v1376
    %1851 = vmatpush.bf16.msra.mxu0 %v1372
    %1852 = vmatpush.bf16.msra.mxu0 %v1368
    %1853 = vmatpush.bf16.msra.mxu0 %v1364
    %1854 = vmatmul.bf16.gmra.mxu0 %v518
    %v1855 = vpop.f32.mrf.mxu0
    %v1856 = vadd.f32 %v1807, %v1855
    %v1857 = vpop.f32.mrf.mxu0
    %v1858 = vadd.f32 %v1809, %v1857
    %1859 = vmatmul.bf16.gmra.mxu0 %v525
    %v1860 = vpop.f32.mrf.mxu0
    %v1861 = vadd.f32 %v1812, %v1860
    %v1862 = vpop.f32.mrf.mxu0
    %v1863 = vadd.f32 %v1814, %v1862
    %1864 = vmatmul.bf16.gmra.mxu0 %v532
    %v1865 = vpop.f32.mrf.mxu0
    %v1866 = vadd.f32 %v1817, %v1865
    %v1867 = vpop.f32.mrf.mxu0
    %v1868 = vadd.f32 %v1819, %v1867
    %1869 = vmatmul.bf16.gmra.mxu0 %v539
    %v1870 = vpop.f32.mrf.mxu0
    %v1871 = vadd.f32 %v1822, %v1870
    %v1872 = vpop.f32.mrf.mxu0
    %v1873 = vadd.f32 %v1824, %v1872
    %1874 = vmatmul.bf16.gmra.mxu0 %v546
    %v1875 = vpop.f32.mrf.mxu0
    %v1876 = vadd.f32 %v1827, %v1875
    %v1877 = vpop.f32.mrf.mxu0
    %v1878 = vadd.f32 %v1829, %v1877
    %1879 = vmatmul.bf16.gmra.mxu0 %v553
    %v1880 = vpop.f32.mrf.mxu0
    %v1881 = vadd.f32 %v1832, %v1880
    %v1882 = vpop.f32.mrf.mxu0
    %v1883 = vadd.f32 %v1834, %v1882
    %1884 = vmatmul.bf16.gmra.mxu0 %v560
    %v1885 = vpop.f32.mrf.mxu0
    %v1886 = vadd.f32 %v1837, %v1885
    %v1887 = vpop.f32.mrf.mxu0
    %v1888 = vadd.f32 %v1839, %v1887
    %1889 = vmatmul.bf16.gmra.mxu0 %v567
    %v1890 = vpop.f32.mrf.mxu0
    %v1891 = vadd.f32 %v1842, %v1890
    %v1892 = vpop.f32.mrf.mxu0
    %v1893 = vadd.f32 %v1844, %v1892
    %1894 = vdwg.mxu0
    %1895 = vmatpush.bf16.msra.mxu0 %v1424
    %1896 = vmatpush.bf16.msra.mxu0 %v1420
    %1897 = vmatpush.bf16.msra.mxu0 %v1416
    %1898 = vmatpush.bf16.msra.mxu0 %v1412
    %1899 = vmatpush.bf16.msra.mxu0 %v1408
    %1900 = vmatpush.bf16.msra.mxu0 %v1404
    %1901 = vmatpush.bf16.msra.mxu0 %v1400
    %1902 = vmatpush.bf16.msra.mxu0 %v1396
    %1903 = vmatmul.bf16.gmra.mxu0 %v519
    %v1904 = vpop.f32.mrf.mxu0
    %v1905 = vadd.f32 %v1856, %v1904
    %v1906 = vpop.f32.mrf.mxu0
    %v1907 = vadd.f32 %v1858, %v1906
    %1908 = vmatmul.bf16.gmra.mxu0 %v526
    %v1909 = vpop.f32.mrf.mxu0
    %v1910 = vadd.f32 %v1861, %v1909
    %v1911 = vpop.f32.mrf.mxu0
    %v1912 = vadd.f32 %v1863, %v1911
    %1913 = vmatmul.bf16.gmra.mxu0 %v533
    %v1914 = vpop.f32.mrf.mxu0
    %v1915 = vadd.f32 %v1866, %v1914
    %v1916 = vpop.f32.mrf.mxu0
    %v1917 = vadd.f32 %v1868, %v1916
    %1918 = vmatmul.bf16.gmra.mxu0 %v540
    %v1919 = vpop.f32.mrf.mxu0
    %v1920 = vadd.f32 %v1871, %v1919
    %v1921 = vpop.f32.mrf.mxu0
    %v1922 = vadd.f32 %v1873, %v1921
    %1923 = vmatmul.bf16.gmra.mxu0 %v547
    %v1924 = vpop.f32.mrf.mxu0
    %v1925 = vadd.f32 %v1876, %v1924
    %v1926 = vpop.f32.mrf.mxu0
    %v1927 = vadd.f32 %v1878, %v1926
    %1928 = vmatmul.bf16.gmra.mxu0 %v554
    %v1929 = vpop.f32.mrf.mxu0
    %v1930 = vadd.f32 %v1881, %v1929
    %v1931 = vpop.f32.mrf.mxu0
    %v1932 = vadd.f32 %v1883, %v1931
    %1933 = vmatmul.bf16.gmra.mxu0 %v561
    %v1934 = vpop.f32.mrf.mxu0
    %v1935 = vadd.f32 %v1886, %v1934
    %v1936 = vpop.f32.mrf.mxu0
    %v1937 = vadd.f32 %v1888, %v1936
    %1938 = vmatmul.bf16.gmra.mxu0 %v568
    %v1939 = vpop.f32.mrf.mxu0
    %v1940 = vadd.f32 %v1891, %v1939
    %v1941 = vpop.f32.mrf.mxu0
    %v1942 = vadd.f32 %v1893, %v1941
    %1943 = vdwg.mxu0
    %1944 = vmatpush.bf16.msra.mxu0 %v1456
    %1945 = vmatpush.bf16.msra.mxu0 %v1452
    %1946 = vmatpush.bf16.msra.mxu0 %v1448
    %1947 = vmatpush.bf16.msra.mxu0 %v1444
    %1948 = vmatpush.bf16.msra.mxu0 %v1440
    %1949 = vmatpush.bf16.msra.mxu0 %v1436
    %1950 = vmatpush.bf16.msra.mxu0 %v1432
    %1951 = vmatpush.bf16.msra.mxu0 %v1428
    %1952 = vmatmul.bf16.gmra.mxu0 %v520
    %v1953 = vpop.f32.mrf.mxu0
    %v1954 = vadd.f32 %v1905, %v1953
    %v1955 = vpop.f32.mrf.mxu0
    %v1956 = vadd.f32 %v1907, %v1955
    %1957 = vmatmul.bf16.gmra.mxu0 %v527
    %v1958 = vpop.f32.mrf.mxu0
    %v1959 = vadd.f32 %v1910, %v1958
    %v1960 = vpop.f32.mrf.mxu0
    %v1961 = vadd.f32 %v1912, %v1960
    %1962 = vmatmul.bf16.gmra.mxu0 %v534
    %v1963 = vpop.f32.mrf.mxu0
    %v1964 = vadd.f32 %v1915, %v1963
    %v1965 = vpop.f32.mrf.mxu0
    %v1966 = vadd.f32 %v1917, %v1965
    %1967 = vmatmul.bf16.gmra.mxu0 %v541
    %v1968 = vpop.f32.mrf.mxu0
    %v1969 = vadd.f32 %v1920, %v1968
    %v1970 = vpop.f32.mrf.mxu0
    %v1971 = vadd.f32 %v1922, %v1970
    %1972 = vmatmul.bf16.gmra.mxu0 %v548
    %v1973 = vpop.f32.mrf.mxu0
    %v1974 = vadd.f32 %v1925, %v1973
    %v1975 = vpop.f32.mrf.mxu0
    %v1976 = vadd.f32 %v1927, %v1975
    %1977 = vmatmul.bf16.gmra.mxu0 %v555
    %v1978 = vpop.f32.mrf.mxu0
    %v1979 = vadd.f32 %v1930, %v1978
    %v1980 = vpop.f32.mrf.mxu0
    %v1981 = vadd.f32 %v1932, %v1980
    %1982 = vmatmul.bf16.gmra.mxu0 %v562
    %v1983 = vpop.f32.mrf.mxu0
    %v1984 = vadd.f32 %v1935, %v1983
    %v1985 = vpop.f32.mrf.mxu0
    %v1986 = vadd.f32 %v1937, %v1985
    %1987 = vmatmul.bf16.gmra.mxu0 %v569
    %v1988 = vpop.f32.mrf.mxu0
    %v1989 = vadd.f32 %v1940, %v1988
    %v1990 = vpop.f32.mrf.mxu0
    %v1991 = vadd.f32 %v1942, %v1990
    %1992 = vdwg.mxu0
    %1993 = vmatpush.bf16.msra.mxu0 %v1488
    %1994 = vmatpush.bf16.msra.mxu0 %v1484
    %1995 = vmatpush.bf16.msra.mxu0 %v1480
    %1996 = vmatpush.bf16.msra.mxu0 %v1476
    %1997 = vmatpush.bf16.msra.mxu0 %v1472
    %1998 = vmatpush.bf16.msra.mxu0 %v1468
    %1999 = vmatpush.bf16.msra.mxu0 %v1464
    %2000 = vmatpush.bf16.msra.mxu0 %v1460
    %2001 = vmatmul.bf16.gmra.mxu0 %v521
    %v2002 = vpop.f32.mrf.mxu0
    %v2003 = vadd.f32 %v1954, %v2002
    %v2004 = vpop.f32.mrf.mxu0
    %v2005 = vadd.f32 %v1956, %v2004
    %2006 = vmatmul.bf16.gmra.mxu0 %v528
    %v2007 = vpop.f32.mrf.mxu0
    %v2008 = vadd.f32 %v1959, %v2007
    %v2009 = vpop.f32.mrf.mxu0
    %v2010 = vadd.f32 %v1961, %v2009
    %2011 = vmatmul.bf16.gmra.mxu0 %v535
    %v2012 = vpop.f32.mrf.mxu0
    %v2013 = vadd.f32 %v1964, %v2012
    %v2014 = vpop.f32.mrf.mxu0
    %v2015 = vadd.f32 %v1966, %v2014
    %2016 = vmatmul.bf16.gmra.mxu0 %v542
    %v2017 = vpop.f32.mrf.mxu0
    %v2018 = vadd.f32 %v1969, %v2017
    %v2019 = vpop.f32.mrf.mxu0
    %v2020 = vadd.f32 %v1971, %v2019
    %2021 = vmatmul.bf16.gmra.mxu0 %v549
    %v2022 = vpop.f32.mrf.mxu0
    %v2023 = vadd.f32 %v1974, %v2022
    %v2024 = vpop.f32.mrf.mxu0
    %v2025 = vadd.f32 %v1976, %v2024
    %2026 = vmatmul.bf16.gmra.mxu0 %v556
    %v2027 = vpop.f32.mrf.mxu0
    %v2028 = vadd.f32 %v1979, %v2027
    %v2029 = vpop.f32.mrf.mxu0
    %v2030 = vadd.f32 %v1981, %v2029
    %2031 = vmatmul.bf16.gmra.mxu0 %v563
    %v2032 = vpop.f32.mrf.mxu0
    %v2033 = vadd.f32 %v1984, %v2032
    %v2034 = vpop.f32.mrf.mxu0
    %v2035 = vadd.f32 %v1986, %v2034
    %2036 = vmatmul.bf16.gmra.mxu0 %v570
    %v2037 = vpop.f32.mrf.mxu0
    %v2038 = vadd.f32 %v1989, %v2037
    %v2039 = vpop.f32.mrf.mxu0
    %v2040 = vadd.f32 %v1991, %v2039
    %2041 = vdwg.mxu0
    %2042 = vmatpush.bf16.msra.mxu0 %v1520
    %2043 = vmatpush.bf16.msra.mxu0 %v1516
    %2044 = vmatpush.bf16.msra.mxu0 %v1512
    %2045 = vmatpush.bf16.msra.mxu0 %v1508
    %2046 = vmatpush.bf16.msra.mxu0 %v1504
    %2047 = vmatpush.bf16.msra.mxu0 %v1500
    %2048 = vmatpush.bf16.msra.mxu0 %v1496
    %2049 = vmatpush.bf16.msra.mxu0 %v1492
    %2050 = vmatmul.bf16.gmra.mxu0 %v522
    %v2051 = vpop.f32.mrf.mxu0
    %v2052 = vadd.f32 %v2003, %v2051
    %v2053 = vpop.f32.mrf.mxu0
    %v2054 = vadd.f32 %v2005, %v2053
    %2055 = vmatmul.bf16.gmra.mxu0 %v529
    %v2056 = vpop.f32.mrf.mxu0
    %v2057 = vadd.f32 %v2008, %v2056
    %v2058 = vpop.f32.mrf.mxu0
    %v2059 = vadd.f32 %v2010, %v2058
    %2060 = vmatmul.bf16.gmra.mxu0 %v536
    %v2061 = vpop.f32.mrf.mxu0
    %v2062 = vadd.f32 %v2013, %v2061
    %v2063 = vpop.f32.mrf.mxu0
    %v2064 = vadd.f32 %v2015, %v2063
    %2065 = vmatmul.bf16.gmra.mxu0 %v543
    %v2066 = vpop.f32.mrf.mxu0
    %v2067 = vadd.f32 %v2018, %v2066
    %v2068 = vpop.f32.mrf.mxu0
    %v2069 = vadd.f32 %v2020, %v2068
    %2070 = vmatmul.bf16.gmra.mxu0 %v550
    %v2071 = vpop.f32.mrf.mxu0
    %v2072 = vadd.f32 %v2023, %v2071
    %v2073 = vpop.f32.mrf.mxu0
    %v2074 = vadd.f32 %v2025, %v2073
    %2075 = vmatmul.bf16.gmra.mxu0 %v557
    %v2076 = vpop.f32.mrf.mxu0
    %v2077 = vadd.f32 %v2028, %v2076
    %v2078 = vpop.f32.mrf.mxu0
    %v2079 = vadd.f32 %v2030, %v2078
    %2080 = vmatmul.bf16.gmra.mxu0 %v564
    %v2081 = vpop.f32.mrf.mxu0
    %v2082 = vadd.f32 %v2033, %v2081
    %v2083 = vpop.f32.mrf.mxu0
    %v2084 = vadd.f32 %v2035, %v2083
    %2085 = vmatmul.bf16.gmra.mxu0 %v571
    %v2086 = vpop.f32.mrf.mxu0
    %v2087 = vadd.f32 %v2038, %v2086
    %v2088 = vpop.f32.mrf.mxu0
    %v2089 = vadd.f32 %v2040, %v2088
    %2090 = vdwg.mxu0
    %2091 = vmatpush.bf16.msra.mxu0 %v1329
    %2092 = vmatpush.bf16.msra.mxu0 %v1325
    %2093 = vmatpush.bf16.msra.mxu0 %v1321
    %2094 = vmatpush.bf16.msra.mxu0 %v1317
    %2095 = vmatpush.bf16.msra.mxu0 %v1313
    %2096 = vmatpush.bf16.msra.mxu0 %v1309
    %2097 = vmatpush.bf16.msra.mxu0 %v1305
    %2098 = vmatpush.bf16.msra.mxu0 %v1301
    %2099 = vmatmul.bf16.gmra.mxu0 %v516
    %v2100 = vpop.f32.mrf.mxu0
    %v2101 = vadd.f32 %v333, %v2100
    %v2102 = vpop.f32.mrf.mxu0
    %v2103 = vadd.f32 %v333, %v2102
    %2104 = vmatmul.bf16.gmra.mxu0 %v523
    %v2105 = vpop.f32.mrf.mxu0
    %v2106 = vadd.f32 %v333, %v2105
    %v2107 = vpop.f32.mrf.mxu0
    %v2108 = vadd.f32 %v333, %v2107
    %2109 = vmatmul.bf16.gmra.mxu0 %v530
    %v2110 = vpop.f32.mrf.mxu0
    %v2111 = vadd.f32 %v333, %v2110
    %v2112 = vpop.f32.mrf.mxu0
    %v2113 = vadd.f32 %v333, %v2112
    %2114 = vmatmul.bf16.gmra.mxu0 %v537
    %v2115 = vpop.f32.mrf.mxu0
    %v2116 = vadd.f32 %v333, %v2115
    %v2117 = vpop.f32.mrf.mxu0
    %v2118 = vadd.f32 %v333, %v2117
    %2119 = vmatmul.bf16.gmra.mxu0 %v544
    %v2120 = vpop.f32.mrf.mxu0
    %v2121 = vadd.f32 %v333, %v2120
    %v2122 = vpop.f32.mrf.mxu0
    %v2123 = vadd.f32 %v333, %v2122
    %2124 = vmatmul.bf16.gmra.mxu0 %v551
    %v2125 = vpop.f32.mrf.mxu0
    %v2126 = vadd.f32 %v333, %v2125
    %v2127 = vpop.f32.mrf.mxu0
    %v2128 = vadd.f32 %v333, %v2127
    %2129 = vmatmul.bf16.gmra.mxu0 %v558
    %v2130 = vpop.f32.mrf.mxu0
    %v2131 = vadd.f32 %v333, %v2130
    %v2132 = vpop.f32.mrf.mxu0
    %v2133 = vadd.f32 %v333, %v2132
    %2134 = vmatmul.bf16.gmra.mxu0 %v565
    %v2135 = vpop.f32.mrf.mxu0
    %v2136 = vadd.f32 %v333, %v2135
    %v2137 = vpop.f32.mrf.mxu0
    %v2138 = vadd.f32 %v333, %v2137
    %2139 = vdwg.mxu0
    %2140 = vmatpush.bf16.msra.mxu0 %v1361
    %2141 = vmatpush.bf16.msra.mxu0 %v1357
    %2142 = vmatpush.bf16.msra.mxu0 %v1353
    %2143 = vmatpush.bf16.msra.mxu0 %v1349
    %2144 = vmatpush.bf16.msra.mxu0 %v1345
    %2145 = vmatpush.bf16.msra.mxu0 %v1341
    %2146 = vmatpush.bf16.msra.mxu0 %v1337
    %2147 = vmatpush.bf16.msra.mxu0 %v1333
    %2148 = vmatmul.bf16.gmra.mxu0 %v517
    %v2149 = vpop.f32.mrf.mxu0
    %v2150 = vadd.f32 %v2101, %v2149
    %v2151 = vpop.f32.mrf.mxu0
    %v2152 = vadd.f32 %v2103, %v2151
    %2153 = vmatmul.bf16.gmra.mxu0 %v524
    %v2154 = vpop.f32.mrf.mxu0
    %v2155 = vadd.f32 %v2106, %v2154
    %v2156 = vpop.f32.mrf.mxu0
    %v2157 = vadd.f32 %v2108, %v2156
    %2158 = vmatmul.bf16.gmra.mxu0 %v531
    %v2159 = vpop.f32.mrf.mxu0
    %v2160 = vadd.f32 %v2111, %v2159
    %v2161 = vpop.f32.mrf.mxu0
    %v2162 = vadd.f32 %v2113, %v2161
    %2163 = vmatmul.bf16.gmra.mxu0 %v538
    %v2164 = vpop.f32.mrf.mxu0
    %v2165 = vadd.f32 %v2116, %v2164
    %v2166 = vpop.f32.mrf.mxu0
    %v2167 = vadd.f32 %v2118, %v2166
    %2168 = vmatmul.bf16.gmra.mxu0 %v545
    %v2169 = vpop.f32.mrf.mxu0
    %v2170 = vadd.f32 %v2121, %v2169
    %v2171 = vpop.f32.mrf.mxu0
    %v2172 = vadd.f32 %v2123, %v2171
    %2173 = vmatmul.bf16.gmra.mxu0 %v552
    %v2174 = vpop.f32.mrf.mxu0
    %v2175 = vadd.f32 %v2126, %v2174
    %v2176 = vpop.f32.mrf.mxu0
    %v2177 = vadd.f32 %v2128, %v2176
    %2178 = vmatmul.bf16.gmra.mxu0 %v559
    %v2179 = vpop.f32.mrf.mxu0
    %v2180 = vadd.f32 %v2131, %v2179
    %v2181 = vpop.f32.mrf.mxu0
    %v2182 = vadd.f32 %v2133, %v2181
    %2183 = vmatmul.bf16.gmra.mxu0 %v566
    %v2184 = vpop.f32.mrf.mxu0
    %v2185 = vadd.f32 %v2136, %v2184
    %v2186 = vpop.f32.mrf.mxu0
    %v2187 = vadd.f32 %v2138, %v2186
    %2188 = vdwg.mxu0
    %2189 = vmatpush.bf16.msra.mxu0 %v1393
    %2190 = vmatpush.bf16.msra.mxu0 %v1389
    %2191 = vmatpush.bf16.msra.mxu0 %v1385
    %2192 = vmatpush.bf16.msra.mxu0 %v1381
    %2193 = vmatpush.bf16.msra.mxu0 %v1377
    %2194 = vmatpush.bf16.msra.mxu0 %v1373
    %2195 = vmatpush.bf16.msra.mxu0 %v1369
    %2196 = vmatpush.bf16.msra.mxu0 %v1365
    %2197 = vmatmul.bf16.gmra.mxu0 %v518
    %v2198 = vpop.f32.mrf.mxu0
    %v2199 = vadd.f32 %v2150, %v2198
    %v2200 = vpop.f32.mrf.mxu0
    %v2201 = vadd.f32 %v2152, %v2200
    %2202 = vmatmul.bf16.gmra.mxu0 %v525
    %v2203 = vpop.f32.mrf.mxu0
    %v2204 = vadd.f32 %v2155, %v2203
    %v2205 = vpop.f32.mrf.mxu0
    %v2206 = vadd.f32 %v2157, %v2205
    %2207 = vmatmul.bf16.gmra.mxu0 %v532
    %v2208 = vpop.f32.mrf.mxu0
    %v2209 = vadd.f32 %v2160, %v2208
    %v2210 = vpop.f32.mrf.mxu0
    %v2211 = vadd.f32 %v2162, %v2210
    %2212 = vmatmul.bf16.gmra.mxu0 %v539
    %v2213 = vpop.f32.mrf.mxu0
    %v2214 = vadd.f32 %v2165, %v2213
    %v2215 = vpop.f32.mrf.mxu0
    %v2216 = vadd.f32 %v2167, %v2215
    %2217 = vmatmul.bf16.gmra.mxu0 %v546
    %v2218 = vpop.f32.mrf.mxu0
    %v2219 = vadd.f32 %v2170, %v2218
    %v2220 = vpop.f32.mrf.mxu0
    %v2221 = vadd.f32 %v2172, %v2220
    %2222 = vmatmul.bf16.gmra.mxu0 %v553
    %v2223 = vpop.f32.mrf.mxu0
    %v2224 = vadd.f32 %v2175, %v2223
    %v2225 = vpop.f32.mrf.mxu0
    %v2226 = vadd.f32 %v2177, %v2225
    %2227 = vmatmul.bf16.gmra.mxu0 %v560
    %v2228 = vpop.f32.mrf.mxu0
    %v2229 = vadd.f32 %v2180, %v2228
    %v2230 = vpop.f32.mrf.mxu0
    %v2231 = vadd.f32 %v2182, %v2230
    %2232 = vmatmul.bf16.gmra.mxu0 %v567
    %v2233 = vpop.f32.mrf.mxu0
    %v2234 = vadd.f32 %v2185, %v2233
    %v2235 = vpop.f32.mrf.mxu0
    %v2236 = vadd.f32 %v2187, %v2235
    %2237 = vdwg.mxu0
    %2238 = vmatpush.bf16.msra.mxu0 %v1425
    %2239 = vmatpush.bf16.msra.mxu0 %v1421
    %2240 = vmatpush.bf16.msra.mxu0 %v1417
    %2241 = vmatpush.bf16.msra.mxu0 %v1413
    %2242 = vmatpush.bf16.msra.mxu0 %v1409
    %2243 = vmatpush.bf16.msra.mxu0 %v1405
    %2244 = vmatpush.bf16.msra.mxu0 %v1401
    %2245 = vmatpush.bf16.msra.mxu0 %v1397
    %2246 = vmatmul.bf16.gmra.mxu0 %v519
    %v2247 = vpop.f32.mrf.mxu0
    %v2248 = vadd.f32 %v2199, %v2247
    %v2249 = vpop.f32.mrf.mxu0
    %v2250 = vadd.f32 %v2201, %v2249
    %2251 = vmatmul.bf16.gmra.mxu0 %v526
    %v2252 = vpop.f32.mrf.mxu0
    %v2253 = vadd.f32 %v2204, %v2252
    %v2254 = vpop.f32.mrf.mxu0
    %v2255 = vadd.f32 %v2206, %v2254
    %2256 = vmatmul.bf16.gmra.mxu0 %v533
    %v2257 = vpop.f32.mrf.mxu0
    %v2258 = vadd.f32 %v2209, %v2257
    %v2259 = vpop.f32.mrf.mxu0
    %v2260 = vadd.f32 %v2211, %v2259
    %2261 = vmatmul.bf16.gmra.mxu0 %v540
    %v2262 = vpop.f32.mrf.mxu0
    %v2263 = vadd.f32 %v2214, %v2262
    %v2264 = vpop.f32.mrf.mxu0
    %v2265 = vadd.f32 %v2216, %v2264
    %2266 = vmatmul.bf16.gmra.mxu0 %v547
    %v2267 = vpop.f32.mrf.mxu0
    %v2268 = vadd.f32 %v2219, %v2267
    %v2269 = vpop.f32.mrf.mxu0
    %v2270 = vadd.f32 %v2221, %v2269
    %2271 = vmatmul.bf16.gmra.mxu0 %v554
    %v2272 = vpop.f32.mrf.mxu0
    %v2273 = vadd.f32 %v2224, %v2272
    %v2274 = vpop.f32.mrf.mxu0
    %v2275 = vadd.f32 %v2226, %v2274
    %2276 = vmatmul.bf16.gmra.mxu0 %v561
    %v2277 = vpop.f32.mrf.mxu0
    %v2278 = vadd.f32 %v2229, %v2277
    %v2279 = vpop.f32.mrf.mxu0
    %v2280 = vadd.f32 %v2231, %v2279
    %2281 = vmatmul.bf16.gmra.mxu0 %v568
    %v2282 = vpop.f32.mrf.mxu0
    %v2283 = vadd.f32 %v2234, %v2282
    %v2284 = vpop.f32.mrf.mxu0
    %v2285 = vadd.f32 %v2236, %v2284
    %2286 = vdwg.mxu0
    %2287 = vmatpush.bf16.msra.mxu0 %v1457
    %2288 = vmatpush.bf16.msra.mxu0 %v1453
    %2289 = vmatpush.bf16.msra.mxu0 %v1449
    %2290 = vmatpush.bf16.msra.mxu0 %v1445
    %2291 = vmatpush.bf16.msra.mxu0 %v1441
    %2292 = vmatpush.bf16.msra.mxu0 %v1437
    %2293 = vmatpush.bf16.msra.mxu0 %v1433
    %2294 = vmatpush.bf16.msra.mxu0 %v1429
    %2295 = vmatmul.bf16.gmra.mxu0 %v520
    %v2296 = vpop.f32.mrf.mxu0
    %v2297 = vadd.f32 %v2248, %v2296
    %v2298 = vpop.f32.mrf.mxu0
    %v2299 = vadd.f32 %v2250, %v2298
    %2300 = vmatmul.bf16.gmra.mxu0 %v527
    %v2301 = vpop.f32.mrf.mxu0
    %v2302 = vadd.f32 %v2253, %v2301
    %v2303 = vpop.f32.mrf.mxu0
    %v2304 = vadd.f32 %v2255, %v2303
    %2305 = vmatmul.bf16.gmra.mxu0 %v534
    %v2306 = vpop.f32.mrf.mxu0
    %v2307 = vadd.f32 %v2258, %v2306
    %v2308 = vpop.f32.mrf.mxu0
    %v2309 = vadd.f32 %v2260, %v2308
    %2310 = vmatmul.bf16.gmra.mxu0 %v541
    %v2311 = vpop.f32.mrf.mxu0
    %v2312 = vadd.f32 %v2263, %v2311
    %v2313 = vpop.f32.mrf.mxu0
    %v2314 = vadd.f32 %v2265, %v2313
    %2315 = vmatmul.bf16.gmra.mxu0 %v548
    %v2316 = vpop.f32.mrf.mxu0
    %v2317 = vadd.f32 %v2268, %v2316
    %v2318 = vpop.f32.mrf.mxu0
    %v2319 = vadd.f32 %v2270, %v2318
    %2320 = vmatmul.bf16.gmra.mxu0 %v555
    %v2321 = vpop.f32.mrf.mxu0
    %v2322 = vadd.f32 %v2273, %v2321
    %v2323 = vpop.f32.mrf.mxu0
    %v2324 = vadd.f32 %v2275, %v2323
    %2325 = vmatmul.bf16.gmra.mxu0 %v562
    %v2326 = vpop.f32.mrf.mxu0
    %v2327 = vadd.f32 %v2278, %v2326
    %v2328 = vpop.f32.mrf.mxu0
    %v2329 = vadd.f32 %v2280, %v2328
    %2330 = vmatmul.bf16.gmra.mxu0 %v569
    %v2331 = vpop.f32.mrf.mxu0
    %v2332 = vadd.f32 %v2283, %v2331
    %v2333 = vpop.f32.mrf.mxu0
    %v2334 = vadd.f32 %v2285, %v2333
    %2335 = vdwg.mxu0
    %2336 = vmatpush.bf16.msra.mxu0 %v1489
    %2337 = vmatpush.bf16.msra.mxu0 %v1485
    %2338 = vmatpush.bf16.msra.mxu0 %v1481
    %2339 = vmatpush.bf16.msra.mxu0 %v1477
    %2340 = vmatpush.bf16.msra.mxu0 %v1473
    %2341 = vmatpush.bf16.msra.mxu0 %v1469
    %2342 = vmatpush.bf16.msra.mxu0 %v1465
    %2343 = vmatpush.bf16.msra.mxu0 %v1461
    %2344 = vmatmul.bf16.gmra.mxu0 %v521
    %v2345 = vpop.f32.mrf.mxu0
    %v2346 = vadd.f32 %v2297, %v2345
    %v2347 = vpop.f32.mrf.mxu0
    %v2348 = vadd.f32 %v2299, %v2347
    %2349 = vmatmul.bf16.gmra.mxu0 %v528
    %v2350 = vpop.f32.mrf.mxu0
    %v2351 = vadd.f32 %v2302, %v2350
    %v2352 = vpop.f32.mrf.mxu0
    %v2353 = vadd.f32 %v2304, %v2352
    %2354 = vmatmul.bf16.gmra.mxu0 %v535
    %v2355 = vpop.f32.mrf.mxu0
    %v2356 = vadd.f32 %v2307, %v2355
    %v2357 = vpop.f32.mrf.mxu0
    %v2358 = vadd.f32 %v2309, %v2357
    %2359 = vmatmul.bf16.gmra.mxu0 %v542
    %v2360 = vpop.f32.mrf.mxu0
    %v2361 = vadd.f32 %v2312, %v2360
    %v2362 = vpop.f32.mrf.mxu0
    %v2363 = vadd.f32 %v2314, %v2362
    %2364 = vmatmul.bf16.gmra.mxu0 %v549
    %v2365 = vpop.f32.mrf.mxu0
    %v2366 = vadd.f32 %v2317, %v2365
    %v2367 = vpop.f32.mrf.mxu0
    %v2368 = vadd.f32 %v2319, %v2367
    %2369 = vmatmul.bf16.gmra.mxu0 %v556
    %v2370 = vpop.f32.mrf.mxu0
    %v2371 = vadd.f32 %v2322, %v2370
    %v2372 = vpop.f32.mrf.mxu0
    %v2373 = vadd.f32 %v2324, %v2372
    %2374 = vmatmul.bf16.gmra.mxu0 %v563
    %v2375 = vpop.f32.mrf.mxu0
    %v2376 = vadd.f32 %v2327, %v2375
    %v2377 = vpop.f32.mrf.mxu0
    %v2378 = vadd.f32 %v2329, %v2377
    %2379 = vmatmul.bf16.gmra.mxu0 %v570
    %v2380 = vpop.f32.mrf.mxu0
    %v2381 = vadd.f32 %v2332, %v2380
    %v2382 = vpop.f32.mrf.mxu0
    %v2383 = vadd.f32 %v2334, %v2382
    %2384 = vdwg.mxu0
    %2385 = vmatpush.bf16.msra.mxu0 %v1521
    %2386 = vmatpush.bf16.msra.mxu0 %v1517
    %2387 = vmatpush.bf16.msra.mxu0 %v1513
    %2388 = vmatpush.bf16.msra.mxu0 %v1509
    %2389 = vmatpush.bf16.msra.mxu0 %v1505
    %2390 = vmatpush.bf16.msra.mxu0 %v1501
    %2391 = vmatpush.bf16.msra.mxu0 %v1497
    %2392 = vmatpush.bf16.msra.mxu0 %v1493
    %2393 = vmatmul.bf16.gmra.mxu0 %v522
    %v2394 = vpop.f32.mrf.mxu0
    %v2395 = vadd.f32 %v2346, %v2394
    %v2396 = vpop.f32.mrf.mxu0
    %v2397 = vadd.f32 %v2348, %v2396
    %2398 = vmatmul.bf16.gmra.mxu0 %v529
    %v2399 = vpop.f32.mrf.mxu0
    %v2400 = vadd.f32 %v2351, %v2399
    %v2401 = vpop.f32.mrf.mxu0
    %v2402 = vadd.f32 %v2353, %v2401
    %2403 = vmatmul.bf16.gmra.mxu0 %v536
    %v2404 = vpop.f32.mrf.mxu0
    %v2405 = vadd.f32 %v2356, %v2404
    %v2406 = vpop.f32.mrf.mxu0
    %v2407 = vadd.f32 %v2358, %v2406
    %2408 = vmatmul.bf16.gmra.mxu0 %v543
    %v2409 = vpop.f32.mrf.mxu0
    %v2410 = vadd.f32 %v2361, %v2409
    %v2411 = vpop.f32.mrf.mxu0
    %v2412 = vadd.f32 %v2363, %v2411
    %2413 = vmatmul.bf16.gmra.mxu0 %v550
    %v2414 = vpop.f32.mrf.mxu0
    %v2415 = vadd.f32 %v2366, %v2414
    %v2416 = vpop.f32.mrf.mxu0
    %v2417 = vadd.f32 %v2368, %v2416
    %2418 = vmatmul.bf16.gmra.mxu0 %v557
    %v2419 = vpop.f32.mrf.mxu0
    %v2420 = vadd.f32 %v2371, %v2419
    %v2421 = vpop.f32.mrf.mxu0
    %v2422 = vadd.f32 %v2373, %v2421
    %2423 = vmatmul.bf16.gmra.mxu0 %v564
    %v2424 = vpop.f32.mrf.mxu0
    %v2425 = vadd.f32 %v2376, %v2424
    %v2426 = vpop.f32.mrf.mxu0
    %v2427 = vadd.f32 %v2378, %v2426
    %2428 = vmatmul.bf16.gmra.mxu0 %v571
    %v2429 = vpop.f32.mrf.mxu0
    %v2430 = vadd.f32 %v2381, %v2429
    %v2431 = vpop.f32.mrf.mxu0
    %v2432 = vadd.f32 %v2383, %v2431
    %2433 = vdwg.mxu0
    %2434 = vmatpush.bf16.msra.mxu0 %v1330
    %2435 = vmatpush.bf16.msra.mxu0 %v1326
    %2436 = vmatpush.bf16.msra.mxu0 %v1322
    %2437 = vmatpush.bf16.msra.mxu0 %v1318
    %2438 = vmatpush.bf16.msra.mxu0 %v1314
    %2439 = vmatpush.bf16.msra.mxu0 %v1310
    %2440 = vmatpush.bf16.msra.mxu0 %v1306
    %2441 = vmatpush.bf16.msra.mxu0 %v1302
    %2442 = vmatmul.bf16.gmra.mxu0 %v516
    %v2443 = vpop.f32.mrf.mxu0
    %v2444 = vadd.f32 %v334, %v2443
    %v2445 = vpop.f32.mrf.mxu0
    %v2446 = vadd.f32 %v334, %v2445
    %2447 = vmatmul.bf16.gmra.mxu0 %v523
    %v2448 = vpop.f32.mrf.mxu0
    %v2449 = vadd.f32 %v334, %v2448
    %v2450 = vpop.f32.mrf.mxu0
    %v2451 = vadd.f32 %v334, %v2450
    %2452 = vmatmul.bf16.gmra.mxu0 %v530
    %v2453 = vpop.f32.mrf.mxu0
    %v2454 = vadd.f32 %v334, %v2453
    %v2455 = vpop.f32.mrf.mxu0
    %v2456 = vadd.f32 %v334, %v2455
    %2457 = vmatmul.bf16.gmra.mxu0 %v537
    %v2458 = vpop.f32.mrf.mxu0
    %v2459 = vadd.f32 %v334, %v2458
    %v2460 = vpop.f32.mrf.mxu0
    %v2461 = vadd.f32 %v334, %v2460
    %2462 = vmatmul.bf16.gmra.mxu0 %v544
    %v2463 = vpop.f32.mrf.mxu0
    %v2464 = vadd.f32 %v334, %v2463
    %v2465 = vpop.f32.mrf.mxu0
    %v2466 = vadd.f32 %v334, %v2465
    %2467 = vmatmul.bf16.gmra.mxu0 %v551
    %v2468 = vpop.f32.mrf.mxu0
    %v2469 = vadd.f32 %v334, %v2468
    %v2470 = vpop.f32.mrf.mxu0
    %v2471 = vadd.f32 %v334, %v2470
    %2472 = vmatmul.bf16.gmra.mxu0 %v558
    %v2473 = vpop.f32.mrf.mxu0
    %v2474 = vadd.f32 %v334, %v2473
    %v2475 = vpop.f32.mrf.mxu0
    %v2476 = vadd.f32 %v334, %v2475
    %2477 = vmatmul.bf16.gmra.mxu0 %v565
    %v2478 = vpop.f32.mrf.mxu0
    %v2479 = vadd.f32 %v334, %v2478
    %v2480 = vpop.f32.mrf.mxu0
    %v2481 = vadd.f32 %v334, %v2480
    %2482 = vdwg.mxu0
    %2483 = vmatpush.bf16.msra.mxu0 %v1362
    %2484 = vmatpush.bf16.msra.mxu0 %v1358
    %2485 = vmatpush.bf16.msra.mxu0 %v1354
    %2486 = vmatpush.bf16.msra.mxu0 %v1350
    %2487 = vmatpush.bf16.msra.mxu0 %v1346
    %2488 = vmatpush.bf16.msra.mxu0 %v1342
    %2489 = vmatpush.bf16.msra.mxu0 %v1338
    %2490 = vmatpush.bf16.msra.mxu0 %v1334
    %2491 = vmatmul.bf16.gmra.mxu0 %v517
    %v2492 = vpop.f32.mrf.mxu0
    %v2493 = vadd.f32 %v2444, %v2492
    %v2494 = vpop.f32.mrf.mxu0
    %v2495 = vadd.f32 %v2446, %v2494
    %2496 = vmatmul.bf16.gmra.mxu0 %v524
    %v2497 = vpop.f32.mrf.mxu0
    %v2498 = vadd.f32 %v2449, %v2497
    %v2499 = vpop.f32.mrf.mxu0
    %v2500 = vadd.f32 %v2451, %v2499
    %2501 = vmatmul.bf16.gmra.mxu0 %v531
    %v2502 = vpop.f32.mrf.mxu0
    %v2503 = vadd.f32 %v2454, %v2502
    %v2504 = vpop.f32.mrf.mxu0
    %v2505 = vadd.f32 %v2456, %v2504
    %2506 = vmatmul.bf16.gmra.mxu0 %v538
    %v2507 = vpop.f32.mrf.mxu0
    %v2508 = vadd.f32 %v2459, %v2507
    %v2509 = vpop.f32.mrf.mxu0
    %v2510 = vadd.f32 %v2461, %v2509
    %2511 = vmatmul.bf16.gmra.mxu0 %v545
    %v2512 = vpop.f32.mrf.mxu0
    %v2513 = vadd.f32 %v2464, %v2512
    %v2514 = vpop.f32.mrf.mxu0
    %v2515 = vadd.f32 %v2466, %v2514
    %2516 = vmatmul.bf16.gmra.mxu0 %v552
    %v2517 = vpop.f32.mrf.mxu0
    %v2518 = vadd.f32 %v2469, %v2517
    %v2519 = vpop.f32.mrf.mxu0
    %v2520 = vadd.f32 %v2471, %v2519
    %2521 = vmatmul.bf16.gmra.mxu0 %v559
    %v2522 = vpop.f32.mrf.mxu0
    %v2523 = vadd.f32 %v2474, %v2522
    %v2524 = vpop.f32.mrf.mxu0
    %v2525 = vadd.f32 %v2476, %v2524
    %2526 = vmatmul.bf16.gmra.mxu0 %v566
    %v2527 = vpop.f32.mrf.mxu0
    %v2528 = vadd.f32 %v2479, %v2527
    %v2529 = vpop.f32.mrf.mxu0
    %v2530 = vadd.f32 %v2481, %v2529
    %2531 = vdwg.mxu0
    %2532 = vmatpush.bf16.msra.mxu0 %v1394
    %2533 = vmatpush.bf16.msra.mxu0 %v1390
    %2534 = vmatpush.bf16.msra.mxu0 %v1386
    %2535 = vmatpush.bf16.msra.mxu0 %v1382
    %2536 = vmatpush.bf16.msra.mxu0 %v1378
    %2537 = vmatpush.bf16.msra.mxu0 %v1374
    %2538 = vmatpush.bf16.msra.mxu0 %v1370
    %2539 = vmatpush.bf16.msra.mxu0 %v1366
    %2540 = vmatmul.bf16.gmra.mxu0 %v518
    %v2541 = vpop.f32.mrf.mxu0
    %v2542 = vadd.f32 %v2493, %v2541
    %v2543 = vpop.f32.mrf.mxu0
    %v2544 = vadd.f32 %v2495, %v2543
    %2545 = vmatmul.bf16.gmra.mxu0 %v525
    %v2546 = vpop.f32.mrf.mxu0
    %v2547 = vadd.f32 %v2498, %v2546
    %v2548 = vpop.f32.mrf.mxu0
    %v2549 = vadd.f32 %v2500, %v2548
    %2550 = vmatmul.bf16.gmra.mxu0 %v532
    %v2551 = vpop.f32.mrf.mxu0
    %v2552 = vadd.f32 %v2503, %v2551
    %v2553 = vpop.f32.mrf.mxu0
    %v2554 = vadd.f32 %v2505, %v2553
    %2555 = vmatmul.bf16.gmra.mxu0 %v539
    %v2556 = vpop.f32.mrf.mxu0
    %v2557 = vadd.f32 %v2508, %v2556
    %v2558 = vpop.f32.mrf.mxu0
    %v2559 = vadd.f32 %v2510, %v2558
    %2560 = vmatmul.bf16.gmra.mxu0 %v546
    %v2561 = vpop.f32.mrf.mxu0
    %v2562 = vadd.f32 %v2513, %v2561
    %v2563 = vpop.f32.mrf.mxu0
    %v2564 = vadd.f32 %v2515, %v2563
    %2565 = vmatmul.bf16.gmra.mxu0 %v553
    %v2566 = vpop.f32.mrf.mxu0
    %v2567 = vadd.f32 %v2518, %v2566
    %v2568 = vpop.f32.mrf.mxu0
    %v2569 = vadd.f32 %v2520, %v2568
    %2570 = vmatmul.bf16.gmra.mxu0 %v560
    %v2571 = vpop.f32.mrf.mxu0
    %v2572 = vadd.f32 %v2523, %v2571
    %v2573 = vpop.f32.mrf.mxu0
    %v2574 = vadd.f32 %v2525, %v2573
    %2575 = vmatmul.bf16.gmra.mxu0 %v567
    %v2576 = vpop.f32.mrf.mxu0
    %v2577 = vadd.f32 %v2528, %v2576
    %v2578 = vpop.f32.mrf.mxu0
    %v2579 = vadd.f32 %v2530, %v2578
    %2580 = vdwg.mxu0
    %2581 = vmatpush.bf16.msra.mxu0 %v1426
    %2582 = vmatpush.bf16.msra.mxu0 %v1422
    %2583 = vmatpush.bf16.msra.mxu0 %v1418
    %2584 = vmatpush.bf16.msra.mxu0 %v1414
    %2585 = vmatpush.bf16.msra.mxu0 %v1410
    %2586 = vmatpush.bf16.msra.mxu0 %v1406
    %2587 = vmatpush.bf16.msra.mxu0 %v1402
    %2588 = vmatpush.bf16.msra.mxu0 %v1398
    %2589 = vmatmul.bf16.gmra.mxu0 %v519
    %v2590 = vpop.f32.mrf.mxu0
    %v2591 = vadd.f32 %v2542, %v2590
    %v2592 = vpop.f32.mrf.mxu0
    %v2593 = vadd.f32 %v2544, %v2592
    %2594 = vmatmul.bf16.gmra.mxu0 %v526
    %v2595 = vpop.f32.mrf.mxu0
    %v2596 = vadd.f32 %v2547, %v2595
    %v2597 = vpop.f32.mrf.mxu0
    %v2598 = vadd.f32 %v2549, %v2597
    %2599 = vmatmul.bf16.gmra.mxu0 %v533
    %v2600 = vpop.f32.mrf.mxu0
    %v2601 = vadd.f32 %v2552, %v2600
    %v2602 = vpop.f32.mrf.mxu0
    %v2603 = vadd.f32 %v2554, %v2602
    %2604 = vmatmul.bf16.gmra.mxu0 %v540
    %v2605 = vpop.f32.mrf.mxu0
    %v2606 = vadd.f32 %v2557, %v2605
    %v2607 = vpop.f32.mrf.mxu0
    %v2608 = vadd.f32 %v2559, %v2607
    %2609 = vmatmul.bf16.gmra.mxu0 %v547
    %v2610 = vpop.f32.mrf.mxu0
    %v2611 = vadd.f32 %v2562, %v2610
    %v2612 = vpop.f32.mrf.mxu0
    %v2613 = vadd.f32 %v2564, %v2612
    %2614 = vmatmul.bf16.gmra.mxu0 %v554
    %v2615 = vpop.f32.mrf.mxu0
    %v2616 = vadd.f32 %v2567, %v2615
    %v2617 = vpop.f32.mrf.mxu0
    %v2618 = vadd.f32 %v2569, %v2617
    %2619 = vmatmul.bf16.gmra.mxu0 %v561
    %v2620 = vpop.f32.mrf.mxu0
    %v2621 = vadd.f32 %v2572, %v2620
    %v2622 = vpop.f32.mrf.mxu0
    %v2623 = vadd.f32 %v2574, %v2622
    %2624 = vmatmul.bf16.gmra.mxu0 %v568
    %v2625 = vpop.f32.mrf.mxu0
    %v2626 = vadd.f32 %v2577, %v2625
    %v2627 = vpop.f32.mrf.mxu0
    %v2628 = vadd.f32 %v2579, %v2627
    %2629 = vdwg.mxu0
    %2630 = vmatpush.bf16.msra.mxu0 %v1458
    %2631 = vmatpush.bf16.msra.mxu0 %v1454
    %2632 = vmatpush.bf16.msra.mxu0 %v1450
    %2633 = vmatpush.bf16.msra.mxu0 %v1446
    %2634 = vmatpush.bf16.msra.mxu0 %v1442
    %2635 = vmatpush.bf16.msra.mxu0 %v1438
    %2636 = vmatpush.bf16.msra.mxu0 %v1434
    %2637 = vmatpush.bf16.msra.mxu0 %v1430
    %2638 = vmatmul.bf16.gmra.mxu0 %v520
    %v2639 = vpop.f32.mrf.mxu0
    %v2640 = vadd.f32 %v2591, %v2639
    %v2641 = vpop.f32.mrf.mxu0
    %v2642 = vadd.f32 %v2593, %v2641
    %2643 = vmatmul.bf16.gmra.mxu0 %v527
    %v2644 = vpop.f32.mrf.mxu0
    %v2645 = vadd.f32 %v2596, %v2644
    %v2646 = vpop.f32.mrf.mxu0
    %v2647 = vadd.f32 %v2598, %v2646
    %2648 = vmatmul.bf16.gmra.mxu0 %v534
    %v2649 = vpop.f32.mrf.mxu0
    %v2650 = vadd.f32 %v2601, %v2649
    %v2651 = vpop.f32.mrf.mxu0
    %v2652 = vadd.f32 %v2603, %v2651
    %2653 = vmatmul.bf16.gmra.mxu0 %v541
    %v2654 = vpop.f32.mrf.mxu0
    %v2655 = vadd.f32 %v2606, %v2654
    %v2656 = vpop.f32.mrf.mxu0
    %v2657 = vadd.f32 %v2608, %v2656
    %2658 = vmatmul.bf16.gmra.mxu0 %v548
    %v2659 = vpop.f32.mrf.mxu0
    %v2660 = vadd.f32 %v2611, %v2659
    %v2661 = vpop.f32.mrf.mxu0
    %v2662 = vadd.f32 %v2613, %v2661
    %2663 = vmatmul.bf16.gmra.mxu0 %v555
    %v2664 = vpop.f32.mrf.mxu0
    %v2665 = vadd.f32 %v2616, %v2664
    %v2666 = vpop.f32.mrf.mxu0
    %v2667 = vadd.f32 %v2618, %v2666
    %2668 = vmatmul.bf16.gmra.mxu0 %v562
    %v2669 = vpop.f32.mrf.mxu0
    %v2670 = vadd.f32 %v2621, %v2669
    %v2671 = vpop.f32.mrf.mxu0
    %v2672 = vadd.f32 %v2623, %v2671
    %2673 = vmatmul.bf16.gmra.mxu0 %v569
    %v2674 = vpop.f32.mrf.mxu0
    %v2675 = vadd.f32 %v2626, %v2674
    %v2676 = vpop.f32.mrf.mxu0
    %v2677 = vadd.f32 %v2628, %v2676
    %2678 = vdwg.mxu0
    %2679 = vmatpush.bf16.msra.mxu0 %v1490
    %2680 = vmatpush.bf16.msra.mxu0 %v1486
    %2681 = vmatpush.bf16.msra.mxu0 %v1482
    %2682 = vmatpush.bf16.msra.mxu0 %v1478
    %2683 = vmatpush.bf16.msra.mxu0 %v1474
    %2684 = vmatpush.bf16.msra.mxu0 %v1470
    %2685 = vmatpush.bf16.msra.mxu0 %v1466
    %2686 = vmatpush.bf16.msra.mxu0 %v1462
    %2687 = vmatmul.bf16.gmra.mxu0 %v521
    %v2688 = vpop.f32.mrf.mxu0
    %v2689 = vadd.f32 %v2640, %v2688
    %v2690 = vpop.f32.mrf.mxu0
    %v2691 = vadd.f32 %v2642, %v2690
    %2692 = vmatmul.bf16.gmra.mxu0 %v528
    %v2693 = vpop.f32.mrf.mxu0
    %v2694 = vadd.f32 %v2645, %v2693
    %v2695 = vpop.f32.mrf.mxu0
    %v2696 = vadd.f32 %v2647, %v2695
    %2697 = vmatmul.bf16.gmra.mxu0 %v535
    %v2698 = vpop.f32.mrf.mxu0
    %v2699 = vadd.f32 %v2650, %v2698
    %v2700 = vpop.f32.mrf.mxu0
    %v2701 = vadd.f32 %v2652, %v2700
    %2702 = vmatmul.bf16.gmra.mxu0 %v542
    %v2703 = vpop.f32.mrf.mxu0
    %v2704 = vadd.f32 %v2655, %v2703
    %v2705 = vpop.f32.mrf.mxu0
    %v2706 = vadd.f32 %v2657, %v2705
    %2707 = vmatmul.bf16.gmra.mxu0 %v549
    %v2708 = vpop.f32.mrf.mxu0
    %v2709 = vadd.f32 %v2660, %v2708
    %v2710 = vpop.f32.mrf.mxu0
    %v2711 = vadd.f32 %v2662, %v2710
    %2712 = vmatmul.bf16.gmra.mxu0 %v556
    %v2713 = vpop.f32.mrf.mxu0
    %v2714 = vadd.f32 %v2665, %v2713
    %v2715 = vpop.f32.mrf.mxu0
    %v2716 = vadd.f32 %v2667, %v2715
    %2717 = vmatmul.bf16.gmra.mxu0 %v563
    %v2718 = vpop.f32.mrf.mxu0
    %v2719 = vadd.f32 %v2670, %v2718
    %v2720 = vpop.f32.mrf.mxu0
    %v2721 = vadd.f32 %v2672, %v2720
    %2722 = vmatmul.bf16.gmra.mxu0 %v570
    %v2723 = vpop.f32.mrf.mxu0
    %v2724 = vadd.f32 %v2675, %v2723
    %v2725 = vpop.f32.mrf.mxu0
    %v2726 = vadd.f32 %v2677, %v2725
    %2727 = vdwg.mxu0
    %2728 = vmatpush.bf16.msra.mxu0 %v1522
    %2729 = vmatpush.bf16.msra.mxu0 %v1518
    %2730 = vmatpush.bf16.msra.mxu0 %v1514
    %2731 = vmatpush.bf16.msra.mxu0 %v1510
    %2732 = vmatpush.bf16.msra.mxu0 %v1506
    %2733 = vmatpush.bf16.msra.mxu0 %v1502
    %2734 = vmatpush.bf16.msra.mxu0 %v1498
    %2735 = vmatpush.bf16.msra.mxu0 %v1494
    %2736 = vmatmul.bf16.gmra.mxu0 %v522
    %v2737 = vpop.f32.mrf.mxu0
    %v2738 = vadd.f32 %v2689, %v2737
    %v2739 = vpop.f32.mrf.mxu0
    %v2740 = vadd.f32 %v2691, %v2739
    %2741 = vmatmul.bf16.gmra.mxu0 %v529
    %v2742 = vpop.f32.mrf.mxu0
    %v2743 = vadd.f32 %v2694, %v2742
    %v2744 = vpop.f32.mrf.mxu0
    %v2745 = vadd.f32 %v2696, %v2744
    %2746 = vmatmul.bf16.gmra.mxu0 %v536
    %v2747 = vpop.f32.mrf.mxu0
    %v2748 = vadd.f32 %v2699, %v2747
    %v2749 = vpop.f32.mrf.mxu0
    %v2750 = vadd.f32 %v2701, %v2749
    %2751 = vmatmul.bf16.gmra.mxu0 %v543
    %v2752 = vpop.f32.mrf.mxu0
    %v2753 = vadd.f32 %v2704, %v2752
    %v2754 = vpop.f32.mrf.mxu0
    %v2755 = vadd.f32 %v2706, %v2754
    %2756 = vmatmul.bf16.gmra.mxu0 %v550
    %v2757 = vpop.f32.mrf.mxu0
    %v2758 = vadd.f32 %v2709, %v2757
    %v2759 = vpop.f32.mrf.mxu0
    %v2760 = vadd.f32 %v2711, %v2759
    %2761 = vmatmul.bf16.gmra.mxu0 %v557
    %v2762 = vpop.f32.mrf.mxu0
    %v2763 = vadd.f32 %v2714, %v2762
    %v2764 = vpop.f32.mrf.mxu0
    %v2765 = vadd.f32 %v2716, %v2764
    %2766 = vmatmul.bf16.gmra.mxu0 %v564
    %v2767 = vpop.f32.mrf.mxu0
    %v2768 = vadd.f32 %v2719, %v2767
    %v2769 = vpop.f32.mrf.mxu0
    %v2770 = vadd.f32 %v2721, %v2769
    %2771 = vmatmul.bf16.gmra.mxu0 %v571
    %v2772 = vpop.f32.mrf.mxu0
    %v2773 = vadd.f32 %v2724, %v2772
    %v2774 = vpop.f32.mrf.mxu0
    %v2775 = vadd.f32 %v2726, %v2774
    %2776 = vdwg.mxu0
    %2777 = vmatpush.bf16.msra.mxu0 %v1331
    %2778 = vmatpush.bf16.msra.mxu0 %v1327
    %2779 = vmatpush.bf16.msra.mxu0 %v1323
    %2780 = vmatpush.bf16.msra.mxu0 %v1319
    %2781 = vmatpush.bf16.msra.mxu0 %v1315
    %2782 = vmatpush.bf16.msra.mxu0 %v1311
    %2783 = vmatpush.bf16.msra.mxu0 %v1307
    %2784 = vmatpush.bf16.msra.mxu0 %v1303
    %2785 = vmatmul.bf16.gmra.mxu0 %v516
    %v2786 = vpop.f32.mrf.mxu0
    %v2787 = vadd.f32 %v335, %v2786
    %v2788 = vpop.f32.mrf.mxu0
    %v2789 = vadd.f32 %v335, %v2788
    %2790 = vmatmul.bf16.gmra.mxu0 %v523
    %v2791 = vpop.f32.mrf.mxu0
    %v2792 = vadd.f32 %v335, %v2791
    %v2793 = vpop.f32.mrf.mxu0
    %v2794 = vadd.f32 %v335, %v2793
    %2795 = vmatmul.bf16.gmra.mxu0 %v530
    %v2796 = vpop.f32.mrf.mxu0
    %v2797 = vadd.f32 %v335, %v2796
    %v2798 = vpop.f32.mrf.mxu0
    %v2799 = vadd.f32 %v335, %v2798
    %2800 = vmatmul.bf16.gmra.mxu0 %v537
    %v2801 = vpop.f32.mrf.mxu0
    %v2802 = vadd.f32 %v335, %v2801
    %v2803 = vpop.f32.mrf.mxu0
    %v2804 = vadd.f32 %v335, %v2803
    %2805 = vmatmul.bf16.gmra.mxu0 %v544
    %v2806 = vpop.f32.mrf.mxu0
    %v2807 = vadd.f32 %v335, %v2806
    %v2808 = vpop.f32.mrf.mxu0
    %v2809 = vadd.f32 %v335, %v2808
    %2810 = vmatmul.bf16.gmra.mxu0 %v551
    %v2811 = vpop.f32.mrf.mxu0
    %v2812 = vadd.f32 %v335, %v2811
    %v2813 = vpop.f32.mrf.mxu0
    %v2814 = vadd.f32 %v335, %v2813
    %2815 = vmatmul.bf16.gmra.mxu0 %v558
    %v2816 = vpop.f32.mrf.mxu0
    %v2817 = vadd.f32 %v335, %v2816
    %v2818 = vpop.f32.mrf.mxu0
    %v2819 = vadd.f32 %v335, %v2818
    %2820 = vmatmul.bf16.gmra.mxu0 %v565
    %v2821 = vpop.f32.mrf.mxu0
    %v2822 = vadd.f32 %v335, %v2821
    %v2823 = vpop.f32.mrf.mxu0
    %v2824 = vadd.f32 %v335, %v2823
    %2825 = vdwg.mxu0
    %2826 = vmatpush.bf16.msra.mxu0 %v1363
    %2827 = vmatpush.bf16.msra.mxu0 %v1359
    %2828 = vmatpush.bf16.msra.mxu0 %v1355
    %2829 = vmatpush.bf16.msra.mxu0 %v1351
    %2830 = vmatpush.bf16.msra.mxu0 %v1347
    %2831 = vmatpush.bf16.msra.mxu0 %v1343
    %2832 = vmatpush.bf16.msra.mxu0 %v1339
    %2833 = vmatpush.bf16.msra.mxu0 %v1335
    %2834 = vmatmul.bf16.gmra.mxu0 %v517
    %v2835 = vpop.f32.mrf.mxu0
    %v2836 = vadd.f32 %v2787, %v2835
    %v2837 = vpop.f32.mrf.mxu0
    %v2838 = vadd.f32 %v2789, %v2837
    %2839 = vmatmul.bf16.gmra.mxu0 %v524
    %v2840 = vpop.f32.mrf.mxu0
    %v2841 = vadd.f32 %v2792, %v2840
    %v2842 = vpop.f32.mrf.mxu0
    %v2843 = vadd.f32 %v2794, %v2842
    %2844 = vmatmul.bf16.gmra.mxu0 %v531
    %v2845 = vpop.f32.mrf.mxu0
    %v2846 = vadd.f32 %v2797, %v2845
    %v2847 = vpop.f32.mrf.mxu0
    %v2848 = vadd.f32 %v2799, %v2847
    %2849 = vmatmul.bf16.gmra.mxu0 %v538
    %v2850 = vpop.f32.mrf.mxu0
    %v2851 = vadd.f32 %v2802, %v2850
    %v2852 = vpop.f32.mrf.mxu0
    %v2853 = vadd.f32 %v2804, %v2852
    %2854 = vmatmul.bf16.gmra.mxu0 %v545
    %v2855 = vpop.f32.mrf.mxu0
    %v2856 = vadd.f32 %v2807, %v2855
    %v2857 = vpop.f32.mrf.mxu0
    %v2858 = vadd.f32 %v2809, %v2857
    %2859 = vmatmul.bf16.gmra.mxu0 %v552
    %v2860 = vpop.f32.mrf.mxu0
    %v2861 = vadd.f32 %v2812, %v2860
    %v2862 = vpop.f32.mrf.mxu0
    %v2863 = vadd.f32 %v2814, %v2862
    %2864 = vmatmul.bf16.gmra.mxu0 %v559
    %v2865 = vpop.f32.mrf.mxu0
    %v2866 = vadd.f32 %v2817, %v2865
    %v2867 = vpop.f32.mrf.mxu0
    %v2868 = vadd.f32 %v2819, %v2867
    %2869 = vmatmul.bf16.gmra.mxu0 %v566
    %v2870 = vpop.f32.mrf.mxu0
    %v2871 = vadd.f32 %v2822, %v2870
    %v2872 = vpop.f32.mrf.mxu0
    %v2873 = vadd.f32 %v2824, %v2872
    %2874 = vdwg.mxu0
    %2875 = vmatpush.bf16.msra.mxu0 %v1395
    %2876 = vmatpush.bf16.msra.mxu0 %v1391
    %2877 = vmatpush.bf16.msra.mxu0 %v1387
    %2878 = vmatpush.bf16.msra.mxu0 %v1383
    %2879 = vmatpush.bf16.msra.mxu0 %v1379
    %2880 = vmatpush.bf16.msra.mxu0 %v1375
    %2881 = vmatpush.bf16.msra.mxu0 %v1371
    %2882 = vmatpush.bf16.msra.mxu0 %v1367
    %2883 = vmatmul.bf16.gmra.mxu0 %v518
    %v2884 = vpop.f32.mrf.mxu0
    %v2885 = vadd.f32 %v2836, %v2884
    %v2886 = vpop.f32.mrf.mxu0
    %v2887 = vadd.f32 %v2838, %v2886
    %2888 = vmatmul.bf16.gmra.mxu0 %v525
    %v2889 = vpop.f32.mrf.mxu0
    %v2890 = vadd.f32 %v2841, %v2889
    %v2891 = vpop.f32.mrf.mxu0
    %v2892 = vadd.f32 %v2843, %v2891
    %2893 = vmatmul.bf16.gmra.mxu0 %v532
    %v2894 = vpop.f32.mrf.mxu0
    %v2895 = vadd.f32 %v2846, %v2894
    %v2896 = vpop.f32.mrf.mxu0
    %v2897 = vadd.f32 %v2848, %v2896
    %2898 = vmatmul.bf16.gmra.mxu0 %v539
    %v2899 = vpop.f32.mrf.mxu0
    %v2900 = vadd.f32 %v2851, %v2899
    %v2901 = vpop.f32.mrf.mxu0
    %v2902 = vadd.f32 %v2853, %v2901
    %2903 = vmatmul.bf16.gmra.mxu0 %v546
    %v2904 = vpop.f32.mrf.mxu0
    %v2905 = vadd.f32 %v2856, %v2904
    %v2906 = vpop.f32.mrf.mxu0
    %v2907 = vadd.f32 %v2858, %v2906
    %2908 = vmatmul.bf16.gmra.mxu0 %v553
    %v2909 = vpop.f32.mrf.mxu0
    %v2910 = vadd.f32 %v2861, %v2909
    %v2911 = vpop.f32.mrf.mxu0
    %v2912 = vadd.f32 %v2863, %v2911
    %2913 = vmatmul.bf16.gmra.mxu0 %v560
    %v2914 = vpop.f32.mrf.mxu0
    %v2915 = vadd.f32 %v2866, %v2914
    %v2916 = vpop.f32.mrf.mxu0
    %v2917 = vadd.f32 %v2868, %v2916
    %2918 = vmatmul.bf16.gmra.mxu0 %v567
    %v2919 = vpop.f32.mrf.mxu0
    %v2920 = vadd.f32 %v2871, %v2919
    %v2921 = vpop.f32.mrf.mxu0
    %v2922 = vadd.f32 %v2873, %v2921
    %2923 = vdwg.mxu0
    %2924 = vmatpush.bf16.msra.mxu0 %v1427
    %2925 = vmatpush.bf16.msra.mxu0 %v1423
    %2926 = vmatpush.bf16.msra.mxu0 %v1419
    %2927 = vmatpush.bf16.msra.mxu0 %v1415
    %2928 = vmatpush.bf16.msra.mxu0 %v1411
    %2929 = vmatpush.bf16.msra.mxu0 %v1407
    %2930 = vmatpush.bf16.msra.mxu0 %v1403
    %2931 = vmatpush.bf16.msra.mxu0 %v1399
    %2932 = vmatmul.bf16.gmra.mxu0 %v519
    %v2933 = vpop.f32.mrf.mxu0
    %v2934 = vadd.f32 %v2885, %v2933
    %v2935 = vpop.f32.mrf.mxu0
    %v2936 = vadd.f32 %v2887, %v2935
    %2937 = vmatmul.bf16.gmra.mxu0 %v526
    %v2938 = vpop.f32.mrf.mxu0
    %v2939 = vadd.f32 %v2890, %v2938
    %v2940 = vpop.f32.mrf.mxu0
    %v2941 = vadd.f32 %v2892, %v2940
    %2942 = vmatmul.bf16.gmra.mxu0 %v533
    %v2943 = vpop.f32.mrf.mxu0
    %v2944 = vadd.f32 %v2895, %v2943
    %v2945 = vpop.f32.mrf.mxu0
    %v2946 = vadd.f32 %v2897, %v2945
    %2947 = vmatmul.bf16.gmra.mxu0 %v540
    %v2948 = vpop.f32.mrf.mxu0
    %v2949 = vadd.f32 %v2900, %v2948
    %v2950 = vpop.f32.mrf.mxu0
    %v2951 = vadd.f32 %v2902, %v2950
    %2952 = vmatmul.bf16.gmra.mxu0 %v547
    %v2953 = vpop.f32.mrf.mxu0
    %v2954 = vadd.f32 %v2905, %v2953
    %v2955 = vpop.f32.mrf.mxu0
    %v2956 = vadd.f32 %v2907, %v2955
    %2957 = vmatmul.bf16.gmra.mxu0 %v554
    %v2958 = vpop.f32.mrf.mxu0
    %v2959 = vadd.f32 %v2910, %v2958
    %v2960 = vpop.f32.mrf.mxu0
    %v2961 = vadd.f32 %v2912, %v2960
    %2962 = vmatmul.bf16.gmra.mxu0 %v561
    %v2963 = vpop.f32.mrf.mxu0
    %v2964 = vadd.f32 %v2915, %v2963
    %v2965 = vpop.f32.mrf.mxu0
    %v2966 = vadd.f32 %v2917, %v2965
    %2967 = vmatmul.bf16.gmra.mxu0 %v568
    %v2968 = vpop.f32.mrf.mxu0
    %v2969 = vadd.f32 %v2920, %v2968
    %v2970 = vpop.f32.mrf.mxu0
    %v2971 = vadd.f32 %v2922, %v2970
    %2972 = vdwg.mxu0
    %2973 = vmatpush.bf16.msra.mxu0 %v1459
    %2974 = vmatpush.bf16.msra.mxu0 %v1455
    %2975 = vmatpush.bf16.msra.mxu0 %v1451
    %2976 = vmatpush.bf16.msra.mxu0 %v1447
    %2977 = vmatpush.bf16.msra.mxu0 %v1443
    %2978 = vmatpush.bf16.msra.mxu0 %v1439
    %2979 = vmatpush.bf16.msra.mxu0 %v1435
    %2980 = vmatpush.bf16.msra.mxu0 %v1431
    %2981 = vmatmul.bf16.gmra.mxu0 %v520
    %v2982 = vpop.f32.mrf.mxu0
    %v2983 = vadd.f32 %v2934, %v2982
    %v2984 = vpop.f32.mrf.mxu0
    %v2985 = vadd.f32 %v2936, %v2984
    %2986 = vmatmul.bf16.gmra.mxu0 %v527
    %v2987 = vpop.f32.mrf.mxu0
    %v2988 = vadd.f32 %v2939, %v2987
    %v2989 = vpop.f32.mrf.mxu0
    %v2990 = vadd.f32 %v2941, %v2989
    %2991 = vmatmul.bf16.gmra.mxu0 %v534
    %v2992 = vpop.f32.mrf.mxu0
    %v2993 = vadd.f32 %v2944, %v2992
    %v2994 = vpop.f32.mrf.mxu0
    %v2995 = vadd.f32 %v2946, %v2994
    %2996 = vmatmul.bf16.gmra.mxu0 %v541
    %v2997 = vpop.f32.mrf.mxu0
    %v2998 = vadd.f32 %v2949, %v2997
    %v2999 = vpop.f32.mrf.mxu0
    %v3000 = vadd.f32 %v2951, %v2999
    %3001 = vmatmul.bf16.gmra.mxu0 %v548
    %v3002 = vpop.f32.mrf.mxu0
    %v3003 = vadd.f32 %v2954, %v3002
    %v3004 = vpop.f32.mrf.mxu0
    %v3005 = vadd.f32 %v2956, %v3004
    %3006 = vmatmul.bf16.gmra.mxu0 %v555
    %v3007 = vpop.f32.mrf.mxu0
    %v3008 = vadd.f32 %v2959, %v3007
    %v3009 = vpop.f32.mrf.mxu0
    %v3010 = vadd.f32 %v2961, %v3009
    %3011 = vmatmul.bf16.gmra.mxu0 %v562
    %v3012 = vpop.f32.mrf.mxu0
    %v3013 = vadd.f32 %v2964, %v3012
    %v3014 = vpop.f32.mrf.mxu0
    %v3015 = vadd.f32 %v2966, %v3014
    %3016 = vmatmul.bf16.gmra.mxu0 %v569
    %v3017 = vpop.f32.mrf.mxu0
    %v3018 = vadd.f32 %v2969, %v3017
    %v3019 = vpop.f32.mrf.mxu0
    %v3020 = vadd.f32 %v2971, %v3019
    %3021 = vdwg.mxu0
    %3022 = vmatpush.bf16.msra.mxu0 %v1491
    %3023 = vmatpush.bf16.msra.mxu0 %v1487
    %3024 = vmatpush.bf16.msra.mxu0 %v1483
    %3025 = vmatpush.bf16.msra.mxu0 %v1479
    %3026 = vmatpush.bf16.msra.mxu0 %v1475
    %3027 = vmatpush.bf16.msra.mxu0 %v1471
    %3028 = vmatpush.bf16.msra.mxu0 %v1467
    %3029 = vmatpush.bf16.msra.mxu0 %v1463
    %3030 = vmatmul.bf16.gmra.mxu0 %v521
    %v3031 = vpop.f32.mrf.mxu0
    %v3032 = vadd.f32 %v2983, %v3031
    %v3033 = vpop.f32.mrf.mxu0
    %v3034 = vadd.f32 %v2985, %v3033
    %3035 = vmatmul.bf16.gmra.mxu0 %v528
    %v3036 = vpop.f32.mrf.mxu0
    %v3037 = vadd.f32 %v2988, %v3036
    %v3038 = vpop.f32.mrf.mxu0
    %v3039 = vadd.f32 %v2990, %v3038
    %3040 = vmatmul.bf16.gmra.mxu0 %v535
    %v3041 = vpop.f32.mrf.mxu0
    %v3042 = vadd.f32 %v2993, %v3041
    %v3043 = vpop.f32.mrf.mxu0
    %v3044 = vadd.f32 %v2995, %v3043
    %3045 = vmatmul.bf16.gmra.mxu0 %v542
    %v3046 = vpop.f32.mrf.mxu0
    %v3047 = vadd.f32 %v2998, %v3046
    %v3048 = vpop.f32.mrf.mxu0
    %v3049 = vadd.f32 %v3000, %v3048
    %3050 = vmatmul.bf16.gmra.mxu0 %v549
    %v3051 = vpop.f32.mrf.mxu0
    %v3052 = vadd.f32 %v3003, %v3051
    %v3053 = vpop.f32.mrf.mxu0
    %v3054 = vadd.f32 %v3005, %v3053
    %3055 = vmatmul.bf16.gmra.mxu0 %v556
    %v3056 = vpop.f32.mrf.mxu0
    %v3057 = vadd.f32 %v3008, %v3056
    %v3058 = vpop.f32.mrf.mxu0
    %v3059 = vadd.f32 %v3010, %v3058
    %3060 = vmatmul.bf16.gmra.mxu0 %v563
    %v3061 = vpop.f32.mrf.mxu0
    %v3062 = vadd.f32 %v3013, %v3061
    %v3063 = vpop.f32.mrf.mxu0
    %v3064 = vadd.f32 %v3015, %v3063
    %3065 = vmatmul.bf16.gmra.mxu0 %v570
    %v3066 = vpop.f32.mrf.mxu0
    %v3067 = vadd.f32 %v3018, %v3066
    %v3068 = vpop.f32.mrf.mxu0
    %v3069 = vadd.f32 %v3020, %v3068
    %3070 = vdwg.mxu0
    %3071 = vmatpush.bf16.msra.mxu0 %v1523
    %3072 = vmatpush.bf16.msra.mxu0 %v1519
    %3073 = vmatpush.bf16.msra.mxu0 %v1515
    %3074 = vmatpush.bf16.msra.mxu0 %v1511
    %3075 = vmatpush.bf16.msra.mxu0 %v1507
    %3076 = vmatpush.bf16.msra.mxu0 %v1503
    %3077 = vmatpush.bf16.msra.mxu0 %v1499
    %3078 = vmatpush.bf16.msra.mxu0 %v1495
    %3079 = vmatmul.bf16.gmra.mxu0 %v522
    %v3080 = vpop.f32.mrf.mxu0
    %v3081 = vadd.f32 %v3032, %v3080
    %v3082 = vpop.f32.mrf.mxu0
    %v3083 = vadd.f32 %v3034, %v3082
    %3084 = vmatmul.bf16.gmra.mxu0 %v529
    %v3085 = vpop.f32.mrf.mxu0
    %v3086 = vadd.f32 %v3037, %v3085
    %v3087 = vpop.f32.mrf.mxu0
    %v3088 = vadd.f32 %v3039, %v3087
    %3089 = vmatmul.bf16.gmra.mxu0 %v536
    %v3090 = vpop.f32.mrf.mxu0
    %v3091 = vadd.f32 %v3042, %v3090
    %v3092 = vpop.f32.mrf.mxu0
    %v3093 = vadd.f32 %v3044, %v3092
    %3094 = vmatmul.bf16.gmra.mxu0 %v543
    %v3095 = vpop.f32.mrf.mxu0
    %v3096 = vadd.f32 %v3047, %v3095
    %v3097 = vpop.f32.mrf.mxu0
    %v3098 = vadd.f32 %v3049, %v3097
    %3099 = vmatmul.bf16.gmra.mxu0 %v550
    %v3100 = vpop.f32.mrf.mxu0
    %v3101 = vadd.f32 %v3052, %v3100
    %v3102 = vpop.f32.mrf.mxu0
    %v3103 = vadd.f32 %v3054, %v3102
    %3104 = vmatmul.bf16.gmra.mxu0 %v557
    %v3105 = vpop.f32.mrf.mxu0
    %v3106 = vadd.f32 %v3057, %v3105
    %v3107 = vpop.f32.mrf.mxu0
    %v3108 = vadd.f32 %v3059, %v3107
    %3109 = vmatmul.bf16.gmra.mxu0 %v564
    %v3110 = vpop.f32.mrf.mxu0
    %v3111 = vadd.f32 %v3062, %v3110
    %v3112 = vpop.f32.mrf.mxu0
    %v3113 = vadd.f32 %v3064, %v3112
    %3114 = vmatmul.bf16.gmra.mxu0 %v571
    %v3115 = vpop.f32.mrf.mxu0
    %v3116 = vadd.f32 %v3067, %v3115
    %v3117 = vpop.f32.mrf.mxu0
    %v3118 = vadd.f32 %v3069, %v3117
    %3119 = vdwg.mxu0
    %v3120 = vmax.f32 %v2052, 0.0
    %v3121 = vmax.f32 %v2395, 0.0
    %v3122 = vmax.f32 %v2738, 0.0
    %v3123 = vmax.f32 %v3081, 0.0
    %v3124 = vmax.f32 %v2054, 0.0
    %v3125 = vmax.f32 %v2397, 0.0
    %v3126 = vmax.f32 %v2740, 0.0
    %v3127 = vmax.f32 %v3083, 0.0
    %v3128 = vmax.f32 %v2057, 0.0
    %v3129 = vmax.f32 %v2400, 0.0
    %v3130 = vmax.f32 %v2743, 0.0
    %v3131 = vmax.f32 %v3086, 0.0
    %v3132 = vmax.f32 %v2059, 0.0
    %v3133 = vmax.f32 %v2402, 0.0
    %v3134 = vmax.f32 %v2745, 0.0
    %v3135 = vmax.f32 %v3088, 0.0
    %v3136 = vmax.f32 %v2062, 0.0
    %v3137 = vmax.f32 %v2405, 0.0
    %v3138 = vmax.f32 %v2748, 0.0
    %v3139 = vmax.f32 %v3091, 0.0
    %v3140 = vmax.f32 %v2064, 0.0
    %v3141 = vmax.f32 %v2407, 0.0
    %v3142 = vmax.f32 %v2750, 0.0
    %v3143 = vmax.f32 %v3093, 0.0
    %v3144 = vmax.f32 %v2067, 0.0
    %v3145 = vmax.f32 %v2410, 0.0
    %v3146 = vmax.f32 %v2753, 0.0
    %v3147 = vmax.f32 %v3096, 0.0
    %v3148 = vmax.f32 %v2069, 0.0
    %v3149 = vmax.f32 %v2412, 0.0
    %v3150 = vmax.f32 %v2755, 0.0
    %v3151 = vmax.f32 %v3098, 0.0
    %v3152 = vmax.f32 %v2072, 0.0
    %v3153 = vmax.f32 %v2415, 0.0
    %v3154 = vmax.f32 %v2758, 0.0
    %v3155 = vmax.f32 %v3101, 0.0
    %v3156 = vmax.f32 %v2074, 0.0
    %v3157 = vmax.f32 %v2417, 0.0
    %v3158 = vmax.f32 %v2760, 0.0
    %v3159 = vmax.f32 %v3103, 0.0
    %v3160 = vmax.f32 %v2077, 0.0
    %v3161 = vmax.f32 %v2420, 0.0
    %v3162 = vmax.f32 %v2763, 0.0
    %v3163 = vmax.f32 %v3106, 0.0
    %v3164 = vmax.f32 %v2079, 0.0
    %v3165 = vmax.f32 %v2422, 0.0
    %v3166 = vmax.f32 %v2765, 0.0
    %v3167 = vmax.f32 %v3108, 0.0
    %v3168 = vmax.f32 %v2082, 0.0
    %v3169 = vmax.f32 %v2425, 0.0
    %v3170 = vmax.f32 %v2768, 0.0
    %v3171 = vmax.f32 %v3111, 0.0
    %v3172 = vmax.f32 %v2084, 0.0
    %v3173 = vmax.f32 %v2427, 0.0
    %v3174 = vmax.f32 %v2770, 0.0
    %v3175 = vmax.f32 %v3113, 0.0
    %v3176 = vmax.f32 %v2087, 0.0
    %v3177 = vmax.f32 %v2430, 0.0
    %v3178 = vmax.f32 %v2773, 0.0
    %v3179 = vmax.f32 %v3116, 0.0
    %v3180 = vmax.f32 %v2089, 0.0
    %v3181 = vmax.f32 %v2432, 0.0
    %v3182 = vmax.f32 %v2775, 0.0
    %v3183 = vmax.f32 %v3118, 0.0
    %v3184 = vpack.c.bf16 %v3124, %v3120
    %v3185 = vpack.c.bf16 %v3125, %v3121
    %v3186 = vpack.c.bf16 %v3126, %v3122
    %v3187 = vpack.c.bf16 %v3127, %v3123
    %v3188 = vpack.c.bf16 %v3132, %v3128
    %v3189 = vpack.c.bf16 %v3133, %v3129
    %v3190 = vpack.c.bf16 %v3134, %v3130
    %v3191 = vpack.c.bf16 %v3135, %v3131
    %v3192 = vpack.c.bf16 %v3140, %v3136
    %v3193 = vpack.c.bf16 %v3141, %v3137
    %v3194 = vpack.c.bf16 %v3142, %v3138
    %v3195 = vpack.c.bf16 %v3143, %v3139
    %v3196 = vpack.c.bf16 %v3148, %v3144
    %v3197 = vpack.c.bf16 %v3149, %v3145
    %v3198 = vpack.c.bf16 %v3150, %v3146
    %v3199 = vpack.c.bf16 %v3151, %v3147
    %v3200 = vpack.c.bf16 %v3156, %v3152
    %v3201 = vpack.c.bf16 %v3157, %v3153
    %v3202 = vpack.c.bf16 %v3158, %v3154
    %v3203 = vpack.c.bf16 %v3159, %v3155
    %v3204 = vpack.c.bf16 %v3164, %v3160
    %v3205 = vpack.c.bf16 %v3165, %v3161
    %v3206 = vpack.c.bf16 %v3166, %v3162
    %v3207 = vpack.c.bf16 %v3167, %v3163
    %v3208 = vpack.c.bf16 %v3172, %v3168
    %v3209 = vpack.c.bf16 %v3173, %v3169
    %v3210 = vpack.c.bf16 %v3174, %v3170
    %v3211 = vpack.c.bf16 %v3175, %v3171
    %v3212 = vpack.c.bf16 %v3180, %v3176
    %v3213 = vpack.c.bf16 %v3181, %v3177
    %v3214 = vpack.c.bf16 %v3182, %v3178
    %v3215 = vpack.c.bf16 %v3183, %v3179
    %v3216 = vld [vmem:[%s3] sm:$0xf]
    %v3217 = vld [vmem:[%s3 + $0x4] sm:$0xf]
    %v3218 = vld [vmem:[%s3 + $0x8] sm:$0xf]
    %v3219 = vld [vmem:[%s3 + $0xc] sm:$0xf]
    %v3220 = vld [vmem:[%s3 + $0x10] sm:$0xf]
    %v3221 = vld [vmem:[%s3 + $0x14] sm:$0xf]
    %v3222 = vld [vmem:[%s3 + $0x18] sm:$0xf]
    %v3223 = vld [vmem:[%s3 + $0x1c] sm:$0xf]
    %v3224 = vld [vmem:[%s3 + $0x20] sm:$0xf]
    %v3225 = vld [vmem:[%s3 + $0x24] sm:$0xf]
    %v3226 = vld [vmem:[%s3 + $0x28] sm:$0xf]
    %v3227 = vld [vmem:[%s3 + $0x2c] sm:$0xf]
    %v3228 = vld [vmem:[%s3 + $0x30] sm:$0xf]
    %v3229 = vld [vmem:[%s3 + $0x34] sm:$0xf]
    %v3230 = vld [vmem:[%s3 + $0x38] sm:$0xf]
    %v3231 = vld [vmem:[%s3 + $0x3c] sm:$0xf]
    %v3232 = vld [vmem:[%s3 + $0x40] sm:$0xf]
    %v3233 = vld [vmem:[%s3 + $0x44] sm:$0xf]
    %v3234 = vld [vmem:[%s3 + $0x48] sm:$0xf]
    %v3235 = vld [vmem:[%s3 + $0x4c] sm:$0xf]
    %v3236 = vld [vmem:[%s3 + $0x50] sm:$0xf]
    %v3237 = vld [vmem:[%s3 + $0x54] sm:$0xf]
    %v3238 = vld [vmem:[%s3 + $0x58] sm:$0xf]
    %v3239 = vld [vmem:[%s3 + $0x5c] sm:$0xf]
    %v3240 = vld [vmem:[%s3 + $0x60] sm:$0xf]
    %v3241 = vld [vmem:[%s3 + $0x64] sm:$0xf]
    %v3242 = vld [vmem:[%s3 + $0x68] sm:$0xf]
    %v3243 = vld [vmem:[%s3 + $0x6c] sm:$0xf]
    %v3244 = vld [vmem:[%s3 + $0x70] sm:$0xf]
    %v3245 = vld [vmem:[%s3 + $0x74] sm:$0xf]
    %v3246 = vld [vmem:[%s3 + $0x78] sm:$0xf]
    %v3247 = vld [vmem:[%s3 + $0x7c] sm:$0xf]
    %v3248 = vld [vmem:[%s3 + $0x80] sm:$0xf]
    %v3249 = vld [vmem:[%s3 + $0x84] sm:$0xf]
    %v3250 = vld [vmem:[%s3 + $0x88] sm:$0xf]
    %v3251 = vld [vmem:[%s3 + $0x8c] sm:$0xf]
    %v3252 = vld [vmem:[%s3 + $0x90] sm:$0xf]
    %v3253 = vld [vmem:[%s3 + $0x94] sm:$0xf]
    %v3254 = vld [vmem:[%s3 + $0x98] sm:$0xf]
    %v3255 = vld [vmem:[%s3 + $0x9c] sm:$0xf]
    %v3256 = vld [vmem:[%s3 + $0xa0] sm:$0xf]
    %v3257 = vld [vmem:[%s3 + $0xa4] sm:$0xf]
    %v3258 = vld [vmem:[%s3 + $0xa8] sm:$0xf]
    %v3259 = vld [vmem:[%s3 + $0xac] sm:$0xf]
    %v3260 = vld [vmem:[%s3 + $0xb0] sm:$0xf]
    %v3261 = vld [vmem:[%s3 + $0xb4] sm:$0xf]
    %v3262 = vld [vmem:[%s3 + $0xb8] sm:$0xf]
    %v3263 = vld [vmem:[%s3 + $0xbc] sm:$0xf]
    %v3264 = vld [vmem:[%s3 + $0xc0] sm:$0xf]
    %v3265 = vld [vmem:[%s3 + $0xc4] sm:$0xf]
    %v3266 = vld [vmem:[%s3 + $0xc8] sm:$0xf]
    %v3267 = vld [vmem:[%s3 + $0xcc] sm:$0xf]
    %v3268 = vld [vmem:[%s3 + $0xd0] sm:$0xf]
    %v3269 = vld [vmem:[%s3 + $0xd4] sm:$0xf]
    %v3270 = vld [vmem:[%s3 + $0xd8] sm:$0xf]
    %v3271 = vld [vmem:[%s3 + $0xdc] sm:$0xf]
    %v3272 = vld [vmem:[%s3 + $0xe0] sm:$0xf]
    %v3273 = vld [vmem:[%s3 + $0xe4] sm:$0xf]
    %v3274 = vld [vmem:[%s3 + $0xe8] sm:$0xf]
    %v3275 = vld [vmem:[%s3 + $0xec] sm:$0xf]
    %v3276 = vld [vmem:[%s3 + $0xf0] sm:$0xf]
    %v3277 = vld [vmem:[%s3 + $0xf4] sm:$0xf]
    %v3278 = vld [vmem:[%s3 + $0xf8] sm:$0xf]
    %v3279 = vld [vmem:[%s3 + $0xfc] sm:$0xf]
    %v3280 = vld [vmem:[%s4] sm:$0x1]
    %v3282 = vperm.slane %v3280, 0
    %v3348 = vunpack.c.l.b16 %v3216
    %v3349 = vunpack.c.l.b16 %v3217
    %v3350 = vunpack.c.l.b16 %v3218
    %v3351 = vunpack.c.l.b16 %v3219
    %v3352 = vunpack.c.l.b16 %v3220
    %v3353 = vunpack.c.l.b16 %v3221
    %v3354 = vunpack.c.l.b16 %v3222
    %v3355 = vunpack.c.l.b16 %v3223
    %v3356 = vunpack.c.l.b16 %v3224
    %v3357 = vunpack.c.l.b16 %v3225
    %v3358 = vunpack.c.l.b16 %v3226
    %v3359 = vunpack.c.l.b16 %v3227
    %v3360 = vunpack.c.l.b16 %v3228
    %v3361 = vunpack.c.l.b16 %v3229
    %v3362 = vunpack.c.l.b16 %v3230
    %v3363 = vunpack.c.l.b16 %v3231
    %v3364 = vunpack.c.l.b16 %v3232
    %v3365 = vunpack.c.l.b16 %v3233
    %v3366 = vunpack.c.l.b16 %v3234
    %v3367 = vunpack.c.l.b16 %v3235
    %v3368 = vunpack.c.l.b16 %v3236
    %v3369 = vunpack.c.l.b16 %v3237
    %v3370 = vunpack.c.l.b16 %v3238
    %v3371 = vunpack.c.l.b16 %v3239
    %v3372 = vunpack.c.l.b16 %v3240
    %v3373 = vunpack.c.l.b16 %v3241
    %v3374 = vunpack.c.l.b16 %v3242
    %v3375 = vunpack.c.l.b16 %v3243
    %v3376 = vunpack.c.l.b16 %v3244
    %v3377 = vunpack.c.l.b16 %v3245
    %v3378 = vunpack.c.l.b16 %v3246
    %v3379 = vunpack.c.l.b16 %v3247
    %v3380 = vunpack.c.l.b16 %v3248
    %v3381 = vunpack.c.l.b16 %v3249
    %v3382 = vunpack.c.l.b16 %v3250
    %v3383 = vunpack.c.l.b16 %v3251
    %v3384 = vunpack.c.l.b16 %v3252
    %v3385 = vunpack.c.l.b16 %v3253
    %v3386 = vunpack.c.l.b16 %v3254
    %v3387 = vunpack.c.l.b16 %v3255
    %v3388 = vunpack.c.l.b16 %v3256
    %v3389 = vunpack.c.l.b16 %v3257
    %v3390 = vunpack.c.l.b16 %v3258
    %v3391 = vunpack.c.l.b16 %v3259
    %v3392 = vunpack.c.l.b16 %v3260
    %v3393 = vunpack.c.l.b16 %v3261
    %v3394 = vunpack.c.l.b16 %v3262
    %v3395 = vunpack.c.l.b16 %v3263
    %v3396 = vunpack.c.l.b16 %v3264
    %v3397 = vunpack.c.l.b16 %v3265
    %v3398 = vunpack.c.l.b16 %v3266
    %v3399 = vunpack.c.l.b16 %v3267
    %v3400 = vunpack.c.l.b16 %v3268
    %v3401 = vunpack.c.l.b16 %v3269
    %v3402 = vunpack.c.l.b16 %v3270
    %v3403 = vunpack.c.l.b16 %v3271
    %v3404 = vunpack.c.l.b16 %v3272
    %v3405 = vunpack.c.l.b16 %v3273
    %v3406 = vunpack.c.l.b16 %v3274
    %v3407 = vunpack.c.l.b16 %v3275
    %v3408 = vunpack.c.l.b16 %v3276
    %v3409 = vunpack.c.l.b16 %v3277
    %v3410 = vunpack.c.l.b16 %v3278
    %v3411 = vunpack.c.l.b16 %v3279
    %v3412 = vpack.c.b16 %v3349, %v3348
    %v3413 = vpack.c.b16 %v3351, %v3350
    %v3414 = vpack.c.b16 %v3353, %v3352
    %v3415 = vpack.c.b16 %v3355, %v3354
    %v3416 = vpack.c.b16 %v3357, %v3356
    %v3417 = vpack.c.b16 %v3359, %v3358
    %v3418 = vpack.c.b16 %v3361, %v3360
    %v3419 = vpack.c.b16 %v3363, %v3362
    %v3420 = vpack.c.b16 %v3365, %v3364
    %v3421 = vpack.c.b16 %v3367, %v3366
    %v3422 = vpack.c.b16 %v3369, %v3368
    %v3423 = vpack.c.b16 %v3371, %v3370
    %v3424 = vpack.c.b16 %v3373, %v3372
    %v3425 = vpack.c.b16 %v3375, %v3374
    %v3426 = vpack.c.b16 %v3377, %v3376
    %v3427 = vpack.c.b16 %v3379, %v3378
    %v3428 = vpack.c.b16 %v3381, %v3380
    %v3429 = vpack.c.b16 %v3383, %v3382
    %v3430 = vpack.c.b16 %v3385, %v3384
    %v3431 = vpack.c.b16 %v3387, %v3386
    %v3432 = vpack.c.b16 %v3389, %v3388
    %v3433 = vpack.c.b16 %v3391, %v3390
    %v3434 = vpack.c.b16 %v3393, %v3392
    %v3435 = vpack.c.b16 %v3395, %v3394
    %v3436 = vpack.c.b16 %v3397, %v3396
    %v3437 = vpack.c.b16 %v3399, %v3398
    %v3438 = vpack.c.b16 %v3401, %v3400
    %v3439 = vpack.c.b16 %v3403, %v3402
    %v3440 = vpack.c.b16 %v3405, %v3404
    %v3441 = vpack.c.b16 %v3407, %v3406
    %v3442 = vpack.c.b16 %v3409, %v3408
    %v3443 = vpack.c.b16 %v3411, %v3410
    %3476 = vmatpush.bf16.msra.mxu0 %v3419
    %3477 = vmatpush.bf16.msra.mxu0 %v3418
    %3478 = vmatpush.bf16.msra.mxu0 %v3417
    %3479 = vmatpush.bf16.msra.mxu0 %v3416
    %3480 = vmatpush.bf16.msra.mxu0 %v3415
    %3481 = vmatpush.bf16.msra.mxu0 %v3414
    %3482 = vmatpush.bf16.msra.mxu0 %v3413
    %3483 = vmatpush.bf16.msra.mxu0 %v3412
    %3484 = vmatmul.bf16.gmra.mxu0 %v3184
    %v3485 = vpop.f32.mrf.mxu0
    %v3486 = vadd.f32 %v3282, %v3485
    %v3487 = vpop.f32.mrf.mxu0
    %v3488 = vadd.f32 %v3282, %v3487
    %3489 = vmatmul.bf16.gmra.mxu0 %v3188
    %v3490 = vpop.f32.mrf.mxu0
    %v3491 = vadd.f32 %v3282, %v3490
    %v3492 = vpop.f32.mrf.mxu0
    %v3493 = vadd.f32 %v3282, %v3492
    %3494 = vmatmul.bf16.gmra.mxu0 %v3192
    %v3495 = vpop.f32.mrf.mxu0
    %v3496 = vadd.f32 %v3282, %v3495
    %v3497 = vpop.f32.mrf.mxu0
    %v3498 = vadd.f32 %v3282, %v3497
    %3499 = vmatmul.bf16.gmra.mxu0 %v3196
    %v3500 = vpop.f32.mrf.mxu0
    %v3501 = vadd.f32 %v3282, %v3500
    %v3502 = vpop.f32.mrf.mxu0
    %v3503 = vadd.f32 %v3282, %v3502
    %3504 = vmatmul.bf16.gmra.mxu0 %v3200
    %v3505 = vpop.f32.mrf.mxu0
    %v3506 = vadd.f32 %v3282, %v3505
    %v3507 = vpop.f32.mrf.mxu0
    %v3508 = vadd.f32 %v3282, %v3507
    %3509 = vmatmul.bf16.gmra.mxu0 %v3204
    %v3510 = vpop.f32.mrf.mxu0
    %v3511 = vadd.f32 %v3282, %v3510
    %v3512 = vpop.f32.mrf.mxu0
    %v3513 = vadd.f32 %v3282, %v3512
    %3514 = vmatmul.bf16.gmra.mxu0 %v3208
    %v3515 = vpop.f32.mrf.mxu0
    %v3516 = vadd.f32 %v3282, %v3515
    %v3517 = vpop.f32.mrf.mxu0
    %v3518 = vadd.f32 %v3282, %v3517
    %3519 = vmatmul.bf16.gmra.mxu0 %v3212
    %v3520 = vpop.f32.mrf.mxu0
    %v3521 = vadd.f32 %v3282, %v3520
    %v3522 = vpop.f32.mrf.mxu0
    %v3523 = vadd.f32 %v3282, %v3522
    %3524 = vdwg.mxu0
    %3525 = vmatpush.bf16.msra.mxu0 %v3427
    %3526 = vmatpush.bf16.msra.mxu0 %v3426
    %3527 = vmatpush.bf16.msra.mxu0 %v3425
    %3528 = vmatpush.bf16.msra.mxu0 %v3424
    %3529 = vmatpush.bf16.msra.mxu0 %v3423
    %3530 = vmatpush.bf16.msra.mxu0 %v3422
    %3531 = vmatpush.bf16.msra.mxu0 %v3421
    %3532 = vmatpush.bf16.msra.mxu0 %v3420
    %3533 = vmatmul.bf16.gmra.mxu0 %v3185
    %v3534 = vpop.f32.mrf.mxu0
    %v3535 = vadd.f32 %v3486, %v3534
    %v3536 = vpop.f32.mrf.mxu0
    %v3537 = vadd.f32 %v3488, %v3536
    %3538 = vmatmul.bf16.gmra.mxu0 %v3189
    %v3539 = vpop.f32.mrf.mxu0
    %v3540 = vadd.f32 %v3491, %v3539
    %v3541 = vpop.f32.mrf.mxu0
    %v3542 = vadd.f32 %v3493, %v3541
    %3543 = vmatmul.bf16.gmra.mxu0 %v3193
    %v3544 = vpop.f32.mrf.mxu0
    %v3545 = vadd.f32 %v3496, %v3544
    %v3546 = vpop.f32.mrf.mxu0
    %v3547 = vadd.f32 %v3498, %v3546
    %3548 = vmatmul.bf16.gmra.mxu0 %v3197
    %v3549 = vpop.f32.mrf.mxu0
    %v3550 = vadd.f32 %v3501, %v3549
    %v3551 = vpop.f32.mrf.mxu0
    %v3552 = vadd.f32 %v3503, %v3551
    %3553 = vmatmul.bf16.gmra.mxu0 %v3201
    %v3554 = vpop.f32.mrf.mxu0
    %v3555 = vadd.f32 %v3506, %v3554
    %v3556 = vpop.f32.mrf.mxu0
    %v3557 = vadd.f32 %v3508, %v3556
    %3558 = vmatmul.bf16.gmra.mxu0 %v3205
    %v3559 = vpop.f32.mrf.mxu0
    %v3560 = vadd.f32 %v3511, %v3559
    %v3561 = vpop.f32.mrf.mxu0
    %v3562 = vadd.f32 %v3513, %v3561
    %3563 = vmatmul.bf16.gmra.mxu0 %v3209
    %v3564 = vpop.f32.mrf.mxu0
    %v3565 = vadd.f32 %v3516, %v3564
    %v3566 = vpop.f32.mrf.mxu0
    %v3567 = vadd.f32 %v3518, %v3566
    %3568 = vmatmul.bf16.gmra.mxu0 %v3213
    %v3569 = vpop.f32.mrf.mxu0
    %v3570 = vadd.f32 %v3521, %v3569
    %v3571 = vpop.f32.mrf.mxu0
    %v3572 = vadd.f32 %v3523, %v3571
    %3573 = vdwg.mxu0
    %3574 = vmatpush.bf16.msra.mxu0 %v3435
    %3575 = vmatpush.bf16.msra.mxu0 %v3434
    %3576 = vmatpush.bf16.msra.mxu0 %v3433
    %3577 = vmatpush.bf16.msra.mxu0 %v3432
    %3578 = vmatpush.bf16.msra.mxu0 %v3431
    %3579 = vmatpush.bf16.msra.mxu0 %v3430
    %3580 = vmatpush.bf16.msra.mxu0 %v3429
    %3581 = vmatpush.bf16.msra.mxu0 %v3428
    %3582 = vmatmul.bf16.gmra.mxu0 %v3186
    %v3583 = vpop.f32.mrf.mxu0
    %v3584 = vadd.f32 %v3535, %v3583
    %v3585 = vpop.f32.mrf.mxu0
    %v3586 = vadd.f32 %v3537, %v3585
    %3587 = vmatmul.bf16.gmra.mxu0 %v3190
    %v3588 = vpop.f32.mrf.mxu0
    %v3589 = vadd.f32 %v3540, %v3588
    %v3590 = vpop.f32.mrf.mxu0
    %v3591 = vadd.f32 %v3542, %v3590
    %3592 = vmatmul.bf16.gmra.mxu0 %v3194
    %v3593 = vpop.f32.mrf.mxu0
    %v3594 = vadd.f32 %v3545, %v3593
    %v3595 = vpop.f32.mrf.mxu0
    %v3596 = vadd.f32 %v3547, %v3595
    %3597 = vmatmul.bf16.gmra.mxu0 %v3198
    %v3598 = vpop.f32.mrf.mxu0
    %v3599 = vadd.f32 %v3550, %v3598
    %v3600 = vpop.f32.mrf.mxu0
    %v3601 = vadd.f32 %v3552, %v3600
    %3602 = vmatmul.bf16.gmra.mxu0 %v3202
    %v3603 = vpop.f32.mrf.mxu0
    %v3604 = vadd.f32 %v3555, %v3603
    %v3605 = vpop.f32.mrf.mxu0
    %v3606 = vadd.f32 %v3557, %v3605
    %3607 = vmatmul.bf16.gmra.mxu0 %v3206
    %v3608 = vpop.f32.mrf.mxu0
    %v3609 = vadd.f32 %v3560, %v3608
    %v3610 = vpop.f32.mrf.mxu0
    %v3611 = vadd.f32 %v3562, %v3610
    %3612 = vmatmul.bf16.gmra.mxu0 %v3210
    %v3613 = vpop.f32.mrf.mxu0
    %v3614 = vadd.f32 %v3565, %v3613
    %v3615 = vpop.f32.mrf.mxu0
    %v3616 = vadd.f32 %v3567, %v3615
    %3617 = vmatmul.bf16.gmra.mxu0 %v3214
    %v3618 = vpop.f32.mrf.mxu0
    %v3619 = vadd.f32 %v3570, %v3618
    %v3620 = vpop.f32.mrf.mxu0
    %v3621 = vadd.f32 %v3572, %v3620
    %3622 = vdwg.mxu0
    %3623 = vmatpush.bf16.msra.mxu0 %v3443
    %3624 = vmatpush.bf16.msra.mxu0 %v3442
    %3625 = vmatpush.bf16.msra.mxu0 %v3441
    %3626 = vmatpush.bf16.msra.mxu0 %v3440
    %3627 = vmatpush.bf16.msra.mxu0 %v3439
    %3628 = vmatpush.bf16.msra.mxu0 %v3438
    %3629 = vmatpush.bf16.msra.mxu0 %v3437
    %3630 = vmatpush.bf16.msra.mxu0 %v3436
    %3631 = vmatmul.bf16.gmra.mxu0 %v3187
    %v3632 = vpop.f32.mrf.mxu0
    %v3633 = vadd.f32 %v3584, %v3632
    %v3634 = vpop.f32.mrf.mxu0
    %v3635 = vadd.f32 %v3586, %v3634
    %3636 = vmatmul.bf16.gmra.mxu0 %v3191
    %v3637 = vpop.f32.mrf.mxu0
    %v3638 = vadd.f32 %v3589, %v3637
    %v3639 = vpop.f32.mrf.mxu0
    %v3640 = vadd.f32 %v3591, %v3639
    %3641 = vmatmul.bf16.gmra.mxu0 %v3195
    %v3642 = vpop.f32.mrf.mxu0
    %v3643 = vadd.f32 %v3594, %v3642
    %v3644 = vpop.f32.mrf.mxu0
    %v3645 = vadd.f32 %v3596, %v3644
    %3646 = vmatmul.bf16.gmra.mxu0 %v3199
    %v3647 = vpop.f32.mrf.mxu0
    %v3648 = vadd.f32 %v3599, %v3647
    %v3649 = vpop.f32.mrf.mxu0
    %v3650 = vadd.f32 %v3601, %v3649
    %3651 = vmatmul.bf16.gmra.mxu0 %v3203
    %v3652 = vpop.f32.mrf.mxu0
    %v3653 = vadd.f32 %v3604, %v3652
    %v3654 = vpop.f32.mrf.mxu0
    %v3655 = vadd.f32 %v3606, %v3654
    %3656 = vmatmul.bf16.gmra.mxu0 %v3207
    %v3657 = vpop.f32.mrf.mxu0
    %v3658 = vadd.f32 %v3609, %v3657
    %v3659 = vpop.f32.mrf.mxu0
    %v3660 = vadd.f32 %v3611, %v3659
    %3661 = vmatmul.bf16.gmra.mxu0 %v3211
    %v3662 = vpop.f32.mrf.mxu0
    %v3663 = vadd.f32 %v3614, %v3662
    %v3664 = vpop.f32.mrf.mxu0
    %v3665 = vadd.f32 %v3616, %v3664
    %3666 = vmatmul.bf16.gmra.mxu0 %v3215
    %v3667 = vpop.f32.mrf.mxu0
    %v3668 = vadd.f32 %v3619, %v3667
    %v3669 = vpop.f32.mrf.mxu0
    %v3670 = vadd.f32 %v3621, %v3669
    %3671 = vdwg.mxu0
    %v3672 = vmax.f32 %v3633, 0.0
    %v3673 = vmax.f32 %v3635, 0.0
    %v3674 = vmax.f32 %v3638, 0.0
    %v3675 = vmax.f32 %v3640, 0.0
    %v3676 = vmax.f32 %v3643, 0.0
    %v3677 = vmax.f32 %v3645, 0.0
    %v3678 = vmax.f32 %v3648, 0.0
    %v3679 = vmax.f32 %v3650, 0.0
    %v3680 = vmax.f32 %v3653, 0.0
    %v3681 = vmax.f32 %v3655, 0.0
    %v3682 = vmax.f32 %v3658, 0.0
    %v3683 = vmax.f32 %v3660, 0.0
    %v3684 = vmax.f32 %v3663, 0.0
    %v3685 = vmax.f32 %v3665, 0.0
    %v3686 = vmax.f32 %v3668, 0.0
    %v3687 = vmax.f32 %v3670, 0.0
    %v3688 = vpack.c.bf16 %v3673, %v3672
    %v3689 = vpack.c.bf16 %v3675, %v3674
    %v3690 = vpack.c.bf16 %v3677, %v3676
    %v3691 = vpack.c.bf16 %v3679, %v3678
    %v3692 = vpack.c.bf16 %v3681, %v3680
    %v3693 = vpack.c.bf16 %v3683, %v3682
    %v3694 = vpack.c.bf16 %v3685, %v3684
    %v3695 = vpack.c.bf16 %v3687, %v3686
    %v3696 = vld [vmem:[%s5] sm:$0xf]
    %v3697 = vld [vmem:[%s5 + $0x4] sm:$0xf]
    %v3698 = vld [vmem:[%s5 + $0x8] sm:$0xf]
    %v3699 = vld [vmem:[%s5 + $0xc] sm:$0xf]
    %v3700 = vld [vmem:[%s5 + $0x10] sm:$0xf]
    %v3701 = vld [vmem:[%s5 + $0x14] sm:$0xf]
    %v3702 = vld [vmem:[%s5 + $0x18] sm:$0xf]
    %v3703 = vld [vmem:[%s5 + $0x1c] sm:$0xf]
    %v3704 = vld [vmem:[%s5 + $0x20] sm:$0xf]
    %v3705 = vld [vmem:[%s5 + $0x24] sm:$0xf]
    %v3706 = vld [vmem:[%s5 + $0x28] sm:$0xf]
    %v3707 = vld [vmem:[%s5 + $0x2c] sm:$0xf]
    %v3708 = vld [vmem:[%s5 + $0x30] sm:$0xf]
    %v3709 = vld [vmem:[%s5 + $0x34] sm:$0xf]
    %v3710 = vld [vmem:[%s5 + $0x38] sm:$0xf]
    %v3711 = vld [vmem:[%s5 + $0x3c] sm:$0xf]
    %v3712 = vld [vmem:[%s6] sm:$0x1]
    %v3714 = vperm.slane %v3712, 0
    %v3732 = vunpack.c.l.b16 %v3696
    %v3733 = vunpack.c.l.b16 %v3697
    %v3734 = vunpack.c.l.b16 %v3698
    %v3735 = vunpack.c.l.b16 %v3699
    %v3736 = vunpack.c.l.b16 %v3700
    %v3737 = vunpack.c.l.b16 %v3701
    %v3738 = vunpack.c.l.b16 %v3702
    %v3739 = vunpack.c.l.b16 %v3703
    %v3740 = vunpack.c.l.b16 %v3704
    %v3741 = vunpack.c.l.b16 %v3705
    %v3742 = vunpack.c.l.b16 %v3706
    %v3743 = vunpack.c.l.b16 %v3707
    %v3744 = vunpack.c.l.b16 %v3708
    %v3745 = vunpack.c.l.b16 %v3709
    %v3746 = vunpack.c.l.b16 %v3710
    %v3747 = vunpack.c.l.b16 %v3711
    %v3748 = vpack.c.b16 %v3733, %v3732
    %v3749 = vpack.c.b16 %v3735, %v3734
    %v3750 = vpack.c.b16 %v3737, %v3736
    %v3751 = vpack.c.b16 %v3739, %v3738
    %v3752 = vpack.c.b16 %v3741, %v3740
    %v3753 = vpack.c.b16 %v3743, %v3742
    %v3754 = vpack.c.b16 %v3745, %v3744
    %v3755 = vpack.c.b16 %v3747, %v3746
    %3764 = vmatpush.bf16.msra.mxu0 %v3755
    %3765 = vmatpush.bf16.msra.mxu0 %v3754
    %3766 = vmatpush.bf16.msra.mxu0 %v3753
    %3767 = vmatpush.bf16.msra.mxu0 %v3752
    %3768 = vmatpush.bf16.msra.mxu0 %v3751
    %3769 = vmatpush.bf16.msra.mxu0 %v3750
    %3770 = vmatpush.bf16.msra.mxu0 %v3749
    %3771 = vmatpush.bf16.msra.mxu0 %v3748
    %3772 = vmatmul.bf16.gmra.mxu0 %v3688
    %v3773 = vpop.f32.mrf.mxu0
    %v3774 = vadd.f32 %v3714, %v3773
    %v3775 = vpop.f32.mrf.mxu0
    %v3776 = vadd.f32 %v3714, %v3775
    %3777 = vmatmul.bf16.gmra.mxu0 %v3689
    %v3778 = vpop.f32.mrf.mxu0
    %v3779 = vadd.f32 %v3714, %v3778
    %v3780 = vpop.f32.mrf.mxu0
    %v3781 = vadd.f32 %v3714, %v3780
    %3782 = vmatmul.bf16.gmra.mxu0 %v3690
    %v3783 = vpop.f32.mrf.mxu0
    %v3784 = vadd.f32 %v3714, %v3783
    %v3785 = vpop.f32.mrf.mxu0
    %v3786 = vadd.f32 %v3714, %v3785
    %3787 = vmatmul.bf16.gmra.mxu0 %v3691
    %v3788 = vpop.f32.mrf.mxu0
    %v3789 = vadd.f32 %v3714, %v3788
    %v3790 = vpop.f32.mrf.mxu0
    %v3791 = vadd.f32 %v3714, %v3790
    %3792 = vmatmul.bf16.gmra.mxu0 %v3692
    %v3793 = vpop.f32.mrf.mxu0
    %v3794 = vadd.f32 %v3714, %v3793
    %v3795 = vpop.f32.mrf.mxu0
    %v3796 = vadd.f32 %v3714, %v3795
    %3797 = vmatmul.bf16.gmra.mxu0 %v3693
    %v3798 = vpop.f32.mrf.mxu0
    %v3799 = vadd.f32 %v3714, %v3798
    %v3800 = vpop.f32.mrf.mxu0
    %v3801 = vadd.f32 %v3714, %v3800
    %3802 = vmatmul.bf16.gmra.mxu0 %v3694
    %v3803 = vpop.f32.mrf.mxu0
    %v3804 = vadd.f32 %v3714, %v3803
    %v3805 = vpop.f32.mrf.mxu0
    %v3806 = vadd.f32 %v3714, %v3805
    %3807 = vmatmul.bf16.gmra.mxu0 %v3695
    %v3808 = vpop.f32.mrf.mxu0
    %v3809 = vadd.f32 %v3714, %v3808
    %v3810 = vpop.f32.mrf.mxu0
    %v3811 = vadd.f32 %v3714, %v3810
    %3812 = vdwg.mxu0
    %v3813 = vlaneseq
    %v3814 = vand.u32 %v3813, 127
    %vm3815 = vcmp.lt.s32.totalorder %v3814, 10
    %v3816 = vsel %vm3815, %v3774, -1e+30
    %v3817 = vsel %vm3815, %v3776, -1e+30
    %v3818 = vsel %vm3815, %v3779, -1e+30
    %v3819 = vsel %vm3815, %v3781, -1e+30
    %v3820 = vsel %vm3815, %v3784, -1e+30
    %v3821 = vsel %vm3815, %v3786, -1e+30
    %v3822 = vsel %vm3815, %v3789, -1e+30
    %v3823 = vsel %vm3815, %v3791, -1e+30
    %v3824 = vsel %vm3815, %v3794, -1e+30
    %v3825 = vsel %vm3815, %v3796, -1e+30
    %v3826 = vsel %vm3815, %v3799, -1e+30
    %v3827 = vsel %vm3815, %v3801, -1e+30
    %v3828 = vsel %vm3815, %v3804, -1e+30
    %v3829 = vsel %vm3815, %v3806, -1e+30
    %v3830 = vsel %vm3815, %v3809, -1e+30
    %v3831 = vsel %vm3815, %v3811, -1e+30
    %3832 = vmax.xlane.f32.xlu0 %v3816
    %v3833 = vpop.xlane.xlu0 %3832
    %3834 = vmax.xlane.f32.xlu0 %v3817
    %v3835 = vpop.xlane.xlu0 %3834
    %3836 = vmax.xlane.f32.xlu0 %v3818
    %v3837 = vpop.xlane.xlu0 %3836
    %3838 = vmax.xlane.f32.xlu0 %v3819
    %v3839 = vpop.xlane.xlu0 %3838
    %3840 = vmax.xlane.f32.xlu0 %v3820
    %v3841 = vpop.xlane.xlu0 %3840
    %3842 = vmax.xlane.f32.xlu0 %v3821
    %v3843 = vpop.xlane.xlu0 %3842
    %3844 = vmax.xlane.f32.xlu0 %v3822
    %v3845 = vpop.xlane.xlu0 %3844
    %3846 = vmax.xlane.f32.xlu0 %v3823
    %v3847 = vpop.xlane.xlu0 %3846
    %3848 = vmax.xlane.f32.xlu0 %v3824
    %v3849 = vpop.xlane.xlu0 %3848
    %3850 = vmax.xlane.f32.xlu0 %v3825
    %v3851 = vpop.xlane.xlu0 %3850
    %3852 = vmax.xlane.f32.xlu0 %v3826
    %v3853 = vpop.xlane.xlu0 %3852
    %3854 = vmax.xlane.f32.xlu0 %v3827
    %v3855 = vpop.xlane.xlu0 %3854
    %3856 = vmax.xlane.f32.xlu0 %v3828
    %v3857 = vpop.xlane.xlu0 %3856
    %3858 = vmax.xlane.f32.xlu0 %v3829
    %v3859 = vpop.xlane.xlu0 %3858
    %3860 = vmax.xlane.f32.xlu0 %v3830
    %v3861 = vpop.xlane.xlu0 %3860
    %3862 = vmax.xlane.f32.xlu0 %v3831
    %v3863 = vpop.xlane.xlu0 %3862
    %v3864 = vsub.f32 %v3816, %v3833
    %v3865 = vsub.f32 %v3817, %v3835
    %v3866 = vsub.f32 %v3818, %v3837
    %v3867 = vsub.f32 %v3819, %v3839
    %v3868 = vsub.f32 %v3820, %v3841
    %v3869 = vsub.f32 %v3821, %v3843
    %v3870 = vsub.f32 %v3822, %v3845
    %v3871 = vsub.f32 %v3823, %v3847
    %v3872 = vsub.f32 %v3824, %v3849
    %v3873 = vsub.f32 %v3825, %v3851
    %v3874 = vsub.f32 %v3826, %v3853
    %v3875 = vsub.f32 %v3827, %v3855
    %v3876 = vsub.f32 %v3828, %v3857
    %v3877 = vsub.f32 %v3829, %v3859
    %v3878 = vsub.f32 %v3830, %v3861
    %v3879 = vsub.f32 %v3831, %v3863
    %v3880 = vmul.f32 %v3864, 1.442695
    %v3881 = vpow.pop %v3880
    %v3882 = vmul.f32 %v3865, 1.442695
    %v3883 = vpow.pop %v3882
    %v3884 = vmul.f32 %v3866, 1.442695
    %v3885 = vpow.pop %v3884
    %v3886 = vmul.f32 %v3867, 1.442695
    %v3887 = vpow.pop %v3886
    %v3888 = vmul.f32 %v3868, 1.442695
    %v3889 = vpow.pop %v3888
    %v3890 = vmul.f32 %v3869, 1.442695
    %v3891 = vpow.pop %v3890
    %v3892 = vmul.f32 %v3870, 1.442695
    %v3893 = vpow.pop %v3892
    %v3894 = vmul.f32 %v3871, 1.442695
    %v3895 = vpow.pop %v3894
    %v3896 = vmul.f32 %v3872, 1.442695
    %v3897 = vpow.pop %v3896
    %v3898 = vmul.f32 %v3873, 1.442695
    %v3899 = vpow.pop %v3898
    %v3900 = vmul.f32 %v3874, 1.442695
    %v3901 = vpow.pop %v3900
    %v3902 = vmul.f32 %v3875, 1.442695
    %v3903 = vpow.pop %v3902
    %v3904 = vmul.f32 %v3876, 1.442695
    %v3905 = vpow.pop %v3904
    %v3906 = vmul.f32 %v3877, 1.442695
    %v3907 = vpow.pop %v3906
    %v3908 = vmul.f32 %v3878, 1.442695
    %v3909 = vpow.pop %v3908
    %v3910 = vmul.f32 %v3879, 1.442695
    %v3911 = vpow.pop %v3910
    %3912 = vadd.xlane.f32.xlu0 %v3881
    %v3913 = vpop.xlane.xlu0 %3912
    %3914 = vadd.xlane.f32.xlu0 %v3883
    %v3915 = vpop.xlane.xlu0 %3914
    %3916 = vadd.xlane.f32.xlu0 %v3885
    %v3917 = vpop.xlane.xlu0 %3916
    %3918 = vadd.xlane.f32.xlu0 %v3887
    %v3919 = vpop.xlane.xlu0 %3918
    %3920 = vadd.xlane.f32.xlu0 %v3889
    %v3921 = vpop.xlane.xlu0 %3920
    %3922 = vadd.xlane.f32.xlu0 %v3891
    %v3923 = vpop.xlane.xlu0 %3922
    %3924 = vadd.xlane.f32.xlu0 %v3893
    %v3925 = vpop.xlane.xlu0 %3924
    %3926 = vadd.xlane.f32.xlu0 %v3895
    %v3927 = vpop.xlane.xlu0 %3926
    %3928 = vadd.xlane.f32.xlu0 %v3897
    %v3929 = vpop.xlane.xlu0 %3928
    %3930 = vadd.xlane.f32.xlu0 %v3899
    %v3931 = vpop.xlane.xlu0 %3930
    %3932 = vadd.xlane.f32.xlu0 %v3901
    %v3933 = vpop.xlane.xlu0 %3932
    %3934 = vadd.xlane.f32.xlu0 %v3903
    %v3935 = vpop.xlane.xlu0 %3934
    %3936 = vadd.xlane.f32.xlu0 %v3905
    %v3937 = vpop.xlane.xlu0 %3936
    %3938 = vadd.xlane.f32.xlu0 %v3907
    %v3939 = vpop.xlane.xlu0 %3938
    %3940 = vadd.xlane.f32.xlu0 %v3909
    %v3941 = vpop.xlane.xlu0 %3940
    %3942 = vadd.xlane.f32.xlu0 %v3911
    %v3943 = vpop.xlane.xlu0 %3942
    %v3944 = vrcp.pop %v3913
    %v3945 = vrcp.pop %v3915
    %v3946 = vrcp.pop %v3917
    %v3947 = vrcp.pop %v3919
    %v3948 = vrcp.pop %v3921
    %v3949 = vrcp.pop %v3923
    %v3950 = vrcp.pop %v3925
    %v3951 = vrcp.pop %v3927
    %v3952 = vrcp.pop %v3929
    %v3953 = vrcp.pop %v3931
    %v3954 = vrcp.pop %v3933
    %v3955 = vrcp.pop %v3935
    %v3956 = vrcp.pop %v3937
    %v3957 = vrcp.pop %v3939
    %v3958 = vrcp.pop %v3941
    %v3959 = vrcp.pop %v3943
    %v3960 = vmul.f32 %v3881, %v3944
    %v3961 = vmul.f32 %v3883, %v3945
    %v3962 = vmul.f32 %v3885, %v3946
    %v3963 = vmul.f32 %v3887, %v3947
    %v3964 = vmul.f32 %v3889, %v3948
    %v3965 = vmul.f32 %v3891, %v3949
    %v3966 = vmul.f32 %v3893, %v3950
    %v3967 = vmul.f32 %v3895, %v3951
    %v3968 = vmul.f32 %v3897, %v3952
    %v3969 = vmul.f32 %v3899, %v3953
    %v3970 = vmul.f32 %v3901, %v3954
    %v3971 = vmul.f32 %v3903, %v3955
    %v3972 = vmul.f32 %v3905, %v3956
    %v3973 = vmul.f32 %v3907, %v3957
    %v3974 = vmul.f32 %v3909, %v3958
    %v3975 = vmul.f32 %v3911, %v3959
    %3976 = vst [vmem:[%s7] sm:$0xff] %v3960
    %3977 = vst [vmem:[%s7 + $0x8] sm:$0xff] %v3961
    %3978 = vst [vmem:[%s7 + $0x10] sm:$0xff] %v3962
    %3979 = vst [vmem:[%s7 + $0x18] sm:$0xff] %v3963
    %3980 = vst [vmem:[%s7 + $0x20] sm:$0xff] %v3964
    %3981 = vst [vmem:[%s7 + $0x28] sm:$0xff] %v3965
    %3982 = vst [vmem:[%s7 + $0x30] sm:$0xff] %v3966
    %3983 = vst [vmem:[%s7 + $0x38] sm:$0xff] %v3967
    %3984 = vst [vmem:[%s7 + $0x40] sm:$0xff] %v3968
    %3985 = vst [vmem:[%s7 + $0x48] sm:$0xff] %v3969
    %3986 = vst [vmem:[%s7 + $0x50] sm:$0xff] %v3970
    %3987 = vst [vmem:[%s7 + $0x58] sm:$0xff] %v3971
    %3988 = vst [vmem:[%s7 + $0x60] sm:$0xff] %v3972
    %3989 = vst [vmem:[%s7 + $0x68] sm:$0xff] %v3973
    %3990 = vst [vmem:[%s7 + $0x70] sm:$0xff] %v3974
    %3991 = vst [vmem:[%s7 + $0x78] sm:$0xff] %v3975
    // Predicated region
    $region34: #{mlp_forward.1} parent=1 // pred_check
      _
    $region35: #{mlp_forward.1} parent=1 // pred_check_branch
      %3993 = sbr.rel (0) target = $region37
    $region36: #{mlp_forward.1} parent=1 // pred_region
      _
    $region37: #{mlp_forward.1} parent=1 // pred_fallthru
      _
    // Predicated region
    $region38: #{mlp_forward.1} parent=1 // pred_check
      _
    $region39: #{mlp_forward.1} parent=1 // pred_check_branch
      %3995 = sbr.rel (0) target = $region41
    $region40: #{mlp_forward.1} parent=1 // pred_region
      _
    $region41: #{mlp_forward.1} parent=1 // pred_fallthru
      _
    %3996 = vsyncpa [#allocation3], 1

</llo_original>
